<compile_context>
chip_gen: v6e
topology: v6e:2x2x1
jax: 0.10.0
libtpu: 0.0.40
codegen_flags: <defaults>
</compile_context>

<pallas_src>
import math
import functools

import jax
import jax.numpy as jnp
from jax.experimental import pallas as pl
from jax.experimental.pallas import tpu as pltpu

F32 = jnp.float32


# ----------------------------- in-kernel math helpers -----------------------------
def _erf(x):
    # Abramowitz & Stegun 7.1.26 (|err| < 1.5e-7); only exp / mul / add / select.
    a1, a2, a3, a4, a5 = 0.254829592, -0.284496736, 1.421413741, -1.453152027, 1.061405429
    p = 0.3275911
    sgn = jnp.where(x >= 0.0, 1.0, -1.0)
    ax = jnp.abs(x)
    t = 1.0 / (1.0 + p * ax)
    poly = ((((a5 * t + a4) * t + a3) * t + a2) * t + a1) * t
    return sgn * (1.0 - poly * jnp.exp(-ax * ax))


def _gelu_exact(x):
    # matches torch.nn.functional.gelu(approximate='none') to ~1e-6
    return 0.5 * x * (1.0 + _erf(x * (1.0 / math.sqrt(2.0))))


def _layernorm(x, w, b, eps=1e-5):
    mu = jnp.mean(x, axis=-1, keepdims=True)
    xc = x - mu
    var = jnp.mean(xc * xc, axis=-1, keepdims=True)
    return xc * jax.lax.rsqrt(var + eps) * w + b


def _softmax_last(x):
    m = jnp.max(x, axis=-1, keepdims=True)
    e = jnp.exp(x - m)
    # approx reciprocal runs on the otherwise-idle EUP slot; ~2^-12 perturbation is
    # fine for softmax probabilities.
    return e * pl.reciprocal(jnp.sum(e, axis=-1, keepdims=True), approx=True)


# ------------------------------- fused forward kernel -------------------------------
def fused_forward_kernel(ids_ref, emb_ref, pe_ref, mask_ref, bns_ref, bnb_ref,
                         wqkv_ref, bqkv_ref, wo_ref, bo_ref, ln1w_ref, ln1b_ref,
                         w1_ref, b1_ref, w2_ref, b2_ref, ln2w_ref, ln2b_ref,
                         wa_ref, ba_ref, wb_ref, bb_ref,
                         o_ref, *, nhead, num_layers):
    """Whole forward for all (flattened) B*S rows; everything stays VMEM-resident."""
    N = ids_ref.shape[0]                 # N = B * S (batch folded into sublane axis)
    V, D = emb_ref.shape
    Dh = D // nhead
    scale = 1.0 / math.sqrt(Dh)

    # --- embedding lookup + positional encoding ------------------------------------
    # Tiny one-hot matmul (V=64) — fine at this vocab size (see TODO at top of file).
    ids = ids_ref[...]                                            # (N, 1) int32
    iota = jax.lax.broadcasted_iota(jnp.int32, (N, V), 1)
    onehot = jnp.where(ids == iota, 1.0, 0.0).astype(F32)         # (N, V)
    x = jnp.dot(onehot, emb_ref[...], preferred_element_type=F32)  # (N, D)
    # pe row per BATCH, broadcast over the sequence axis (reference quirk), already
    # expanded to (N, D) in the wrapper.
    x = x + pe_ref[...]

    # Block-diagonal additive mask keeps attention within each batch element after
    # flattening (0 inside a batch, -1e30 across batches).
    mask = mask_ref[...]                                          # (N, N)

    # --- transformer encoder layers (post-norm, exact GELU, eval) -------------------
    for l in range(num_layers):
        # fused QKV: one (N, D) @ (D, 3D) matmul
        qkv = jnp.dot(x, wqkv_ref[l], preferred_element_type=F32) + bqkv_ref[l]  # (N, 3D)
        attn = None
        for h in range(nhead):
            q = qkv[:, h * Dh:(h + 1) * Dh]                       # (N, Dh)
            k = qkv[:, D + h * Dh:D + (h + 1) * Dh]               # (N, Dh)
            v = qkv[:, 2 * D + h * Dh:2 * D + (h + 1) * Dh]       # (N, Dh)
            sc = jnp.einsum('qe,ke->qk', q, k, preferred_element_type=F32) * scale + mask
            p = _softmax_last(sc)                                 # (N, N)
            ctx = jnp.dot(p, v, preferred_element_type=F32)       # (N, Dh)
            # per-head out-projection slice -> accumulate lane-dense (N, D); no concat
            contrib = jnp.dot(ctx, wo_ref[l * nhead + h], preferred_element_type=F32)
            attn = contrib if attn is None else attn + contrib
        x = _layernorm(x + attn + bo_ref[l], ln1w_ref[l], ln1b_ref[l])

        h1 = _gelu_exact(jnp.dot(x, w1_ref[l], preferred_element_type=F32) + b1_ref[l])
        ff = jnp.dot(h1, w2_ref[l], preferred_element_type=F32) + b2_ref[l]
        x = _layernorm(x + ff, ln2w_ref[l], ln2b_ref[l])

    # --- MLP head: Linear(D,4D) -> folded eval BatchNorm1d(S) -> Linear(4D, V_pad) ---
    hd = jnp.dot(x, wa_ref[...], preferred_element_type=F32) + ba_ref[...]   # (N, 4D)
    hd = hd * bns_ref[...] + bnb_ref[...]                         # per-seq-position scale/shift
    o_ref[...] = jnp.dot(hd, wb_ref[...], preferred_element_type=F32) + bb_ref[...]  # (N, Vp)


# --------------------------------- parameters --------------------------------------
def init_params(key, *, vocab_size, d_model, nhead, dim_ff, num_layers,
                token_padding, seq_len):
    ks = iter(jax.random.split(key, 8 + 16 * num_layers))

    def nrm(shape, scale=0.05):
        return (scale * jax.random.normal(next(ks), shape)).astype(F32)

    emb = nrm((vocab_size, d_model), 0.1)
    emb = emb.at[token_padding].set(0.0)                # padding_idx row is zeroed

    layers = []
    for _ in range(num_layers):
        layers.append(dict(
            in_proj_w=nrm((3 * d_model, d_model)),
            in_proj_b=nrm((3 * d_model,)),
            out_proj_w=nrm((d_model, d_model)),
            out_proj_b=nrm((d_model,)),
            ln1_w=jnp.ones((d_model,), F32), ln1_b=jnp.zeros((d_model,), F32),
            lin1_w=nrm((dim_ff, d_model)), lin1_b=nrm((dim_ff,)),
            lin2_w=nrm((d_model, dim_ff)), lin2_b=nrm((d_model,)),
            ln2_w=jnp.ones((d_model,), F32), ln2_b=jnp.zeros((d_model,), F32),
        ))

    S = seq_len + 2                                     # BatchNorm1d(seq_len + 2)
    mlp = dict(
        lin_a_w=nrm((4 * d_model, d_model)), lin_a_b=nrm((4 * d_model,)),
        bn_w=jnp.ones((S,), F32), bn_b=jnp.zeros((S,), F32),
        bn_rm=jnp.zeros((S,), F32), bn_rv=jnp.ones((S,), F32),
        lin_b_w=nrm((vocab_size, 4 * d_model)), lin_b_b=nrm((vocab_size,)),
    )
    return dict(embedding=emb, layers=layers, mlp=mlp)


def prepare_params(params, *, d_model, nhead, vocab_size, seq_len):
    """One-time weight reformatting (hoisted out of the jitted forward)."""
    D = d_model
    Dh = D // nhead
    S = seq_len + 2
    V = vocab_size
    Vp = ((V + 127) // 128) * 128                       # lane-dense output width
    layers = params['layers']
    L = len(layers)

    def stack(fn):
        return jnp.stack([fn(lp) for lp in layers], axis=0)

    # out-projection pre-split per head: (L*nhead, Dh, D); head h consumes rows
    # h*Dh:(h+1)*Dh of out_proj_w.T (the concat dimension of standard MHA).
    wo = jnp.concatenate(
        [lp['out_proj_w'].T.reshape(nhead, Dh, D) for lp in layers], axis=0)

    prep = dict(
        embedding=params['embedding'],
        wqkv=stack(lambda lp: lp['in_proj_w'].T),                   # (L, D, 3D)
        bqkv=stack(lambda lp: lp['in_proj_b'].reshape(1, 3 * D)),   # (L, 1, 3D)
        wo=wo,                                                      # (L*nhead, Dh, D)
        bo=stack(lambda lp: lp['out_proj_b'].reshape(1, D)),
        ln1w=stack(lambda lp: lp['ln1_w'].reshape(1, D)),
        ln1b=stack(lambda lp: lp['ln1_b'].reshape(1, D)),
        w1=stack(lambda lp: lp['lin1_w'].T),                        # (L, D, F)
        b1=stack(lambda lp: lp['lin1_b'].reshape(1, -1)),
        w2=stack(lambda lp: lp['lin2_w'].T),                        # (L, F, D)
        b2=stack(lambda lp: lp['lin2_b'].reshape(1, D)),
        ln2w=stack(lambda lp: lp['ln2_w'].reshape(1, D)),
        ln2b=stack(lambda lp: lp['ln2_b'].reshape(1, D)),
    )

    # Fold eval-mode BatchNorm1d(S) (channel == sequence position) into scale/shift.
    mlp = params['mlp']
    eps = 1e-5
    inv_std = 1.0 / jnp.sqrt(mlp['bn_rv'] + eps)
    prep['bn_scale'] = (mlp['bn_w'] * inv_std).reshape(S, 1)
    prep['bn_shift'] = (mlp['bn_b'] - mlp['bn_rm'] * mlp['bn_w'] * inv_std).reshape(S, 1)

    prep['wa'] = mlp['lin_a_w'].T                                   # (D, 4D)
    prep['ba'] = mlp['lin_a_b'].reshape(1, 4 * D)
    wb = mlp['lin_b_w'].T                                           # (4D, V)
    bb = mlp['lin_b_b'].reshape(1, V)
    if Vp != V:                                                     # zero-pad vocab lanes
        wb = jnp.pad(wb, ((0, 0), (0, Vp - V)))
        bb = jnp.pad(bb, ((0, 0), (0, Vp - V)))
    prep['wb'] = wb
    prep['bb'] = bb
    return prep


# ---------------------------------- forward -----------------------------------------
def pretraining_forward(X, prep, *, d_model, nhead, num_layers, seq_len, vocab_size):
    B, S = X.shape
    assert S == seq_len + 2, "BatchNorm1d(seq_len + 2) requires sequence length seq_len + 2"
    D = d_model
    V = vocab_size
    Vp = ((V + 127) // 128) * 128
    Fd = prep['w1'].shape[-1]
    N = B * S                                            # batch folded into the row axis

    # PositionalEncoding rows 0..B-1 (only pe[:B] is ever used by the reference),
    # repeated S times per batch (row n = b*S + s gets pe[b]).
    position = jnp.arange(B, dtype=F32)[:, None]
    div_term = jnp.exp(jnp.arange(0, D, 2, dtype=F32) * (-math.log(10000.0) / D))
    pe = jnp.zeros((B, D), F32)
    pe = pe.at[:, 0::2].set(jnp.sin(position * div_term))
    pe = pe.at[:, 1::2].set(jnp.cos(position * div_term))
    pe_flat = jnp.repeat(pe, S, axis=0)                  # (N, D)

    # Block-diagonal additive mask: batches stay independent inside the (N, N) scores.
    row_b = jnp.arange(N, dtype=jnp.int32) // S
    mask = jnp.where(row_b[:, None] == row_b[None, :], 0.0, -1e30).astype(F32)  # (N, N)

    # BatchNorm scale/shift per sequence position, tiled to the flattened rows.
    bn_scale = jnp.tile(prep['bn_scale'], (B, 1))        # (N, 1)
    bn_shift = jnp.tile(prep['bn_shift'], (B, 1))        # (N, 1)

    ids = X.astype(jnp.int32).reshape(N, 1)

    def full_spec(a):  # full-array block, single grid step (no re-DMA, no pipelining)
        zeros = (0,) * a.ndim
        return pl.BlockSpec(a.shape, lambda i, z=zeros: z)

    in_arrays = [
        ids, prep['embedding'], pe_flat, mask, bn_scale, bn_shift,
        prep['wqkv'], prep['bqkv'], prep['wo'], prep['bo'], prep['ln1w'], prep['ln1b'],
        prep['w1'], prep['b1'], prep['w2'], prep['b2'], prep['ln2w'], prep['ln2b'],
        prep['wa'], prep['ba'], prep['wb'], prep['bb'],
    ]
    in_specs = [full_spec(a) for a in in_arrays]
    out_spec = pl.BlockSpec((N, Vp), lambda i: (0, 0))

    # Advisory cost estimate for XLA scheduling.
    flops = 2 * N * (V * D
                     + num_layers * (3 * D * D + 2 * N * D + D * D + 2 * D * Fd)
                     + 4 * D * D + 4 * D * Vp)
    transcend = N * num_layers * (nhead * N + Fd) + N * D
    bytes_acc = sum(int(a.size) * a.dtype.itemsize for a in in_arrays) + N * Vp * 4

    kernel = functools.partial(fused_forward_kernel, nhead=nhead, num_layers=num_layers)
    out = pl.pallas_call(
        kernel,
        out_shape=jax.ShapeDtypeStruct((N, Vp), F32),
        grid=(1,),                                        # single step: no duplicated
        in_specs=in_specs,                                # weight DMA, no grid overhead
        out_specs=out_spec,
        compiler_params=pltpu.CompilerParams(dimension_semantics=("arbitrary",)),
        cost_estimate=pl.CostEstimate(flops=flops, transcendentals=transcend,
                                      bytes_accessed=bytes_acc),
    )(*in_arrays)

    logits = out                                          # (B*S, Vp)
    if Vp != V:
        logits = logits[:, :V]                            # drop zero-padded vocab lanes
    return logits                                         # == logits.view(-1, vocab_size)


# ------------------------------------ main -------------------------------------------
if __name__ == "__main__":
    embedding_dim = 32
    nhead = 4
    dim_feedforward = 64
    num_layers = 2
    dropout_prob = 0.1          # eval mode -> identity
    vocab_size = 64
    token_padding = 0
    seq_len = 8
    batch = 2
    S = seq_len + 2             # required by BatchNorm1d(seq_len + 2) in the mlp head

    key = jax.random.PRNGKey(0)
    kp, kx = jax.random.split(key)
    params = init_params(kp, vocab_size=vocab_size, d_model=embedding_dim,
                         nhead=nhead, dim_ff=dim_feedforward, num_layers=num_layers,
                         token_padding=token_padding, seq_len=seq_len)
    prep = prepare_params(params, d_model=embedding_dim, nhead=nhead,
                          vocab_size=vocab_size, seq_len=seq_len)
    X = jax.random.randint(kx, (batch, S), 0, vocab_size, dtype=jnp.int32)

    fwd = jax.jit(functools.partial(pretraining_forward,
                                    d_model=embedding_dim, nhead=nhead,
                                    num_layers=num_layers, seq_len=seq_len,
                                    vocab_size=vocab_size))
    logits = fwd(X, prep)
    jax.block_until_ready(logits)
    assert logits.shape == (batch * S, vocab_size)
    assert bool(jnp.all(jnp.isfinite(logits)))
    print("KERNEL_OK")
</pallas_src>

<mosaic_0001>
module attributes {stable_mosaic.version = 11 : i64} {
  func.func @fused_forward_kernel(%arg0: i32, %arg1: memref<20x1xi32, #tpu.memory_space<vmem>>, %arg2: memref<64x32xf32, #tpu.memory_space<vmem>>, %arg3: memref<20x32xf32, #tpu.memory_space<vmem>>, %arg4: memref<20x20xf32, #tpu.memory_space<vmem>>, %arg5: memref<20x1xf32, #tpu.memory_space<vmem>>, %arg6: memref<20x1xf32, #tpu.memory_space<vmem>>, %arg7: memref<2x32x96xf32, #tpu.memory_space<vmem>>, %arg8: memref<2x1x96xf32, #tpu.memory_space<vmem>>, %arg9: memref<8x8x32xf32, #tpu.memory_space<vmem>>, %arg10: memref<2x1x32xf32, #tpu.memory_space<vmem>>, %arg11: memref<2x1x32xf32, #tpu.memory_space<vmem>>, %arg12: memref<2x1x32xf32, #tpu.memory_space<vmem>>, %arg13: memref<2x32x64xf32, #tpu.memory_space<vmem>>, %arg14: memref<2x1x64xf32, #tpu.memory_space<vmem>>, %arg15: memref<2x64x32xf32, #tpu.memory_space<vmem>>, %arg16: memref<2x1x32xf32, #tpu.memory_space<vmem>>, %arg17: memref<2x1x32xf32, #tpu.memory_space<vmem>>, %arg18: memref<2x1x32xf32, #tpu.memory_space<vmem>>, %arg19: memref<32x128xf32, #tpu.memory_space<vmem>>, %arg20: memref<1x128xf32, #tpu.memory_space<vmem>>, %arg21: memref<128x128xf32, #tpu.memory_space<vmem>>, %arg22: memref<1x128xf32, #tpu.memory_space<vmem>>, %arg23: memref<20x128xf32, #tpu.memory_space<vmem>>) attributes {dimension_semantics = [#tpu.dimension_semantics<arbitrary>], iteration_bounds = array<i64: 1>, scalar_prefetch = 0 : i64, scratch_operands = 0 : i64, tpu.core_type = #tpu.core_type<tc>, window_params = [{pipeline_mode = #tpu.pipeline_mode<synchronous>, transform_indices = @transform_0, window_bounds = array<i64: 20, 1>}, {pipeline_mode = #tpu.pipeline_mode<synchronous>, transform_indices = @transform_1, window_bounds = array<i64: 64, 32>}, {pipeline_mode = #tpu.pipeline_mode<synchronous>, transform_indices = @transform_2, window_bounds = array<i64: 20, 32>}, {pipeline_mode = #tpu.pipeline_mode<synchronous>, transform_indices = @transform_3, window_bounds = array<i64: 20, 20>}, {pipeline_mode = #tpu.pipeline_mode<synchronous>, transform_indices = @transform_4, window_bounds = array<i64: 20, 1>}, {pipeline_mode = #tpu.pipeline_mode<synchronous>, transform_indices = @transform_5, window_bounds = array<i64: 20, 1>}, {pipeline_mode = #tpu.pipeline_mode<synchronous>, transform_indices = @transform_6, window_bounds = array<i64: 2, 32, 96>}, {pipeline_mode = #tpu.pipeline_mode<synchronous>, transform_indices = @transform_7, window_bounds = array<i64: 2, 1, 96>}, {pipeline_mode = #tpu.pipeline_mode<synchronous>, transform_indices = @transform_8, window_bounds = array<i64: 8, 8, 32>}, {pipeline_mode = #tpu.pipeline_mode<synchronous>, transform_indices = @transform_9, window_bounds = array<i64: 2, 1, 32>}, {pipeline_mode = #tpu.pipeline_mode<synchronous>, transform_indices = @transform_10, window_bounds = array<i64: 2, 1, 32>}, {pipeline_mode = #tpu.pipeline_mode<synchronous>, transform_indices = @transform_11, window_bounds = array<i64: 2, 1, 32>}, {pipeline_mode = #tpu.pipeline_mode<synchronous>, transform_indices = @transform_12, window_bounds = array<i64: 2, 32, 64>}, {pipeline_mode = #tpu.pipeline_mode<synchronous>, transform_indices = @transform_13, window_bounds = array<i64: 2, 1, 64>}, {pipeline_mode = #tpu.pipeline_mode<synchronous>, transform_indices = @transform_14, window_bounds = array<i64: 2, 64, 32>}, {pipeline_mode = #tpu.pipeline_mode<synchronous>, transform_indices = @transform_15, window_bounds = array<i64: 2, 1, 32>}, {pipeline_mode = #tpu.pipeline_mode<synchronous>, transform_indices = @transform_16, window_bounds = array<i64: 2, 1, 32>}, {pipeline_mode = #tpu.pipeline_mode<synchronous>, transform_indices = @transform_17, window_bounds = array<i64: 2, 1, 32>}, {pipeline_mode = #tpu.pipeline_mode<synchronous>, transform_indices = @transform_18, window_bounds = array<i64: 32, 128>}, {pipeline_mode = #tpu.pipeline_mode<synchronous>, transform_indices = @transform_19, window_bounds = array<i64: 1, 128>}, {pipeline_mode = #tpu.pipeline_mode<synchronous>, transform_indices = @transform_20, window_bounds = array<i64: 128, 128>}, {pipeline_mode = #tpu.pipeline_mode<synchronous>, transform_indices = @transform_21, window_bounds = array<i64: 1, 128>}, {pipeline_mode = #tpu.pipeline_mode<synchronous>, transform_indices = @transform_22, window_bounds = array<i64: 20, 128>}]} {
    %c0 = arith.constant 0 : index
    %c0_0 = arith.constant 0 : index
    %0 = vector.load %arg1[%c0, %c0_0] : memref<20x1xi32, #tpu.memory_space<vmem>>, vector<20x1xi32>
    %1 = tpu.iota {dimensions = array<i32: 1>} : vector<20x64xi32>
    %2 = vector.broadcast %0 : vector<20x1xi32> to vector<20x64xi32>
    %3 = arith.cmpi eq, %2, %1 : vector<20x64xi32>
    %cst = arith.constant 1.000000e+00 : f32
    %cst_1 = arith.constant 0.000000e+00 : f32
    %4 = vector.broadcast %cst : f32 to vector<20x64xf32>
    %5 = vector.broadcast %cst_1 : f32 to vector<20x64xf32>
    %6 = arith.select %3, %4, %5 : vector<20x64xi1>, vector<20x64xf32>
    %c0_2 = arith.constant 0 : index
    %c0_3 = arith.constant 0 : index
    %7 = vector.load %arg2[%c0_2, %c0_3] : memref<64x32xf32, #tpu.memory_space<vmem>>, vector<64x32xf32>
    %cst_4 = arith.constant dense<0.000000e+00> : vector<20x32xf32>
    %8 = tpu.matmul %6, %7, %cst_4 {dimension_numbers = #tpu.dot_dimension_numbers<[1], [0], [0], [1], [0, 0, 1, 1], [], []>} : vector<20x64xf32>, vector<64x32xf32>, vector<20x32xf32> -> vector<20x32xf32>
    %c0_5 = arith.constant 0 : index
    %c0_6 = arith.constant 0 : index
    %9 = vector.load %arg3[%c0_5, %c0_6] : memref<20x32xf32, #tpu.memory_space<vmem>>, vector<20x32xf32>
    %10 = arith.addf %8, %9 : vector<20x32xf32>
    %c0_7 = arith.constant 0 : index
    %c0_8 = arith.constant 0 : index
    %11 = vector.load %arg4[%c0_7, %c0_8] : memref<20x20xf32, #tpu.memory_space<vmem>>, vector<20x20xf32>
    %c0_9 = arith.constant 0 : index
    %c0_10 = arith.constant 0 : index
    %c0_11 = arith.constant 0 : index
    %12 = vector.load %arg7[%c0_9, %c0_10, %c0_11] : memref<2x32x96xf32, #tpu.memory_space<vmem>>, vector<1x32x96xf32>
    %13 = vector.shape_cast %12 : vector<1x32x96xf32> to vector<32x96xf32>
    %cst_12 = arith.constant dense<0.000000e+00> : vector<20x96xf32>
    %14 = tpu.matmul %10, %13, %cst_12 {dimension_numbers = #tpu.dot_dimension_numbers<[1], [0], [0], [1], [0, 0, 1, 1], [], []>} : vector<20x32xf32>, vector<32x96xf32>, vector<20x96xf32> -> vector<20x96xf32>
    %c0_13 = arith.constant 0 : index
    %c0_14 = arith.constant 0 : index
    %c0_15 = arith.constant 0 : index
    %15 = vector.load %arg8[%c0_13, %c0_14, %c0_15] : memref<2x1x96xf32, #tpu.memory_space<vmem>>, vector<1x1x96xf32>
    %16 = vector.shape_cast %15 : vector<1x1x96xf32> to vector<1x96xf32>
    %17 = vector.broadcast %16 : vector<1x96xf32> to vector<20x96xf32>
    %18 = arith.addf %14, %17 : vector<20x96xf32>
    %19 = vector.extract_strided_slice %18 {offsets = [0, 0], sizes = [20, 8], strides = [1, 1]} : vector<20x96xf32> to vector<20x8xf32>
    %20 = vector.extract_strided_slice %18 {offsets = [0, 32], sizes = [20, 8], strides = [1, 1]} : vector<20x96xf32> to vector<20x8xf32>
    %21 = vector.extract_strided_slice %18 {offsets = [0, 64], sizes = [20, 8], strides = [1, 1]} : vector<20x96xf32> to vector<20x8xf32>
    "tpu.trace_start"() <{level = 10 : i32, message = "qe,ke->qk"}> : () -> ()
    %cst_16 = arith.constant dense<0.000000e+00> : vector<20x20xf32>
    %22 = tpu.matmul %19, %20, %cst_16 {dimension_numbers = #tpu.dot_dimension_numbers<[1], [1], [0], [0], [0, 0, 1, 0], [], []>} : vector<20x8xf32>, vector<20x8xf32>, vector<20x20xf32> -> vector<20x20xf32>
    "tpu.trace_stop"() : () -> ()
    %cst_17 = arith.constant 0.353553385 : f32
    %23 = vector.broadcast %cst_17 : f32 to vector<20x20xf32>
    %24 = arith.mulf %22, %23 : vector<20x20xf32>
    %25 = arith.addf %24, %11 : vector<20x20xf32>
    %cst_18 = arith.constant dense<0xFF800000> : vector<20xf32>
    %26 = vector.multi_reduction <maximumf>, %25, %cst_18 [1] : vector<20x20xf32> to vector<20xf32>
    %27 = vector.shape_cast %26 : vector<20xf32> to vector<20x1xf32>
    %28 = vector.broadcast %27 : vector<20x1xf32> to vector<20x20xf32>
    %29 = arith.subf %25, %28 : vector<20x20xf32>
    %30 = math.exp %29 : vector<20x20xf32>
    %cst_19 = arith.constant dense<0.000000e+00> : vector<20xf32>
    %31 = vector.multi_reduction <add>, %30, %cst_19 [1] : vector<20x20xf32> to vector<20xf32>
    %32 = vector.shape_cast %31 : vector<20xf32> to vector<20x1xf32>
    %33 = tpu.reciprocal %32 {approx = true} : vector<20x1xf32> -> vector<20x1xf32>
    %34 = vector.broadcast %33 : vector<20x1xf32> to vector<20x20xf32>
    %35 = arith.mulf %30, %34 : vector<20x20xf32>
    %cst_20 = arith.constant dense<0.000000e+00> : vector<20x8xf32>
    %36 = tpu.matmul %35, %21, %cst_20 {dimension_numbers = #tpu.dot_dimension_numbers<[1], [0], [0], [1], [0, 0, 1, 1], [], []>} : vector<20x20xf32>, vector<20x8xf32>, vector<20x8xf32> -> vector<20x8xf32>
    %c0_21 = arith.constant 0 : index
    %c0_22 = arith.constant 0 : index
    %c0_23 = arith.constant 0 : index
    %37 = vector.load %arg9[%c0_21, %c0_22, %c0_23] : memref<8x8x32xf32, #tpu.memory_space<vmem>>, vector<1x8x32xf32>
    %38 = vector.shape_cast %37 : vector<1x8x32xf32> to vector<8x32xf32>
    %cst_24 = arith.constant dense<0.000000e+00> : vector<20x32xf32>
    %39 = tpu.matmul %36, %38, %cst_24 {dimension_numbers = #tpu.dot_dimension_numbers<[1], [0], [0], [1], [0, 0, 1, 1], [], []>} : vector<20x8xf32>, vector<8x32xf32>, vector<20x32xf32> -> vector<20x32xf32>
    %40 = vector.extract_strided_slice %18 {offsets = [0, 8], sizes = [20, 8], strides = [1, 1]} : vector<20x96xf32> to vector<20x8xf32>
    %41 = vector.extract_strided_slice %18 {offsets = [0, 40], sizes = [20, 8], strides = [1, 1]} : vector<20x96xf32> to vector<20x8xf32>
    %42 = vector.extract_strided_slice %18 {offsets = [0, 72], sizes = [20, 8], strides = [1, 1]} : vector<20x96xf32> to vector<20x8xf32>
    "tpu.trace_start"() <{level = 10 : i32, message = "qe,ke->qk"}> : () -> ()
    %cst_25 = arith.constant dense<0.000000e+00> : vector<20x20xf32>
    %43 = tpu.matmul %40, %41, %cst_25 {dimension_numbers = #tpu.dot_dimension_numbers<[1], [1], [0], [0], [0, 0, 1, 0], [], []>} : vector<20x8xf32>, vector<20x8xf32>, vector<20x20xf32> -> vector<20x20xf32>
    "tpu.trace_stop"() : () -> ()
    %cst_26 = arith.constant 0.353553385 : f32
    %44 = vector.broadcast %cst_26 : f32 to vector<20x20xf32>
    %45 = arith.mulf %43, %44 : vector<20x20xf32>
    %46 = arith.addf %45, %11 : vector<20x20xf32>
    %cst_27 = arith.constant dense<0xFF800000> : vector<20xf32>
    %47 = vector.multi_reduction <maximumf>, %46, %cst_27 [1] : vector<20x20xf32> to vector<20xf32>
    %48 = vector.shape_cast %47 : vector<20xf32> to vector<20x1xf32>
    %49 = vector.broadcast %48 : vector<20x1xf32> to vector<20x20xf32>
    %50 = arith.subf %46, %49 : vector<20x20xf32>
    %51 = math.exp %50 : vector<20x20xf32>
    %cst_28 = arith.constant dense<0.000000e+00> : vector<20xf32>
    %52 = vector.multi_reduction <add>, %51, %cst_28 [1] : vector<20x20xf32> to vector<20xf32>
    %53 = vector.shape_cast %52 : vector<20xf32> to vector<20x1xf32>
    %54 = tpu.reciprocal %53 {approx = true} : vector<20x1xf32> -> vector<20x1xf32>
    %55 = vector.broadcast %54 : vector<20x1xf32> to vector<20x20xf32>
    %56 = arith.mulf %51, %55 : vector<20x20xf32>
    %cst_29 = arith.constant dense<0.000000e+00> : vector<20x8xf32>
    %57 = tpu.matmul %56, %42, %cst_29 {dimension_numbers = #tpu.dot_dimension_numbers<[1], [0], [0], [1], [0, 0, 1, 1], [], []>} : vector<20x20xf32>, vector<20x8xf32>, vector<20x8xf32> -> vector<20x8xf32>
    %c1 = arith.constant 1 : index
    %c0_30 = arith.constant 0 : index
    %c0_31 = arith.constant 0 : index
    %58 = vector.load %arg9[%c1, %c0_30, %c0_31] : memref<8x8x32xf32, #tpu.memory_space<vmem>>, vector<1x8x32xf32>
    %59 = vector.shape_cast %58 : vector<1x8x32xf32> to vector<8x32xf32>
    %cst_32 = arith.constant dense<0.000000e+00> : vector<20x32xf32>
    %60 = tpu.matmul %57, %59, %cst_32 {dimension_numbers = #tpu.dot_dimension_numbers<[1], [0], [0], [1], [0, 0, 1, 1], [], []>} : vector<20x8xf32>, vector<8x32xf32>, vector<20x32xf32> -> vector<20x32xf32>
    %61 = arith.addf %39, %60 : vector<20x32xf32>
    %62 = vector.extract_strided_slice %18 {offsets = [0, 16], sizes = [20, 8], strides = [1, 1]} : vector<20x96xf32> to vector<20x8xf32>
    %63 = vector.extract_strided_slice %18 {offsets = [0, 48], sizes = [20, 8], strides = [1, 1]} : vector<20x96xf32> to vector<20x8xf32>
    %64 = vector.extract_strided_slice %18 {offsets = [0, 80], sizes = [20, 8], strides = [1, 1]} : vector<20x96xf32> to vector<20x8xf32>
    "tpu.trace_start"() <{level = 10 : i32, message = "qe,ke->qk"}> : () -> ()
    %cst_33 = arith.constant dense<0.000000e+00> : vector<20x20xf32>
    %65 = tpu.matmul %62, %63, %cst_33 {dimension_numbers = #tpu.dot_dimension_numbers<[1], [1], [0], [0], [0, 0, 1, 0], [], []>} : vector<20x8xf32>, vector<20x8xf32>, vector<20x20xf32> -> vector<20x20xf32>
    "tpu.trace_stop"() : () -> ()
    %cst_34 = arith.constant 0.353553385 : f32
    %66 = vector.broadcast %cst_34 : f32 to vector<20x20xf32>
    %67 = arith.mulf %65, %66 : vector<20x20xf32>
    %68 = arith.addf %67, %11 : vector<20x20xf32>
    %cst_35 = arith.constant dense<0xFF800000> : vector<20xf32>
    %69 = vector.multi_reduction <maximumf>, %68, %cst_35 [1] : vector<20x20xf32> to vector<20xf32>
    %70 = vector.shape_cast %69 : vector<20xf32> to vector<20x1xf32>
    %71 = vector.broadcast %70 : vector<20x1xf32> to vector<20x20xf32>
    %72 = arith.subf %68, %71 : vector<20x20xf32>
    %73 = math.exp %72 : vector<20x20xf32>
    %cst_36 = arith.constant dense<0.000000e+00> : vector<20xf32>
    %74 = vector.multi_reduction <add>, %73, %cst_36 [1] : vector<20x20xf32> to vector<20xf32>
    %75 = vector.shape_cast %74 : vector<20xf32> to vector<20x1xf32>
    %76 = tpu.reciprocal %75 {approx = true} : vector<20x1xf32> -> vector<20x1xf32>
    %77 = vector.broadcast %76 : vector<20x1xf32> to vector<20x20xf32>
    %78 = arith.mulf %73, %77 : vector<20x20xf32>
    %cst_37 = arith.constant dense<0.000000e+00> : vector<20x8xf32>
    %79 = tpu.matmul %78, %64, %cst_37 {dimension_numbers = #tpu.dot_dimension_numbers<[1], [0], [0], [1], [0, 0, 1, 1], [], []>} : vector<20x20xf32>, vector<20x8xf32>, vector<20x8xf32> -> vector<20x8xf32>
    %c2 = arith.constant 2 : index
    %c0_38 = arith.constant 0 : index
    %c0_39 = arith.constant 0 : index
    %80 = vector.load %arg9[%c2, %c0_38, %c0_39] : memref<8x8x32xf32, #tpu.memory_space<vmem>>, vector<1x8x32xf32>
    %81 = vector.shape_cast %80 : vector<1x8x32xf32> to vector<8x32xf32>
    %cst_40 = arith.constant dense<0.000000e+00> : vector<20x32xf32>
    %82 = tpu.matmul %79, %81, %cst_40 {dimension_numbers = #tpu.dot_dimension_numbers<[1], [0], [0], [1], [0, 0, 1, 1], [], []>} : vector<20x8xf32>, vector<8x32xf32>, vector<20x32xf32> -> vector<20x32xf32>
    %83 = arith.addf %61, %82 : vector<20x32xf32>
    %84 = vector.extract_strided_slice %18 {offsets = [0, 24], sizes = [20, 8], strides = [1, 1]} : vector<20x96xf32> to vector<20x8xf32>
    %85 = vector.extract_strided_slice %18 {offsets = [0, 56], sizes = [20, 8], strides = [1, 1]} : vector<20x96xf32> to vector<20x8xf32>
    %86 = vector.extract_strided_slice %18 {offsets = [0, 88], sizes = [20, 8], strides = [1, 1]} : vector<20x96xf32> to vector<20x8xf32>
    "tpu.trace_start"() <{level = 10 : i32, message = "qe,ke->qk"}> : () -> ()
    %cst_41 = arith.constant dense<0.000000e+00> : vector<20x20xf32>
    %87 = tpu.matmul %84, %85, %cst_41 {dimension_numbers = #tpu.dot_dimension_numbers<[1], [1], [0], [0], [0, 0, 1, 0], [], []>} : vector<20x8xf32>, vector<20x8xf32>, vector<20x20xf32> -> vector<20x20xf32>
    "tpu.trace_stop"() : () -> ()
    %cst_42 = arith.constant 0.353553385 : f32
    %88 = vector.broadcast %cst_42 : f32 to vector<20x20xf32>
    %89 = arith.mulf %87, %88 : vector<20x20xf32>
    %90 = arith.addf %89, %11 : vector<20x20xf32>
    %cst_43 = arith.constant dense<0xFF800000> : vector<20xf32>
    %91 = vector.multi_reduction <maximumf>, %90, %cst_43 [1] : vector<20x20xf32> to vector<20xf32>
    %92 = vector.shape_cast %91 : vector<20xf32> to vector<20x1xf32>
    %93 = vector.broadcast %92 : vector<20x1xf32> to vector<20x20xf32>
    %94 = arith.subf %90, %93 : vector<20x20xf32>
    %95 = math.exp %94 : vector<20x20xf32>
    %cst_44 = arith.constant dense<0.000000e+00> : vector<20xf32>
    %96 = vector.multi_reduction <add>, %95, %cst_44 [1] : vector<20x20xf32> to vector<20xf32>
    %97 = vector.shape_cast %96 : vector<20xf32> to vector<20x1xf32>
    %98 = tpu.reciprocal %97 {approx = true} : vector<20x1xf32> -> vector<20x1xf32>
    %99 = vector.broadcast %98 : vector<20x1xf32> to vector<20x20xf32>
    %100 = arith.mulf %95, %99 : vector<20x20xf32>
    %cst_45 = arith.constant dense<0.000000e+00> : vector<20x8xf32>
    %101 = tpu.matmul %100, %86, %cst_45 {dimension_numbers = #tpu.dot_dimension_numbers<[1], [0], [0], [1], [0, 0, 1, 1], [], []>} : vector<20x20xf32>, vector<20x8xf32>, vector<20x8xf32> -> vector<20x8xf32>
    %c3 = arith.constant 3 : index
    %c0_46 = arith.constant 0 : index
    %c0_47 = arith.constant 0 : index
    %102 = vector.load %arg9[%c3, %c0_46, %c0_47] : memref<8x8x32xf32, #tpu.memory_space<vmem>>, vector<1x8x32xf32>
    %103 = vector.shape_cast %102 : vector<1x8x32xf32> to vector<8x32xf32>
    %cst_48 = arith.constant dense<0.000000e+00> : vector<20x32xf32>
    %104 = tpu.matmul %101, %103, %cst_48 {dimension_numbers = #tpu.dot_dimension_numbers<[1], [0], [0], [1], [0, 0, 1, 1], [], []>} : vector<20x8xf32>, vector<8x32xf32>, vector<20x32xf32> -> vector<20x32xf32>
    %105 = arith.addf %83, %104 : vector<20x32xf32>
    %106 = arith.addf %10, %105 : vector<20x32xf32>
    %c0_49 = arith.constant 0 : index
    %c0_50 = arith.constant 0 : index
    %c0_51 = arith.constant 0 : index
    %107 = vector.load %arg10[%c0_49, %c0_50, %c0_51] : memref<2x1x32xf32, #tpu.memory_space<vmem>>, vector<1x1x32xf32>
    %108 = vector.shape_cast %107 : vector<1x1x32xf32> to vector<1x32xf32>
    %109 = vector.broadcast %108 : vector<1x32xf32> to vector<20x32xf32>
    %110 = arith.addf %106, %109 : vector<20x32xf32>
    %c0_52 = arith.constant 0 : index
    %c0_53 = arith.constant 0 : index
    %c0_54 = arith.constant 0 : index
    %111 = vector.load %arg11[%c0_52, %c0_53, %c0_54] : memref<2x1x32xf32, #tpu.memory_space<vmem>>, vector<1x1x32xf32>
    %112 = vector.shape_cast %111 : vector<1x1x32xf32> to vector<1x32xf32>
    %c0_55 = arith.constant 0 : index
    %c0_56 = arith.constant 0 : index
    %c0_57 = arith.constant 0 : index
    %113 = vector.load %arg12[%c0_55, %c0_56, %c0_57] : memref<2x1x32xf32, #tpu.memory_space<vmem>>, vector<1x1x32xf32>
    %114 = vector.shape_cast %113 : vector<1x1x32xf32> to vector<1x32xf32>
    %cst_58 = arith.constant dense<0.000000e+00> : vector<20xf32>
    %115 = vector.multi_reduction <add>, %110, %cst_58 [1] : vector<20x32xf32> to vector<20xf32>
    %116 = vector.shape_cast %115 : vector<20xf32> to vector<20x1xf32>
    %cst_59 = arith.constant 3.200000e+01 : f32
    %117 = vector.broadcast %cst_59 : f32 to vector<20x1xf32>
    %118 = arith.divf %116, %117 : vector<20x1xf32>
    %119 = vector.broadcast %118 : vector<20x1xf32> to vector<20x32xf32>
    %120 = arith.subf %110, %119 : vector<20x32xf32>
    %121 = arith.mulf %120, %120 : vector<20x32xf32>
    %cst_60 = arith.constant dense<0.000000e+00> : vector<20xf32>
    %122 = vector.multi_reduction <add>, %121, %cst_60 [1] : vector<20x32xf32> to vector<20xf32>
    %123 = vector.shape_cast %122 : vector<20xf32> to vector<20x1xf32>
    %cst_61 = arith.constant 3.200000e+01 : f32
    %124 = vector.broadcast %cst_61 : f32 to vector<20x1xf32>
    %125 = arith.divf %123, %124 : vector<20x1xf32>
    %cst_62 = arith.constant 9.99999974E-6 : f32
    %126 = vector.broadcast %cst_62 : f32 to vector<20x1xf32>
    %127 = arith.addf %125, %126 : vector<20x1xf32>
    %128 = math.rsqrt %127 : vector<20x1xf32>
    %129 = vector.broadcast %128 : vector<20x1xf32> to vector<20x32xf32>
    %130 = arith.mulf %120, %129 : vector<20x32xf32>
    %131 = vector.broadcast %112 : vector<1x32xf32> to vector<20x32xf32>
    %132 = arith.mulf %130, %131 : vector<20x32xf32>
    %133 = vector.broadcast %114 : vector<1x32xf32> to vector<20x32xf32>
    %134 = arith.addf %132, %133 : vector<20x32xf32>
    %c0_63 = arith.constant 0 : index
    %c0_64 = arith.constant 0 : index
    %c0_65 = arith.constant 0 : index
    %135 = vector.load %arg13[%c0_63, %c0_64, %c0_65] : memref<2x32x64xf32, #tpu.memory_space<vmem>>, vector<1x32x64xf32>
    %136 = vector.shape_cast %135 : vector<1x32x64xf32> to vector<32x64xf32>
    %cst_66 = arith.constant dense<0.000000e+00> : vector<20x64xf32>
    %137 = tpu.matmul %134, %136, %cst_66 {dimension_numbers = #tpu.dot_dimension_numbers<[1], [0], [0], [1], [0, 0, 1, 1], [], []>} : vector<20x32xf32>, vector<32x64xf32>, vector<20x64xf32> -> vector<20x64xf32>
    %c0_67 = arith.constant 0 : index
    %c0_68 = arith.constant 0 : index
    %c0_69 = arith.constant 0 : index
    %138 = vector.load %arg14[%c0_67, %c0_68, %c0_69] : memref<2x1x64xf32, #tpu.memory_space<vmem>>, vector<1x1x64xf32>
    %139 = vector.shape_cast %138 : vector<1x1x64xf32> to vector<1x64xf32>
    %140 = vector.broadcast %139 : vector<1x64xf32> to vector<20x64xf32>
    %141 = arith.addf %137, %140 : vector<20x64xf32>
    %cst_70 = arith.constant 5.000000e-01 : f32
    %142 = vector.broadcast %cst_70 : f32 to vector<20x64xf32>
    %143 = arith.mulf %142, %141 : vector<20x64xf32>
    %cst_71 = arith.constant 0.707106769 : f32
    %144 = vector.broadcast %cst_71 : f32 to vector<20x64xf32>
    %145 = arith.mulf %141, %144 : vector<20x64xf32>
    %cst_72 = arith.constant 0.000000e+00 : f32
    %146 = vector.broadcast %cst_72 : f32 to vector<20x64xf32>
    %147 = arith.cmpf oge, %145, %146 : vector<20x64xf32>
    %cst_73 = arith.constant 1.000000e+00 : f32
    %cst_74 = arith.constant -1.000000e+00 : f32
    %148 = vector.broadcast %cst_73 : f32 to vector<20x64xf32>
    %149 = vector.broadcast %cst_74 : f32 to vector<20x64xf32>
    %150 = arith.select %147, %148, %149 : vector<20x64xi1>, vector<20x64xf32>
    %151 = math.absf %145 : vector<20x64xf32>
    %cst_75 = arith.constant 0.327591091 : f32
    %152 = vector.broadcast %cst_75 : f32 to vector<20x64xf32>
    %153 = arith.mulf %152, %151 : vector<20x64xf32>
    %cst_76 = arith.constant 1.000000e+00 : f32
    %154 = vector.broadcast %cst_76 : f32 to vector<20x64xf32>
    %155 = arith.addf %154, %153 : vector<20x64xf32>
    %cst_77 = arith.constant 1.000000e+00 : f32
    %156 = vector.broadcast %cst_77 : f32 to vector<20x64xf32>
    %157 = arith.divf %156, %155 : vector<20x64xf32>
    %cst_78 = arith.constant 1.06140542 : f32
    %158 = vector.broadcast %cst_78 : f32 to vector<20x64xf32>
    %159 = arith.mulf %158, %157 : vector<20x64xf32>
    %cst_79 = arith.constant -1.45315206 : f32
    %160 = vector.broadcast %cst_79 : f32 to vector<20x64xf32>
    %161 = arith.addf %159, %160 : vector<20x64xf32>
    %162 = arith.mulf %161, %157 : vector<20x64xf32>
    %cst_80 = arith.constant 1.42141378 : f32
    %163 = vector.broadcast %cst_80 : f32 to vector<20x64xf32>
    %164 = arith.addf %162, %163 : vector<20x64xf32>
    %165 = arith.mulf %164, %157 : vector<20x64xf32>
    %cst_81 = arith.constant -0.284496725 : f32
    %166 = vector.broadcast %cst_81 : f32 to vector<20x64xf32>
    %167 = arith.addf %165, %166 : vector<20x64xf32>
    %168 = arith.mulf %167, %157 : vector<20x64xf32>
    %cst_82 = arith.constant 0.254829586 : f32
    %169 = vector.broadcast %cst_82 : f32 to vector<20x64xf32>
    %170 = arith.addf %168, %169 : vector<20x64xf32>
    %171 = arith.mulf %170, %157 : vector<20x64xf32>
    %cst_83 = arith.constant 0.000000e+00 : f32
    %172 = vector.broadcast %cst_83 : f32 to vector<20x64xf32>
    %173 = arith.subf %172, %151 : vector<20x64xf32>
    %174 = arith.mulf %173, %151 : vector<20x64xf32>
    %175 = math.exp %174 : vector<20x64xf32>
    %176 = arith.mulf %171, %175 : vector<20x64xf32>
    %cst_84 = arith.constant 1.000000e+00 : f32
    %177 = vector.broadcast %cst_84 : f32 to vector<20x64xf32>
    %178 = arith.subf %177, %176 : vector<20x64xf32>
    %179 = arith.mulf %150, %178 : vector<20x64xf32>
    %cst_85 = arith.constant 1.000000e+00 : f32
    %180 = vector.broadcast %cst_85 : f32 to vector<20x64xf32>
    %181 = arith.addf %180, %179 : vector<20x64xf32>
    %182 = arith.mulf %143, %181 : vector<20x64xf32>
    %c0_86 = arith.constant 0 : index
    %c0_87 = arith.constant 0 : index
    %c0_88 = arith.constant 0 : index
    %183 = vector.load %arg15[%c0_86, %c0_87, %c0_88] : memref<2x64x32xf32, #tpu.memory_space<vmem>>, vector<1x64x32xf32>
    %184 = vector.shape_cast %183 : vector<1x64x32xf32> to vector<64x32xf32>
    %cst_89 = arith.constant dense<0.000000e+00> : vector<20x32xf32>
    %185 = tpu.matmul %182, %184, %cst_89 {dimension_numbers = #tpu.dot_dimension_numbers<[1], [0], [0], [1], [0, 0, 1, 1], [], []>} : vector<20x64xf32>, vector<64x32xf32>, vector<20x32xf32> -> vector<20x32xf32>
    %c0_90 = arith.constant 0 : index
    %c0_91 = arith.constant 0 : index
    %c0_92 = arith.constant 0 : index
    %186 = vector.load %arg16[%c0_90, %c0_91, %c0_92] : memref<2x1x32xf32, #tpu.memory_space<vmem>>, vector<1x1x32xf32>
    %187 = vector.shape_cast %186 : vector<1x1x32xf32> to vector<1x32xf32>
    %188 = vector.broadcast %187 : vector<1x32xf32> to vector<20x32xf32>
    %189 = arith.addf %185, %188 : vector<20x32xf32>
    %190 = arith.addf %134, %189 : vector<20x32xf32>
    %c0_93 = arith.constant 0 : index
    %c0_94 = arith.constant 0 : index
    %c0_95 = arith.constant 0 : index
    %191 = vector.load %arg17[%c0_93, %c0_94, %c0_95] : memref<2x1x32xf32, #tpu.memory_space<vmem>>, vector<1x1x32xf32>
    %192 = vector.shape_cast %191 : vector<1x1x32xf32> to vector<1x32xf32>
    %c0_96 = arith.constant 0 : index
    %c0_97 = arith.constant 0 : index
    %c0_98 = arith.constant 0 : index
    %193 = vector.load %arg18[%c0_96, %c0_97, %c0_98] : memref<2x1x32xf32, #tpu.memory_space<vmem>>, vector<1x1x32xf32>
    %194 = vector.shape_cast %193 : vector<1x1x32xf32> to vector<1x32xf32>
    %cst_99 = arith.constant dense<0.000000e+00> : vector<20xf32>
    %195 = vector.multi_reduction <add>, %190, %cst_99 [1] : vector<20x32xf32> to vector<20xf32>
    %196 = vector.shape_cast %195 : vector<20xf32> to vector<20x1xf32>
    %cst_100 = arith.constant 3.200000e+01 : f32
    %197 = vector.broadcast %cst_100 : f32 to vector<20x1xf32>
    %198 = arith.divf %196, %197 : vector<20x1xf32>
    %199 = vector.broadcast %198 : vector<20x1xf32> to vector<20x32xf32>
    %200 = arith.subf %190, %199 : vector<20x32xf32>
    %201 = arith.mulf %200, %200 : vector<20x32xf32>
    %cst_101 = arith.constant dense<0.000000e+00> : vector<20xf32>
    %202 = vector.multi_reduction <add>, %201, %cst_101 [1] : vector<20x32xf32> to vector<20xf32>
    %203 = vector.shape_cast %202 : vector<20xf32> to vector<20x1xf32>
    %cst_102 = arith.constant 3.200000e+01 : f32
    %204 = vector.broadcast %cst_102 : f32 to vector<20x1xf32>
    %205 = arith.divf %203, %204 : vector<20x1xf32>
    %cst_103 = arith.constant 9.99999974E-6 : f32
    %206 = vector.broadcast %cst_103 : f32 to vector<20x1xf32>
    %207 = arith.addf %205, %206 : vector<20x1xf32>
    %208 = math.rsqrt %207 : vector<20x1xf32>
    %209 = vector.broadcast %208 : vector<20x1xf32> to vector<20x32xf32>
    %210 = arith.mulf %200, %209 : vector<20x32xf32>
    %211 = vector.broadcast %192 : vector<1x32xf32> to vector<20x32xf32>
    %212 = arith.mulf %210, %211 : vector<20x32xf32>
    %213 = vector.broadcast %194 : vector<1x32xf32> to vector<20x32xf32>
    %214 = arith.addf %212, %213 : vector<20x32xf32>
    %c1_104 = arith.constant 1 : index
    %c0_105 = arith.constant 0 : index
    %c0_106 = arith.constant 0 : index
    %215 = vector.load %arg7[%c1_104, %c0_105, %c0_106] : memref<2x32x96xf32, #tpu.memory_space<vmem>>, vector<1x32x96xf32>
    %216 = vector.shape_cast %215 : vector<1x32x96xf32> to vector<32x96xf32>
    %cst_107 = arith.constant dense<0.000000e+00> : vector<20x96xf32>
    %217 = tpu.matmul %214, %216, %cst_107 {dimension_numbers = #tpu.dot_dimension_numbers<[1], [0], [0], [1], [0, 0, 1, 1], [], []>} : vector<20x32xf32>, vector<32x96xf32>, vector<20x96xf32> -> vector<20x96xf32>
    %c1_108 = arith.constant 1 : index
    %c0_109 = arith.constant 0 : index
    %c0_110 = arith.constant 0 : index
    %218 = vector.load %arg8[%c1_108, %c0_109, %c0_110] : memref<2x1x96xf32, #tpu.memory_space<vmem>>, vector<1x1x96xf32>
    %219 = vector.shape_cast %218 : vector<1x1x96xf32> to vector<1x96xf32>
    %220 = vector.broadcast %219 : vector<1x96xf32> to vector<20x96xf32>
    %221 = arith.addf %217, %220 : vector<20x96xf32>
    %222 = vector.extract_strided_slice %221 {offsets = [0, 0], sizes = [20, 8], strides = [1, 1]} : vector<20x96xf32> to vector<20x8xf32>
    %223 = vector.extract_strided_slice %221 {offsets = [0, 32], sizes = [20, 8], strides = [1, 1]} : vector<20x96xf32> to vector<20x8xf32>
    %224 = vector.extract_strided_slice %221 {offsets = [0, 64], sizes = [20, 8], strides = [1, 1]} : vector<20x96xf32> to vector<20x8xf32>
    "tpu.trace_start"() <{level = 10 : i32, message = "qe,ke->qk"}> : () -> ()
    %cst_111 = arith.constant dense<0.000000e+00> : vector<20x20xf32>
    %225 = tpu.matmul %222, %223, %cst_111 {dimension_numbers = #tpu.dot_dimension_numbers<[1], [1], [0], [0], [0, 0, 1, 0], [], []>} : vector<20x8xf32>, vector<20x8xf32>, vector<20x20xf32> -> vector<20x20xf32>
    "tpu.trace_stop"() : () -> ()
    %cst_112 = arith.constant 0.353553385 : f32
    %226 = vector.broadcast %cst_112 : f32 to vector<20x20xf32>
    %227 = arith.mulf %225, %226 : vector<20x20xf32>
    %228 = arith.addf %227, %11 : vector<20x20xf32>
    %cst_113 = arith.constant dense<0xFF800000> : vector<20xf32>
    %229 = vector.multi_reduction <maximumf>, %228, %cst_113 [1] : vector<20x20xf32> to vector<20xf32>
    %230 = vector.shape_cast %229 : vector<20xf32> to vector<20x1xf32>
    %231 = vector.broadcast %230 : vector<20x1xf32> to vector<20x20xf32>
    %232 = arith.subf %228, %231 : vector<20x20xf32>
    %233 = math.exp %232 : vector<20x20xf32>
    %cst_114 = arith.constant dense<0.000000e+00> : vector<20xf32>
    %234 = vector.multi_reduction <add>, %233, %cst_114 [1] : vector<20x20xf32> to vector<20xf32>
    %235 = vector.shape_cast %234 : vector<20xf32> to vector<20x1xf32>
    %236 = tpu.reciprocal %235 {approx = true} : vector<20x1xf32> -> vector<20x1xf32>
    %237 = vector.broadcast %236 : vector<20x1xf32> to vector<20x20xf32>
    %238 = arith.mulf %233, %237 : vector<20x20xf32>
    %cst_115 = arith.constant dense<0.000000e+00> : vector<20x8xf32>
    %239 = tpu.matmul %238, %224, %cst_115 {dimension_numbers = #tpu.dot_dimension_numbers<[1], [0], [0], [1], [0, 0, 1, 1], [], []>} : vector<20x20xf32>, vector<20x8xf32>, vector<20x8xf32> -> vector<20x8xf32>
    %c4 = arith.constant 4 : index
    %c0_116 = arith.constant 0 : index
    %c0_117 = arith.constant 0 : index
    %240 = vector.load %arg9[%c4, %c0_116, %c0_117] : memref<8x8x32xf32, #tpu.memory_space<vmem>>, vector<1x8x32xf32>
    %241 = vector.shape_cast %240 : vector<1x8x32xf32> to vector<8x32xf32>
    %cst_118 = arith.constant dense<0.000000e+00> : vector<20x32xf32>
    %242 = tpu.matmul %239, %241, %cst_118 {dimension_numbers = #tpu.dot_dimension_numbers<[1], [0], [0], [1], [0, 0, 1, 1], [], []>} : vector<20x8xf32>, vector<8x32xf32>, vector<20x32xf32> -> vector<20x32xf32>
    %243 = vector.extract_strided_slice %221 {offsets = [0, 8], sizes = [20, 8], strides = [1, 1]} : vector<20x96xf32> to vector<20x8xf32>
    %244 = vector.extract_strided_slice %221 {offsets = [0, 40], sizes = [20, 8], strides = [1, 1]} : vector<20x96xf32> to vector<20x8xf32>
    %245 = vector.extract_strided_slice %221 {offsets = [0, 72], sizes = [20, 8], strides = [1, 1]} : vector<20x96xf32> to vector<20x8xf32>
    "tpu.trace_start"() <{level = 10 : i32, message = "qe,ke->qk"}> : () -> ()
    %cst_119 = arith.constant dense<0.000000e+00> : vector<20x20xf32>
    %246 = tpu.matmul %243, %244, %cst_119 {dimension_numbers = #tpu.dot_dimension_numbers<[1], [1], [0], [0], [0, 0, 1, 0], [], []>} : vector<20x8xf32>, vector<20x8xf32>, vector<20x20xf32> -> vector<20x20xf32>
    "tpu.trace_stop"() : () -> ()
    %cst_120 = arith.constant 0.353553385 : f32
    %247 = vector.broadcast %cst_120 : f32 to vector<20x20xf32>
    %248 = arith.mulf %246, %247 : vector<20x20xf32>
    %249 = arith.addf %248, %11 : vector<20x20xf32>
    %cst_121 = arith.constant dense<0xFF800000> : vector<20xf32>
    %250 = vector.multi_reduction <maximumf>, %249, %cst_121 [1] : vector<20x20xf32> to vector<20xf32>
    %251 = vector.shape_cast %250 : vector<20xf32> to vector<20x1xf32>
    %252 = vector.broadcast %251 : vector<20x1xf32> to vector<20x20xf32>
    %253 = arith.subf %249, %252 : vector<20x20xf32>
    %254 = math.exp %253 : vector<20x20xf32>
    %cst_122 = arith.constant dense<0.000000e+00> : vector<20xf32>
    %255 = vector.multi_reduction <add>, %254, %cst_122 [1] : vector<20x20xf32> to vector<20xf32>
    %256 = vector.shape_cast %255 : vector<20xf32> to vector<20x1xf32>
    %257 = tpu.reciprocal %256 {approx = true} : vector<20x1xf32> -> vector<20x1xf32>
    %258 = vector.broadcast %257 : vector<20x1xf32> to vector<20x20xf32>
    %259 = arith.mulf %254, %258 : vector<20x20xf32>
    %cst_123 = arith.constant dense<0.000000e+00> : vector<20x8xf32>
    %260 = tpu.matmul %259, %245, %cst_123 {dimension_numbers = #tpu.dot_dimension_numbers<[1], [0], [0], [1], [0, 0, 1, 1], [], []>} : vector<20x20xf32>, vector<20x8xf32>, vector<20x8xf32> -> vector<20x8xf32>
    %c5 = arith.constant 5 : index
    %c0_124 = arith.constant 0 : index
    %c0_125 = arith.constant 0 : index
    %261 = vector.load %arg9[%c5, %c0_124, %c0_125] : memref<8x8x32xf32, #tpu.memory_space<vmem>>, vector<1x8x32xf32>
    %262 = vector.shape_cast %261 : vector<1x8x32xf32> to vector<8x32xf32>
    %cst_126 = arith.constant dense<0.000000e+00> : vector<20x32xf32>
    %263 = tpu.matmul %260, %262, %cst_126 {dimension_numbers = #tpu.dot_dimension_numbers<[1], [0], [0], [1], [0, 0, 1, 1], [], []>} : vector<20x8xf32>, vector<8x32xf32>, vector<20x32xf32> -> vector<20x32xf32>
    %264 = arith.addf %242, %263 : vector<20x32xf32>
    %265 = vector.extract_strided_slice %221 {offsets = [0, 16], sizes = [20, 8], strides = [1, 1]} : vector<20x96xf32> to vector<20x8xf32>
    %266 = vector.extract_strided_slice %221 {offsets = [0, 48], sizes = [20, 8], strides = [1, 1]} : vector<20x96xf32> to vector<20x8xf32>
    %267 = vector.extract_strided_slice %221 {offsets = [0, 80], sizes = [20, 8], strides = [1, 1]} : vector<20x96xf32> to vector<20x8xf32>
    "tpu.trace_start"() <{level = 10 : i32, message = "qe,ke->qk"}> : () -> ()
    %cst_127 = arith.constant dense<0.000000e+00> : vector<20x20xf32>
    %268 = tpu.matmul %265, %266, %cst_127 {dimension_numbers = #tpu.dot_dimension_numbers<[1], [1], [0], [0], [0, 0, 1, 0], [], []>} : vector<20x8xf32>, vector<20x8xf32>, vector<20x20xf32> -> vector<20x20xf32>
    "tpu.trace_stop"() : () -> ()
    %cst_128 = arith.constant 0.353553385 : f32
    %269 = vector.broadcast %cst_128 : f32 to vector<20x20xf32>
    %270 = arith.mulf %268, %269 : vector<20x20xf32>
    %271 = arith.addf %270, %11 : vector<20x20xf32>
    %cst_129 = arith.constant dense<0xFF800000> : vector<20xf32>
    %272 = vector.multi_reduction <maximumf>, %271, %cst_129 [1] : vector<20x20xf32> to vector<20xf32>
    %273 = vector.shape_cast %272 : vector<20xf32> to vector<20x1xf32>
    %274 = vector.broadcast %273 : vector<20x1xf32> to vector<20x20xf32>
    %275 = arith.subf %271, %274 : vector<20x20xf32>
    %276 = math.exp %275 : vector<20x20xf32>
    %cst_130 = arith.constant dense<0.000000e+00> : vector<20xf32>
    %277 = vector.multi_reduction <add>, %276, %cst_130 [1] : vector<20x20xf32> to vector<20xf32>
    %278 = vector.shape_cast %277 : vector<20xf32> to vector<20x1xf32>
    %279 = tpu.reciprocal %278 {approx = true} : vector<20x1xf32> -> vector<20x1xf32>
    %280 = vector.broadcast %279 : vector<20x1xf32> to vector<20x20xf32>
    %281 = arith.mulf %276, %280 : vector<20x20xf32>
    %cst_131 = arith.constant dense<0.000000e+00> : vector<20x8xf32>
    %282 = tpu.matmul %281, %267, %cst_131 {dimension_numbers = #tpu.dot_dimension_numbers<[1], [0], [0], [1], [0, 0, 1, 1], [], []>} : vector<20x20xf32>, vector<20x8xf32>, vector<20x8xf32> -> vector<20x8xf32>
    %c6 = arith.constant 6 : index
    %c0_132 = arith.constant 0 : index
    %c0_133 = arith.constant 0 : index
    %283 = vector.load %arg9[%c6, %c0_132, %c0_133] : memref<8x8x32xf32, #tpu.memory_space<vmem>>, vector<1x8x32xf32>
    %284 = vector.shape_cast %283 : vector<1x8x32xf32> to vector<8x32xf32>
    %cst_134 = arith.constant dense<0.000000e+00> : vector<20x32xf32>
    %285 = tpu.matmul %282, %284, %cst_134 {dimension_numbers = #tpu.dot_dimension_numbers<[1], [0], [0], [1], [0, 0, 1, 1], [], []>} : vector<20x8xf32>, vector<8x32xf32>, vector<20x32xf32> -> vector<20x32xf32>
    %286 = arith.addf %264, %285 : vector<20x32xf32>
    %287 = vector.extract_strided_slice %221 {offsets = [0, 24], sizes = [20, 8], strides = [1, 1]} : vector<20x96xf32> to vector<20x8xf32>
    %288 = vector.extract_strided_slice %221 {offsets = [0, 56], sizes = [20, 8], strides = [1, 1]} : vector<20x96xf32> to vector<20x8xf32>
    %289 = vector.extract_strided_slice %221 {offsets = [0, 88], sizes = [20, 8], strides = [1, 1]} : vector<20x96xf32> to vector<20x8xf32>
    "tpu.trace_start"() <{level = 10 : i32, message = "qe,ke->qk"}> : () -> ()
    %cst_135 = arith.constant dense<0.000000e+00> : vector<20x20xf32>
    %290 = tpu.matmul %287, %288, %cst_135 {dimension_numbers = #tpu.dot_dimension_numbers<[1], [1], [0], [0], [0, 0, 1, 0], [], []>} : vector<20x8xf32>, vector<20x8xf32>, vector<20x20xf32> -> vector<20x20xf32>
    "tpu.trace_stop"() : () -> ()
    %cst_136 = arith.constant 0.353553385 : f32
    %291 = vector.broadcast %cst_136 : f32 to vector<20x20xf32>
    %292 = arith.mulf %290, %291 : vector<20x20xf32>
    %293 = arith.addf %292, %11 : vector<20x20xf32>
    %cst_137 = arith.constant dense<0xFF800000> : vector<20xf32>
    %294 = vector.multi_reduction <maximumf>, %293, %cst_137 [1] : vector<20x20xf32> to vector<20xf32>
    %295 = vector.shape_cast %294 : vector<20xf32> to vector<20x1xf32>
    %296 = vector.broadcast %295 : vector<20x1xf32> to vector<20x20xf32>
    %297 = arith.subf %293, %296 : vector<20x20xf32>
    %298 = math.exp %297 : vector<20x20xf32>
    %cst_138 = arith.constant dense<0.000000e+00> : vector<20xf32>
    %299 = vector.multi_reduction <add>, %298, %cst_138 [1] : vector<20x20xf32> to vector<20xf32>
    %300 = vector.shape_cast %299 : vector<20xf32> to vector<20x1xf32>
    %301 = tpu.reciprocal %300 {approx = true} : vector<20x1xf32> -> vector<20x1xf32>
    %302 = vector.broadcast %301 : vector<20x1xf32> to vector<20x20xf32>
    %303 = arith.mulf %298, %302 : vector<20x20xf32>
    %cst_139 = arith.constant dense<0.000000e+00> : vector<20x8xf32>
    %304 = tpu.matmul %303, %289, %cst_139 {dimension_numbers = #tpu.dot_dimension_numbers<[1], [0], [0], [1], [0, 0, 1, 1], [], []>} : vector<20x20xf32>, vector<20x8xf32>, vector<20x8xf32> -> vector<20x8xf32>
    %c7 = arith.constant 7 : index
    %c0_140 = arith.constant 0 : index
    %c0_141 = arith.constant 0 : index
    %305 = vector.load %arg9[%c7, %c0_140, %c0_141] : memref<8x8x32xf32, #tpu.memory_space<vmem>>, vector<1x8x32xf32>
    %306 = vector.shape_cast %305 : vector<1x8x32xf32> to vector<8x32xf32>
    %cst_142 = arith.constant dense<0.000000e+00> : vector<20x32xf32>
    %307 = tpu.matmul %304, %306, %cst_142 {dimension_numbers = #tpu.dot_dimension_numbers<[1], [0], [0], [1], [0, 0, 1, 1], [], []>} : vector<20x8xf32>, vector<8x32xf32>, vector<20x32xf32> -> vector<20x32xf32>
    %308 = arith.addf %286, %307 : vector<20x32xf32>
    %309 = arith.addf %214, %308 : vector<20x32xf32>
    %c1_143 = arith.constant 1 : index
    %c0_144 = arith.constant 0 : index
    %c0_145 = arith.constant 0 : index
    %310 = vector.load %arg10[%c1_143, %c0_144, %c0_145] : memref<2x1x32xf32, #tpu.memory_space<vmem>>, vector<1x1x32xf32>
    %311 = vector.shape_cast %310 : vector<1x1x32xf32> to vector<1x32xf32>
    %312 = vector.broadcast %311 : vector<1x32xf32> to vector<20x32xf32>
    %313 = arith.addf %309, %312 : vector<20x32xf32>
    %c1_146 = arith.constant 1 : index
    %c0_147 = arith.constant 0 : index
    %c0_148 = arith.constant 0 : index
    %314 = vector.load %arg11[%c1_146, %c0_147, %c0_148] : memref<2x1x32xf32, #tpu.memory_space<vmem>>, vector<1x1x32xf32>
    %315 = vector.shape_cast %314 : vector<1x1x32xf32> to vector<1x32xf32>
    %c1_149 = arith.constant 1 : index
    %c0_150 = arith.constant 0 : index
    %c0_151 = arith.constant 0 : index
    %316 = vector.load %arg12[%c1_149, %c0_150, %c0_151] : memref<2x1x32xf32, #tpu.memory_space<vmem>>, vector<1x1x32xf32>
    %317 = vector.shape_cast %316 : vector<1x1x32xf32> to vector<1x32xf32>
    %cst_152 = arith.constant dense<0.000000e+00> : vector<20xf32>
    %318 = vector.multi_reduction <add>, %313, %cst_152 [1] : vector<20x32xf32> to vector<20xf32>
    %319 = vector.shape_cast %318 : vector<20xf32> to vector<20x1xf32>
    %cst_153 = arith.constant 3.200000e+01 : f32
    %320 = vector.broadcast %cst_153 : f32 to vector<20x1xf32>
    %321 = arith.divf %319, %320 : vector<20x1xf32>
    %322 = vector.broadcast %321 : vector<20x1xf32> to vector<20x32xf32>
    %323 = arith.subf %313, %322 : vector<20x32xf32>
    %324 = arith.mulf %323, %323 : vector<20x32xf32>
    %cst_154 = arith.constant dense<0.000000e+00> : vector<20xf32>
    %325 = vector.multi_reduction <add>, %324, %cst_154 [1] : vector<20x32xf32> to vector<20xf32>
    %326 = vector.shape_cast %325 : vector<20xf32> to vector<20x1xf32>
    %cst_155 = arith.constant 3.200000e+01 : f32
    %327 = vector.broadcast %cst_155 : f32 to vector<20x1xf32>
    %328 = arith.divf %326, %327 : vector<20x1xf32>
    %cst_156 = arith.constant 9.99999974E-6 : f32
    %329 = vector.broadcast %cst_156 : f32 to vector<20x1xf32>
    %330 = arith.addf %328, %329 : vector<20x1xf32>
    %331 = math.rsqrt %330 : vector<20x1xf32>
    %332 = vector.broadcast %331 : vector<20x1xf32> to vector<20x32xf32>
    %333 = arith.mulf %323, %332 : vector<20x32xf32>
    %334 = vector.broadcast %315 : vector<1x32xf32> to vector<20x32xf32>
    %335 = arith.mulf %333, %334 : vector<20x32xf32>
    %336 = vector.broadcast %317 : vector<1x32xf32> to vector<20x32xf32>
    %337 = arith.addf %335, %336 : vector<20x32xf32>
    %c1_157 = arith.constant 1 : index
    %c0_158 = arith.constant 0 : index
    %c0_159 = arith.constant 0 : index
    %338 = vector.load %arg13[%c1_157, %c0_158, %c0_159] : memref<2x32x64xf32, #tpu.memory_space<vmem>>, vector<1x32x64xf32>
    %339 = vector.shape_cast %338 : vector<1x32x64xf32> to vector<32x64xf32>
    %cst_160 = arith.constant dense<0.000000e+00> : vector<20x64xf32>
    %340 = tpu.matmul %337, %339, %cst_160 {dimension_numbers = #tpu.dot_dimension_numbers<[1], [0], [0], [1], [0, 0, 1, 1], [], []>} : vector<20x32xf32>, vector<32x64xf32>, vector<20x64xf32> -> vector<20x64xf32>
    %c1_161 = arith.constant 1 : index
    %c0_162 = arith.constant 0 : index
    %c0_163 = arith.constant 0 : index
    %341 = vector.load %arg14[%c1_161, %c0_162, %c0_163] : memref<2x1x64xf32, #tpu.memory_space<vmem>>, vector<1x1x64xf32>
    %342 = vector.shape_cast %341 : vector<1x1x64xf32> to vector<1x64xf32>
    %343 = vector.broadcast %342 : vector<1x64xf32> to vector<20x64xf32>
    %344 = arith.addf %340, %343 : vector<20x64xf32>
    %cst_164 = arith.constant 5.000000e-01 : f32
    %345 = vector.broadcast %cst_164 : f32 to vector<20x64xf32>
    %346 = arith.mulf %345, %344 : vector<20x64xf32>
    %cst_165 = arith.constant 0.707106769 : f32
    %347 = vector.broadcast %cst_165 : f32 to vector<20x64xf32>
    %348 = arith.mulf %344, %347 : vector<20x64xf32>
    %cst_166 = arith.constant 0.000000e+00 : f32
    %349 = vector.broadcast %cst_166 : f32 to vector<20x64xf32>
    %350 = arith.cmpf oge, %348, %349 : vector<20x64xf32>
    %cst_167 = arith.constant 1.000000e+00 : f32
    %cst_168 = arith.constant -1.000000e+00 : f32
    %351 = vector.broadcast %cst_167 : f32 to vector<20x64xf32>
    %352 = vector.broadcast %cst_168 : f32 to vector<20x64xf32>
    %353 = arith.select %350, %351, %352 : vector<20x64xi1>, vector<20x64xf32>
    %354 = math.absf %348 : vector<20x64xf32>
    %cst_169 = arith.constant 0.327591091 : f32
    %355 = vector.broadcast %cst_169 : f32 to vector<20x64xf32>
    %356 = arith.mulf %355, %354 : vector<20x64xf32>
    %cst_170 = arith.constant 1.000000e+00 : f32
    %357 = vector.broadcast %cst_170 : f32 to vector<20x64xf32>
    %358 = arith.addf %357, %356 : vector<20x64xf32>
    %cst_171 = arith.constant 1.000000e+00 : f32
    %359 = vector.broadcast %cst_171 : f32 to vector<20x64xf32>
    %360 = arith.divf %359, %358 : vector<20x64xf32>
    %cst_172 = arith.constant 1.06140542 : f32
    %361 = vector.broadcast %cst_172 : f32 to vector<20x64xf32>
    %362 = arith.mulf %361, %360 : vector<20x64xf32>
    %cst_173 = arith.constant -1.45315206 : f32
    %363 = vector.broadcast %cst_173 : f32 to vector<20x64xf32>
    %364 = arith.addf %362, %363 : vector<20x64xf32>
    %365 = arith.mulf %364, %360 : vector<20x64xf32>
    %cst_174 = arith.constant 1.42141378 : f32
    %366 = vector.broadcast %cst_174 : f32 to vector<20x64xf32>
    %367 = arith.addf %365, %366 : vector<20x64xf32>
    %368 = arith.mulf %367, %360 : vector<20x64xf32>
    %cst_175 = arith.constant -0.284496725 : f32
    %369 = vector.broadcast %cst_175 : f32 to vector<20x64xf32>
    %370 = arith.addf %368, %369 : vector<20x64xf32>
    %371 = arith.mulf %370, %360 : vector<20x64xf32>
    %cst_176 = arith.constant 0.254829586 : f32
    %372 = vector.broadcast %cst_176 : f32 to vector<20x64xf32>
    %373 = arith.addf %371, %372 : vector<20x64xf32>
    %374 = arith.mulf %373, %360 : vector<20x64xf32>
    %cst_177 = arith.constant 0.000000e+00 : f32
    %375 = vector.broadcast %cst_177 : f32 to vector<20x64xf32>
    %376 = arith.subf %375, %354 : vector<20x64xf32>
    %377 = arith.mulf %376, %354 : vector<20x64xf32>
    %378 = math.exp %377 : vector<20x64xf32>
    %379 = arith.mulf %374, %378 : vector<20x64xf32>
    %cst_178 = arith.constant 1.000000e+00 : f32
    %380 = vector.broadcast %cst_178 : f32 to vector<20x64xf32>
    %381 = arith.subf %380, %379 : vector<20x64xf32>
    %382 = arith.mulf %353, %381 : vector<20x64xf32>
    %cst_179 = arith.constant 1.000000e+00 : f32
    %383 = vector.broadcast %cst_179 : f32 to vector<20x64xf32>
    %384 = arith.addf %383, %382 : vector<20x64xf32>
    %385 = arith.mulf %346, %384 : vector<20x64xf32>
    %c1_180 = arith.constant 1 : index
    %c0_181 = arith.constant 0 : index
    %c0_182 = arith.constant 0 : index
    %386 = vector.load %arg15[%c1_180, %c0_181, %c0_182] : memref<2x64x32xf32, #tpu.memory_space<vmem>>, vector<1x64x32xf32>
    %387 = vector.shape_cast %386 : vector<1x64x32xf32> to vector<64x32xf32>
    %cst_183 = arith.constant dense<0.000000e+00> : vector<20x32xf32>
    %388 = tpu.matmul %385, %387, %cst_183 {dimension_numbers = #tpu.dot_dimension_numbers<[1], [0], [0], [1], [0, 0, 1, 1], [], []>} : vector<20x64xf32>, vector<64x32xf32>, vector<20x32xf32> -> vector<20x32xf32>
    %c1_184 = arith.constant 1 : index
    %c0_185 = arith.constant 0 : index
    %c0_186 = arith.constant 0 : index
    %389 = vector.load %arg16[%c1_184, %c0_185, %c0_186] : memref<2x1x32xf32, #tpu.memory_space<vmem>>, vector<1x1x32xf32>
    %390 = vector.shape_cast %389 : vector<1x1x32xf32> to vector<1x32xf32>
    %391 = vector.broadcast %390 : vector<1x32xf32> to vector<20x32xf32>
    %392 = arith.addf %388, %391 : vector<20x32xf32>
    %393 = arith.addf %337, %392 : vector<20x32xf32>
    %c1_187 = arith.constant 1 : index
    %c0_188 = arith.constant 0 : index
    %c0_189 = arith.constant 0 : index
    %394 = vector.load %arg17[%c1_187, %c0_188, %c0_189] : memref<2x1x32xf32, #tpu.memory_space<vmem>>, vector<1x1x32xf32>
    %395 = vector.shape_cast %394 : vector<1x1x32xf32> to vector<1x32xf32>
    %c1_190 = arith.constant 1 : index
    %c0_191 = arith.constant 0 : index
    %c0_192 = arith.constant 0 : index
    %396 = vector.load %arg18[%c1_190, %c0_191, %c0_192] : memref<2x1x32xf32, #tpu.memory_space<vmem>>, vector<1x1x32xf32>
    %397 = vector.shape_cast %396 : vector<1x1x32xf32> to vector<1x32xf32>
    %cst_193 = arith.constant dense<0.000000e+00> : vector<20xf32>
    %398 = vector.multi_reduction <add>, %393, %cst_193 [1] : vector<20x32xf32> to vector<20xf32>
    %399 = vector.shape_cast %398 : vector<20xf32> to vector<20x1xf32>
    %cst_194 = arith.constant 3.200000e+01 : f32
    %400 = vector.broadcast %cst_194 : f32 to vector<20x1xf32>
    %401 = arith.divf %399, %400 : vector<20x1xf32>
    %402 = vector.broadcast %401 : vector<20x1xf32> to vector<20x32xf32>
    %403 = arith.subf %393, %402 : vector<20x32xf32>
    %404 = arith.mulf %403, %403 : vector<20x32xf32>
    %cst_195 = arith.constant dense<0.000000e+00> : vector<20xf32>
    %405 = vector.multi_reduction <add>, %404, %cst_195 [1] : vector<20x32xf32> to vector<20xf32>
    %406 = vector.shape_cast %405 : vector<20xf32> to vector<20x1xf32>
    %cst_196 = arith.constant 3.200000e+01 : f32
    %407 = vector.broadcast %cst_196 : f32 to vector<20x1xf32>
    %408 = arith.divf %406, %407 : vector<20x1xf32>
    %cst_197 = arith.constant 9.99999974E-6 : f32
    %409 = vector.broadcast %cst_197 : f32 to vector<20x1xf32>
    %410 = arith.addf %408, %409 : vector<20x1xf32>
    %411 = math.rsqrt %410 : vector<20x1xf32>
    %412 = vector.broadcast %411 : vector<20x1xf32> to vector<20x32xf32>
    %413 = arith.mulf %403, %412 : vector<20x32xf32>
    %414 = vector.broadcast %395 : vector<1x32xf32> to vector<20x32xf32>
    %415 = arith.mulf %413, %414 : vector<20x32xf32>
    %416 = vector.broadcast %397 : vector<1x32xf32> to vector<20x32xf32>
    %417 = arith.addf %415, %416 : vector<20x32xf32>
    %c0_198 = arith.constant 0 : index
    %c0_199 = arith.constant 0 : index
    %418 = vector.load %arg19[%c0_198, %c0_199] : memref<32x128xf32, #tpu.memory_space<vmem>>, vector<32x128xf32>
    %cst_200 = arith.constant dense<0.000000e+00> : vector<20x128xf32>
    %419 = tpu.matmul %417, %418, %cst_200 {dimension_numbers = #tpu.dot_dimension_numbers<[1], [0], [0], [1], [0, 0, 1, 1], [], []>} : vector<20x32xf32>, vector<32x128xf32>, vector<20x128xf32> -> vector<20x128xf32>
    %c0_201 = arith.constant 0 : index
    %c0_202 = arith.constant 0 : index
    %420 = vector.load %arg20[%c0_201, %c0_202] : memref<1x128xf32, #tpu.memory_space<vmem>>, vector<1x128xf32>
    %421 = vector.broadcast %420 : vector<1x128xf32> to vector<20x128xf32>
    %422 = arith.addf %419, %421 : vector<20x128xf32>
    %c0_203 = arith.constant 0 : index
    %c0_204 = arith.constant 0 : index
    %423 = vector.load %arg5[%c0_203, %c0_204] : memref<20x1xf32, #tpu.memory_space<vmem>>, vector<20x1xf32>
    %424 = vector.broadcast %423 : vector<20x1xf32> to vector<20x128xf32>
    %425 = arith.mulf %422, %424 : vector<20x128xf32>
    %c0_205 = arith.constant 0 : index
    %c0_206 = arith.constant 0 : index
    %426 = vector.load %arg6[%c0_205, %c0_206] : memref<20x1xf32, #tpu.memory_space<vmem>>, vector<20x1xf32>
    %427 = vector.broadcast %426 : vector<20x1xf32> to vector<20x128xf32>
    %428 = arith.addf %425, %427 : vector<20x128xf32>
    %c0_207 = arith.constant 0 : index
    %c0_208 = arith.constant 0 : index
    %429 = vector.load %arg21[%c0_207, %c0_208] : memref<128x128xf32, #tpu.memory_space<vmem>>, vector<128x128xf32>
    %cst_209 = arith.constant dense<0.000000e+00> : vector<20x128xf32>
    %430 = tpu.matmul %428, %429, %cst_209 {dimension_numbers = #tpu.dot_dimension_numbers<[1], [0], [0], [1], [0, 0, 1, 1], [], []>} : vector<20x128xf32>, vector<128x128xf32>, vector<20x128xf32> -> vector<20x128xf32>
    %c0_210 = arith.constant 0 : index
    %c0_211 = arith.constant 0 : index
    %431 = vector.load %arg22[%c0_210, %c0_211] : memref<1x128xf32, #tpu.memory_space<vmem>>, vector<1x128xf32>
    %432 = vector.broadcast %431 : vector<1x128xf32> to vector<20x128xf32>
    %433 = arith.addf %430, %432 : vector<20x128xf32>
    %c0_212 = arith.constant 0 : index
    %c0_213 = arith.constant 0 : index
    %434 = vector.load %arg23[%c0_212, %c0_213] : memref<20x128xf32, #tpu.memory_space<vmem>>, vector<20x128xf32>
    tpu.vector_store %arg23[%c0_212, %c0_213], %433 {strides = array<i32>} : memref<20x128xf32, #tpu.memory_space<vmem>>, vector<20x128xf32>,
    return
  }
  func.func @transform_0(%arg0: i32) -> (i32, i32) {
    %c0_i32 = arith.constant 0 : i32
    %c0_i32_0 = arith.constant 0 : i32
    %c0_i32_1 = arith.constant 0 : i32
    return %c0_i32, %c0_i32_0 : i32, i32
  }
  func.func @transform_1(%arg0: i32) -> (i32, i32) {
    %c0_i32 = arith.constant 0 : i32
    %c0_i32_0 = arith.constant 0 : i32
    %c0_i32_1 = arith.constant 0 : i32
    return %c0_i32, %c0_i32_0 : i32, i32
  }
  func.func @transform_2(%arg0: i32) -> (i32, i32) {
    %c0_i32 = arith.constant 0 : i32
    %c0_i32_0 = arith.constant 0 : i32
    %c0_i32_1 = arith.constant 0 : i32
    return %c0_i32, %c0_i32_0 : i32, i32
  }
  func.func @transform_3(%arg0: i32) -> (i32, i32) {
    %c0_i32 = arith.constant 0 : i32
    %c0_i32_0 = arith.constant 0 : i32
    %c0_i32_1 = arith.constant 0 : i32
    return %c0_i32, %c0_i32_0 : i32, i32
  }
  func.func @transform_4(%arg0: i32) -> (i32, i32) {
    %c0_i32 = arith.constant 0 : i32
    %c0_i32_0 = arith.constant 0 : i32
    %c0_i32_1 = arith.constant 0 : i32
    return %c0_i32, %c0_i32_0 : i32, i32
  }
  func.func @transform_5(%arg0: i32) -> (i32, i32) {
    %c0_i32 = arith.constant 0 : i32
    %c0_i32_0 = arith.constant 0 : i32
    %c0_i32_1 = arith.constant 0 : i32
    return %c0_i32, %c0_i32_0 : i32, i32
  }
  func.func @transform_6(%arg0: i32) -> (i32, i32, i32) {
    %c0_i32 = arith.constant 0 : i32
    %c0_i32_0 = arith.constant 0 : i32
    %c0_i32_1 = arith.constant 0 : i32
    %c0_i32_2 = arith.constant 0 : i32
    return %c0_i32, %c0_i32_0, %c0_i32_1 : i32, i32, i32
  }
  func.func @transform_7(%arg0: i32) -> (i32, i32, i32) {
    %c0_i32 = arith.constant 0 : i32
    %c0_i32_0 = arith.constant 0 : i32
    %c0_i32_1 = arith.constant 0 : i32
    %c0_i32_2 = arith.constant 0 : i32
    return %c0_i32, %c0_i32_0, %c0_i32_1 : i32, i32, i32
  }
  func.func @transform_8(%arg0: i32) -> (i32, i32, i32) {
    %c0_i32 = arith.constant 0 : i32
    %c0_i32_0 = arith.constant 0 : i32
    %c0_i32_1 = arith.constant 0 : i32
    %c0_i32_2 = arith.constant 0 : i32
    return %c0_i32, %c0_i32_0, %c0_i32_1 : i32, i32, i32
  }
  func.func @transform_9(%arg0: i32) -> (i32, i32, i32) {
    %c0_i32 = arith.constant 0 : i32
    %c0_i32_0 = arith.constant 0 : i32
    %c0_i32_1 = arith.constant 0 : i32
    %c0_i32_2 = arith.constant 0 : i32
    return %c0_i32, %c0_i32_0, %c0_i32_1 : i32, i32, i32
  }
  func.func @transform_10(%arg0: i32) -> (i32, i32, i32) {
    %c0_i32 = arith.constant 0 : i32
    %c0_i32_0 = arith.constant 0 : i32
    %c0_i32_1 = arith.constant 0 : i32
    %c0_i32_2 = arith.constant 0 : i32
    return %c0_i32, %c0_i32_0, %c0_i32_1 : i32, i32, i32
  }
  func.func @transform_11(%arg0: i32) -> (i32, i32, i32) {
    %c0_i32 = arith.constant 0 : i32
    %c0_i32_0 = arith.constant 0 : i32
    %c0_i32_1 = arith.constant 0 : i32
    %c0_i32_2 = arith.constant 0 : i32
    return %c0_i32, %c0_i32_0, %c0_i32_1 : i32, i32, i32
  }
  func.func @transform_12(%arg0: i32) -> (i32, i32, i32) {
    %c0_i32 = arith.constant 0 : i32
    %c0_i32_0 = arith.constant 0 : i32
    %c0_i32_1 = arith.constant 0 : i32
    %c0_i32_2 = arith.constant 0 : i32
    return %c0_i32, %c0_i32_0, %c0_i32_1 : i32, i32, i32
  }
  func.func @transform_13(%arg0: i32) -> (i32, i32, i32) {
    %c0_i32 = arith.constant 0 : i32
    %c0_i32_0 = arith.constant 0 : i32
    %c0_i32_1 = arith.constant 0 : i32
    %c0_i32_2 = arith.constant 0 : i32
    return %c0_i32, %c0_i32_0, %c0_i32_1 : i32, i32, i32
  }
  func.func @transform_14(%arg0: i32) -> (i32, i32, i32) {
    %c0_i32 = arith.constant 0 : i32
    %c0_i32_0 = arith.constant 0 : i32
    %c0_i32_1 = arith.constant 0 : i32
    %c0_i32_2 = arith.constant 0 : i32
    return %c0_i32, %c0_i32_0, %c0_i32_1 : i32, i32, i32
  }
  func.func @transform_15(%arg0: i32) -> (i32, i32, i32) {
    %c0_i32 = arith.constant 0 : i32
    %c0_i32_0 = arith.constant 0 : i32
    %c0_i32_1 = arith.constant 0 : i32
    %c0_i32_2 = arith.constant 0 : i32
    return %c0_i32, %c0_i32_0, %c0_i32_1 : i32, i32, i32
  }
  func.func @transform_16(%arg0: i32) -> (i32, i32, i32) {
    %c0_i32 = arith.constant 0 : i32
    %c0_i32_0 = arith.constant 0 : i32
    %c0_i32_1 = arith.constant 0 : i32
    %c0_i32_2 = arith.constant 0 : i32
    return %c0_i32, %c0_i32_0, %c0_i32_1 : i32, i32, i32
  }
  func.func @transform_17(%arg0: i32) -> (i32, i32, i32) {
    %c0_i32 = arith.constant 0 : i32
    %c0_i32_0 = arith.constant 0 : i32
    %c0_i32_1 = arith.constant 0 : i32
    %c0_i32_2 = arith.constant 0 : i32
    return %c0_i32, %c0_i32_0, %c0_i32_1 : i32, i32, i32
  }
  func.func @transform_18(%arg0: i32) -> (i32, i32) {
    %c0_i32 = arith.constant 0 : i32
    %c0_i32_0 = arith.constant 0 : i32
    %c0_i32_1 = arith.constant 0 : i32
    return %c0_i32, %c0_i32_0 : i32, i32
  }
  func.func @transform_19(%arg0: i32) -> (i32, i32) {
    %c0_i32 = arith.constant 0 : i32
    %c0_i32_0 = arith.constant 0 : i32
    %c0_i32_1 = arith.constant 0 : i32
    return %c0_i32, %c0_i32_0 : i32, i32
  }
  func.func @transform_20(%arg0: i32) -> (i32, i32) {
    %c0_i32 = arith.constant 0 : i32
    %c0_i32_0 = arith.constant 0 : i32
    %c0_i32_1 = arith.constant 0 : i32
    return %c0_i32, %c0_i32_0 : i32, i32
  }
  func.func @transform_21(%arg0: i32) -> (i32, i32) {
    %c0_i32 = arith.constant 0 : i32
    %c0_i32_0 = arith.constant 0 : i32
    %c0_i32_1 = arith.constant 0 : i32
    return %c0_i32, %c0_i32_0 : i32, i32
  }
  func.func @transform_22(%arg0: i32) -> (i32, i32) {
    %c0_i32 = arith.constant 0 : i32
    %c0_i32_0 = arith.constant 0 : i32
    %c0_i32_1 = arith.constant 0 : i32
    return %c0_i32, %c0_i32_0 : i32, i32
  }
}

</mosaic_0001>

<llo_original>
// kernel: pretraining_forward.1
$region0: #{pretraining_forward.1}
  #allocation0 [shape = 'u32[]', space=smem, size = 0x4, offset = 0x4, fixed_abs, tag = 'smem constant byte address 0x4 - core index']
  #allocation1 [shape = 'u32[144,128]{1,0:T(1,128)}', space=vmem, size = 0x12000, scoped, tag = 'internal scratch']
  %s0 = inlined_call_operand.vmem [shape: s32[20,1], index: 0, kind: input, shape index: {}]
  %s1 = inlined_call_operand.vmem [shape: f32[64,32], index: 1, kind: input, shape index: {}]
  %s2 = inlined_call_operand.vmem [shape: f32[20,32], index: 2, kind: input, shape index: {}]
  %s3 = inlined_call_operand.vmem [shape: f32[20,20], index: 3, kind: input, shape index: {}]
  %s4 = inlined_call_operand.vmem [shape: f32[20,1], index: 4, kind: input, shape index: {}]
  %s5 = inlined_call_operand.vmem [shape: f32[20,1], index: 5, kind: input, shape index: {}]
  %s6 = inlined_call_operand.vmem [shape: f32[2,32,96], index: 6, kind: input, shape index: {}]
  %s7 = inlined_call_operand.vmem [shape: f32[2,1,96], index: 7, kind: input, shape index: {}]
  %s8 = inlined_call_operand.vmem [shape: f32[8,8,32], index: 8, kind: input, shape index: {}]
  %s9 = inlined_call_operand.vmem [shape: f32[2,1,32], index: 9, kind: input, shape index: {}]
  %s10 = inlined_call_operand.vmem [shape: f32[2,1,32], index: 10, kind: input, shape index: {}]
  %s11 = inlined_call_operand.vmem [shape: f32[2,1,32], index: 11, kind: input, shape index: {}]
  %s12 = inlined_call_operand.vmem [shape: f32[2,32,64], index: 12, kind: input, shape index: {}]
  %s13 = inlined_call_operand.vmem [shape: f32[2,1,64], index: 13, kind: input, shape index: {}]
  %s14 = inlined_call_operand.vmem [shape: f32[2,64,32], index: 14, kind: input, shape index: {}]
  %s15 = inlined_call_operand.vmem [shape: f32[2,1,32], index: 15, kind: input, shape index: {}]
  %s16 = inlined_call_operand.vmem [shape: f32[2,1,32], index: 16, kind: input, shape index: {}]
  %s17 = inlined_call_operand.vmem [shape: f32[2,1,32], index: 17, kind: input, shape index: {}]
  %s18 = inlined_call_operand.vmem [shape: f32[32,128], index: 18, kind: input, shape index: {}]
  %s19 = inlined_call_operand.vmem [shape: f32[1,128], index: 19, kind: input, shape index: {}]
  %s20 = inlined_call_operand.vmem [shape: f32[128,128], index: 20, kind: input, shape index: {}]
  %s21 = inlined_call_operand.vmem [shape: f32[1,128], index: 21, kind: input, shape index: {}]
  %s22 = inlined_call_operand.hbm [shape: f32[20,128], index: 22, kind: output, shape index: {}]
  %s23 = sld [smem:[#allocation0]]
  $region98: #{pretraining_forward.1} parent=0
    _
  %s25 = ssub.s32 1, %s23
  %s26 = scalar_select 0, %s25, %s23
  $region1: #{pretraining_forward.1} parent=0
    #allocation2 [shape = 'u8[12288]{0}', space=vmem, size = 0x3000, scoped, tag = 'output window, operand 0, single buffered']
    #allocation3 [shape = 's32[1]{0}', space=sflag, size = 0x4, scoped, tag = 'scoped memory for pretraining_forward.1']
    %27 = vsyncpa [#allocation3], 0
    // Predicated region
    $region2: #{pretraining_forward.1} parent=1 // pred_check
      _
    $region3: #{pretraining_forward.1} parent=1 // pred_check_branch
      %29 = sbr.rel (0) target = $region5
    $region4: #{pretraining_forward.1} parent=1 // pred_region
      _
    $region5: #{pretraining_forward.1} parent=1 // pred_fallthru
      _
    // Predicated region
    $region6: #{pretraining_forward.1} parent=1 // pred_check
      _
    $region7: #{pretraining_forward.1} parent=1 // pred_check_branch
      %31 = sbr.rel (0) target = $region9
    $region8: #{pretraining_forward.1} parent=1 // pred_region
      _
    $region9: #{pretraining_forward.1} parent=1 // pred_fallthru
      _
    // Predicated region
    $region10: #{pretraining_forward.1} parent=1 // pred_check
      _
    $region11: #{pretraining_forward.1} parent=1 // pred_check_branch
      %33 = sbr.rel (0) target = $region13
    $region12: #{pretraining_forward.1} parent=1 // pred_region
      _
    $region13: #{pretraining_forward.1} parent=1 // pred_fallthru
      _
    // Predicated region
    $region14: #{pretraining_forward.1} parent=1 // pred_check
      _
    $region15: #{pretraining_forward.1} parent=1 // pred_check_branch
      %35 = sbr.rel (0) target = $region17
    $region16: #{pretraining_forward.1} parent=1 // pred_region
      _
    $region17: #{pretraining_forward.1} parent=1 // pred_fallthru
      _
    // Predicated region
    $region18: #{pretraining_forward.1} parent=1 // pred_check
      _
    $region19: #{pretraining_forward.1} parent=1 // pred_check_branch
      %37 = sbr.rel (0) target = $region21
    $region20: #{pretraining_forward.1} parent=1 // pred_region
      _
    $region21: #{pretraining_forward.1} parent=1 // pred_fallthru
      _
    // Predicated region
    $region22: #{pretraining_forward.1} parent=1 // pred_check
      _
    $region23: #{pretraining_forward.1} parent=1 // pred_check_branch
      %39 = sbr.rel (0) target = $region25
    $region24: #{pretraining_forward.1} parent=1 // pred_region
      _
    $region25: #{pretraining_forward.1} parent=1 // pred_fallthru
      _
    // Predicated region
    $region26: #{pretraining_forward.1} parent=1 // pred_check
      _
    $region27: #{pretraining_forward.1} parent=1 // pred_check_branch
      %41 = sbr.rel (0) target = $region29
    $region28: #{pretraining_forward.1} parent=1 // pred_region
      _
    $region29: #{pretraining_forward.1} parent=1 // pred_fallthru
      _
    // Predicated region
    $region30: #{pretraining_forward.1} parent=1 // pred_check
      _
    $region31: #{pretraining_forward.1} parent=1 // pred_check_branch
      %43 = sbr.rel (0) target = $region33
    $region32: #{pretraining_forward.1} parent=1 // pred_region
      _
    $region33: #{pretraining_forward.1} parent=1 // pred_fallthru
      _
    // Predicated region
    $region34: #{pretraining_forward.1} parent=1 // pred_check
      _
    $region35: #{pretraining_forward.1} parent=1 // pred_check_branch
      %45 = sbr.rel (0) target = $region37
    $region36: #{pretraining_forward.1} parent=1 // pred_region
      _
    $region37: #{pretraining_forward.1} parent=1 // pred_fallthru
      _
    // Predicated region
    $region38: #{pretraining_forward.1} parent=1 // pred_check
      _
    $region39: #{pretraining_forward.1} parent=1 // pred_check_branch
      %47 = sbr.rel (0) target = $region41
    $region40: #{pretraining_forward.1} parent=1 // pred_region
      _
    $region41: #{pretraining_forward.1} parent=1 // pred_fallthru
      _
    // Predicated region
    $region42: #{pretraining_forward.1} parent=1 // pred_check
      _
    $region43: #{pretraining_forward.1} parent=1 // pred_check_branch
      %49 = sbr.rel (0) target = $region45
    $region44: #{pretraining_forward.1} parent=1 // pred_region
      _
    $region45: #{pretraining_forward.1} parent=1 // pred_fallthru
      _
    // Predicated region
    $region46: #{pretraining_forward.1} parent=1 // pred_check
      _
    $region47: #{pretraining_forward.1} parent=1 // pred_check_branch
      %51 = sbr.rel (0) target = $region49
    $region48: #{pretraining_forward.1} parent=1 // pred_region
      _
    $region49: #{pretraining_forward.1} parent=1 // pred_fallthru
      _
    // Predicated region
    $region50: #{pretraining_forward.1} parent=1 // pred_check
      _
    $region51: #{pretraining_forward.1} parent=1 // pred_check_branch
      %53 = sbr.rel (0) target = $region53
    $region52: #{pretraining_forward.1} parent=1 // pred_region
      _
    $region53: #{pretraining_forward.1} parent=1 // pred_fallthru
      _
    // Predicated region
    $region54: #{pretraining_forward.1} parent=1 // pred_check
      _
    $region55: #{pretraining_forward.1} parent=1 // pred_check_branch
      %55 = sbr.rel (0) target = $region57
    $region56: #{pretraining_forward.1} parent=1 // pred_region
      _
    $region57: #{pretraining_forward.1} parent=1 // pred_fallthru
      _
    // Predicated region
    $region58: #{pretraining_forward.1} parent=1 // pred_check
      _
    $region59: #{pretraining_forward.1} parent=1 // pred_check_branch
      %57 = sbr.rel (0) target = $region61
    $region60: #{pretraining_forward.1} parent=1 // pred_region
      _
    $region61: #{pretraining_forward.1} parent=1 // pred_fallthru
      _
    // Predicated region
    $region62: #{pretraining_forward.1} parent=1 // pred_check
      _
    $region63: #{pretraining_forward.1} parent=1 // pred_check_branch
      %59 = sbr.rel (0) target = $region65
    $region64: #{pretraining_forward.1} parent=1 // pred_region
      _
    $region65: #{pretraining_forward.1} parent=1 // pred_fallthru
      _
    // Predicated region
    $region66: #{pretraining_forward.1} parent=1 // pred_check
      _
    $region67: #{pretraining_forward.1} parent=1 // pred_check_branch
      %61 = sbr.rel (0) target = $region69
    $region68: #{pretraining_forward.1} parent=1 // pred_region
      _
    $region69: #{pretraining_forward.1} parent=1 // pred_fallthru
      _
    // Predicated region
    $region70: #{pretraining_forward.1} parent=1 // pred_check
      _
    $region71: #{pretraining_forward.1} parent=1 // pred_check_branch
      %63 = sbr.rel (0) target = $region73
    $region72: #{pretraining_forward.1} parent=1 // pred_region
      _
    $region73: #{pretraining_forward.1} parent=1 // pred_fallthru
      _
    // Predicated region
    $region74: #{pretraining_forward.1} parent=1 // pred_check
      _
    $region75: #{pretraining_forward.1} parent=1 // pred_check_branch
      %65 = sbr.rel (0) target = $region77
    $region76: #{pretraining_forward.1} parent=1 // pred_region
      _
    $region77: #{pretraining_forward.1} parent=1 // pred_fallthru
      _
    // Predicated region
    $region78: #{pretraining_forward.1} parent=1 // pred_check
      _
    $region79: #{pretraining_forward.1} parent=1 // pred_check_branch
      %67 = sbr.rel (0) target = $region81
    $region80: #{pretraining_forward.1} parent=1 // pred_region
      _
    $region81: #{pretraining_forward.1} parent=1 // pred_fallthru
      _
    // Predicated region
    $region82: #{pretraining_forward.1} parent=1 // pred_check
      _
    $region83: #{pretraining_forward.1} parent=1 // pred_check_branch
      %69 = sbr.rel (0) target = $region85
    $region84: #{pretraining_forward.1} parent=1 // pred_region
      _
    $region85: #{pretraining_forward.1} parent=1 // pred_fallthru
      _
    // Predicated region
    $region86: #{pretraining_forward.1} parent=1 // pred_check
      _
    $region87: #{pretraining_forward.1} parent=1 // pred_check_branch
      %71 = sbr.rel (0) target = $region89
    $region88: #{pretraining_forward.1} parent=1 // pred_region
      _
    $region89: #{pretraining_forward.1} parent=1 // pred_fallthru
      _
    %v72 = vld [vmem:[%s0] sm:$0xff]
    %v73 = vld [vmem:[%s0 + $0x8] sm:$0xff]
    %v74 = vld [vmem:[%s0 + $0x10] sm:$0xf]
    %v75 = vlaneseq
    %v76 = vand.u32 %v75, 127
    %77 = vset.pattern.permute.xlu0 0
    %78 = vperm.xlu0 %77, %v72
    %v79 = vpop.permute.xlu0 %78
    %80 = vset.pattern.permute.xlu0 0
    %81 = vperm.xlu0 %80, %v73
    %v82 = vpop.permute.xlu0 %81
    %83 = vset.pattern.permute.xlu0 0
    %84 = vperm.xlu0 %83, %v74
    %v85 = vpop.permute.xlu0 %84
    %vm86 = vcmp.eq.s32.totalorder %v79, %v76
    %vm87 = vcmp.eq.s32.totalorder %v82, %v76
    %vm88 = vcmp.eq.s32.totalorder %v85, %v76
    %v89 = vsel %vm86, 1.0, 0.0
    %v90 = vsel %vm87, 1.0, 0.0
    %v91 = vsel %vm88, 1.0, 0.0
    %v92 = vld [vmem:[%s1] sm:$0xff]
    %v93 = vld [vmem:[%s1 + $0x8] sm:$0xff]
    %v94 = vld [vmem:[%s1 + $0x10] sm:$0xff]
    %v95 = vld [vmem:[%s1 + $0x18] sm:$0xff]
    %v96 = vld [vmem:[%s1 + $0x20] sm:$0xff]
    %v97 = vld [vmem:[%s1 + $0x28] sm:$0xff]
    %v98 = vld [vmem:[%s1 + $0x30] sm:$0xff]
    %v99 = vld [vmem:[%s1 + $0x38] sm:$0xff]
    %v100 = vld [vmem:[%s2] sm:$0xff]
    %v101 = vld [vmem:[%s2 + $0x8] sm:$0xff]
    %v102 = vld [vmem:[%s2 + $0x10] sm:$0xf]
    %vm103 = vcmask 523264
    %v105 = vsel %vm103, %v89, 0
    %v108 = vsel %vm103, %v90, 0
    %v111 = vsel %vm103, %v91, 0
    %113 = vmatprep.subr.mxu0 0.0
    %114 = vmatpush1.msra.mxu0 0.0
    %115 = vmatprep.subr.mxu0 0.0
    %116 = vmatpush1.msra.mxu0 0.0
    %117 = vmatprep.subr.mxu0 0.0
    %118 = vmatpush1.msra.mxu0 0.0
    %119 = vmatprep.subr.mxu0 0.0
    %120 = vmatpush1.msra.mxu0 0.0
    %121 = vmatprep.subr.mxu0 0.0
    %122 = vmatpush1.msra.mxu0 0.0
    %123 = vmatprep.subr.mxu0 0.0
    %124 = vmatpush1.msra.mxu0 0.0
    %125 = vmatprep.subr.mxu0 0.0
    %126 = vmatpush1.msra.mxu0 0.0
    %127 = vmatprep.subr.mxu0 0.0
    %128 = vmatpush1.msra.mxu0 0.0
    %129 = vmatprep.subr.mxu0 0.0
    %130 = vmatpush1.msra.mxu0 %v99
    %131 = vmatprep.subr.mxu0 0.0
    %132 = vmatpush1.msra.mxu0 %v98
    %133 = vmatprep.subr.mxu0 0.0
    %134 = vmatpush1.msra.mxu0 %v97
    %135 = vmatprep.subr.mxu0 0.0
    %136 = vmatpush1.msra.mxu0 %v96
    %137 = vmatprep.subr.mxu0 0.0
    %138 = vmatpush1.msra.mxu0 %v95
    %139 = vmatprep.subr.mxu0 0.0
    %140 = vmatpush1.msra.mxu0 %v94
    %141 = vmatprep.subr.mxu0 0.0
    %142 = vmatpush1.msra.mxu0 %v93
    %143 = vmatprep.subr.mxu0 0.0
    %144 = vmatpush1.msra.mxu0 %v92
    %145 = vmatprep.subr.mxu0 0.0
    %146 = vmatpush2.msra.mxu0 0.0
    %147 = vmatprep.subr.mxu0 0.0
    %148 = vmatpush2.msra.mxu0 0.0
    %149 = vmatprep.subr.mxu0 0.0
    %150 = vmatpush2.msra.mxu0 0.0
    %151 = vmatprep.subr.mxu0 0.0
    %152 = vmatpush2.msra.mxu0 0.0
    %153 = vmatprep.subr.mxu0 0.0
    %154 = vmatpush2.msra.mxu0 0.0
    %155 = vmatprep.subr.mxu0 0.0
    %156 = vmatpush2.msra.mxu0 0.0
    %157 = vmatprep.subr.mxu0 0.0
    %158 = vmatpush2.msra.mxu0 0.0
    %159 = vmatprep.subr.mxu0 0.0
    %160 = vmatpush2.msra.mxu0 0.0
    %161 = vmatprep.subr.mxu0 0.0
    %162 = vmatpush2.msra.mxu0 0.0
    %163 = vmatprep.subr.mxu0 0.0
    %164 = vmatpush2.msra.mxu0 0.0
    %165 = vmatprep.subr.mxu0 0.0
    %166 = vmatpush2.msra.mxu0 0.0
    %167 = vmatprep.subr.mxu0 0.0
    %168 = vmatpush2.msra.mxu0 0.0
    %169 = vmatprep.subr.mxu0 0.0
    %170 = vmatpush2.msra.mxu0 0.0
    %171 = vmatprep.subr.mxu0 0.0
    %172 = vmatpush2.msra.mxu0 0.0
    %173 = vmatprep.subr.mxu0 0.0
    %174 = vmatpush2.msra.mxu0 0.0
    %175 = vmatprep.subr.mxu0 0.0
    %176 = vmatpush2.msra.mxu0 0.0
    %177 = vmatprep.mubr.f32.mxu0 0.0
    %178 = vmatmul.mubr.f32.gmra.mxu0 %v105
    %v179 = vpop.f32.mrf.mxu0
    %v180 = vadd.f32 %v100, %v179
    %v181 = vpop.f32.mrf.mxu0
    %182 = vmatprep.mubr.f32.mxu0 0.0
    %183 = vmatmul.mubr.f32.gmra.mxu0 %v108
    %v184 = vpop.f32.mrf.mxu0
    %v185 = vadd.f32 %v101, %v184
    %v186 = vpop.f32.mrf.mxu0
    %187 = vmatprep.mubr.f32.mxu0 0.0
    %188 = vmatmul.mubr.f32.gmra.mxu0 %v111
    %v189 = vpop.f32.mrf.mxu0
    %v190 = vadd.f32 %v102, %v189
    %v191 = vpop.f32.mrf.mxu0
    %192 = vdwg.mxu0
    %v193 = vld [vmem:[%s3] sm:$0xff]
    %v194 = vld [vmem:[%s3 + $0x8] sm:$0xff]
    %v195 = vld [vmem:[%s3 + $0x10] sm:$0xf]
    %v196 = vld [vmem:[%s6] sm:$0xff]
    %v197 = vld [vmem:[%s6 + $0x8] sm:$0xff]
    %v198 = vld [vmem:[%s6 + $0x10] sm:$0xff]
    %v199 = vld [vmem:[%s6 + $0x18] sm:$0xff]
    %v200 = vld [vmem:[%s7] sm:$0x1]
    %v202 = vlaneseq
    %v203 = vshrl.u32 %v202, 7
    %v204 = vsub.s32 0, %v203
    %v205 = vrot.slane %v200, %v204
    %vm207 = vcmask 261120
    %v209 = vsel %vm207, %v180, 0
    %v212 = vsel %vm207, %v185, 0
    %v215 = vsel %vm207, %v190, 0
    %217 = vmatprep.subr.mxu0 0.0
    %218 = vmatpush1.msra.mxu0 0.0
    %219 = vmatprep.subr.mxu0 0.0
    %220 = vmatpush1.msra.mxu0 0.0
    %221 = vmatprep.subr.mxu0 0.0
    %222 = vmatpush1.msra.mxu0 0.0
    %223 = vmatprep.subr.mxu0 0.0
    %224 = vmatpush1.msra.mxu0 0.0
    %225 = vmatprep.subr.mxu0 0.0
    %226 = vmatpush1.msra.mxu0 0.0
    %227 = vmatprep.subr.mxu0 0.0
    %228 = vmatpush1.msra.mxu0 0.0
    %229 = vmatprep.subr.mxu0 0.0
    %230 = vmatpush1.msra.mxu0 0.0
    %231 = vmatprep.subr.mxu0 0.0
    %232 = vmatpush1.msra.mxu0 0.0
    %233 = vmatprep.subr.mxu0 0.0
    %234 = vmatpush1.msra.mxu0 0.0
    %235 = vmatprep.subr.mxu0 0.0
    %236 = vmatpush1.msra.mxu0 0.0
    %237 = vmatprep.subr.mxu0 0.0
    %238 = vmatpush1.msra.mxu0 0.0
    %239 = vmatprep.subr.mxu0 0.0
    %240 = vmatpush1.msra.mxu0 0.0
    %241 = vmatprep.subr.mxu0 0.0
    %242 = vmatpush1.msra.mxu0 %v199
    %243 = vmatprep.subr.mxu0 0.0
    %244 = vmatpush1.msra.mxu0 %v198
    %245 = vmatprep.subr.mxu0 0.0
    %246 = vmatpush1.msra.mxu0 %v197
    %247 = vmatprep.subr.mxu0 0.0
    %248 = vmatpush1.msra.mxu0 %v196
    %249 = vmatprep.subr.mxu0 0.0
    %250 = vmatpush2.msra.mxu0 0.0
    %251 = vmatprep.subr.mxu0 0.0
    %252 = vmatpush2.msra.mxu0 0.0
    %253 = vmatprep.subr.mxu0 0.0
    %254 = vmatpush2.msra.mxu0 0.0
    %255 = vmatprep.subr.mxu0 0.0
    %256 = vmatpush2.msra.mxu0 0.0
    %257 = vmatprep.subr.mxu0 0.0
    %258 = vmatpush2.msra.mxu0 0.0
    %259 = vmatprep.subr.mxu0 0.0
    %260 = vmatpush2.msra.mxu0 0.0
    %261 = vmatprep.subr.mxu0 0.0
    %262 = vmatpush2.msra.mxu0 0.0
    %263 = vmatprep.subr.mxu0 0.0
    %264 = vmatpush2.msra.mxu0 0.0
    %265 = vmatprep.subr.mxu0 0.0
    %266 = vmatpush2.msra.mxu0 0.0
    %267 = vmatprep.subr.mxu0 0.0
    %268 = vmatpush2.msra.mxu0 0.0
    %269 = vmatprep.subr.mxu0 0.0
    %270 = vmatpush2.msra.mxu0 0.0
    %271 = vmatprep.subr.mxu0 0.0
    %272 = vmatpush2.msra.mxu0 0.0
    %273 = vmatprep.subr.mxu0 0.0
    %274 = vmatpush2.msra.mxu0 0.0
    %275 = vmatprep.subr.mxu0 0.0
    %276 = vmatpush2.msra.mxu0 0.0
    %277 = vmatprep.subr.mxu0 0.0
    %278 = vmatpush2.msra.mxu0 0.0
    %279 = vmatprep.subr.mxu0 0.0
    %280 = vmatpush2.msra.mxu0 0.0
    %281 = vmatprep.mubr.f32.mxu0 0.0
    %282 = vmatmul.mubr.f32.gmra.mxu0 %v209
    %v283 = vpop.f32.mrf.mxu0
    %v284 = vadd.f32 %v205, %v283
    %v285 = vpop.f32.mrf.mxu0
    %286 = vmatprep.mubr.f32.mxu0 0.0
    %287 = vmatmul.mubr.f32.gmra.mxu0 %v212
    %v288 = vpop.f32.mrf.mxu0
    %v289 = vadd.f32 %v205, %v288
    %v290 = vpop.f32.mrf.mxu0
    %291 = vmatprep.mubr.f32.mxu0 0.0
    %292 = vmatmul.mubr.f32.gmra.mxu0 %v215
    %v293 = vpop.f32.mrf.mxu0
    %v294 = vadd.f32 %v205, %v293
    %v295 = vpop.f32.mrf.mxu0
    %296 = vdwg.mxu0
    %300 = vrot.lane.b32.xlu0 %v284, 96
    %v301 = vpop.permute.xlu0 %300
    %302 = vrot.lane.b32.xlu0 %v289, 96
    %v303 = vpop.permute.xlu0 %302
    %304 = vrot.lane.b32.xlu0 %v294, 96
    %v305 = vpop.permute.xlu0 %304
    %vm306 = vcmask 64512
    %v307 = vsel %vm306, %v284, 0
    %v309 = vsel %vm306, %v289, 0
    %v311 = vsel %vm306, %v294, 0
    %v313 = vsel %vm306, %v301, 0
    %v315 = vsel %vm306, %v303, 0
    %v317 = vsel %vm306, %v305, 0
    %319 = vmatprep.subr.mxu0 0.0
    %320 = vmatpush1.xpose.msra.mxu0 0.0
    %321 = vmatprep.subr.mxu0 0.0
    %322 = vmatpush1.xpose.msra.mxu0 0.0
    %323 = vmatprep.subr.mxu0 0.0
    %324 = vmatpush1.xpose.msra.mxu0 0.0
    %325 = vmatprep.subr.mxu0 0.0
    %326 = vmatpush1.xpose.msra.mxu0 0.0
    %327 = vmatprep.subr.mxu0 0.0
    %328 = vmatpush1.xpose.msra.mxu0 0.0
    %329 = vmatprep.subr.mxu0 0.0
    %330 = vmatpush1.xpose.msra.mxu0 0.0
    %331 = vmatprep.subr.mxu0 0.0
    %332 = vmatpush1.xpose.msra.mxu0 0.0
    %333 = vmatprep.subr.mxu0 0.0
    %334 = vmatpush1.xpose.msra.mxu0 0.0
    %335 = vmatprep.subr.mxu0 0.0
    %336 = vmatpush1.xpose.msra.mxu0 0.0
    %337 = vmatprep.subr.mxu0 0.0
    %338 = vmatpush1.xpose.msra.mxu0 0.0
    %339 = vmatprep.subr.mxu0 0.0
    %340 = vmatpush1.xpose.msra.mxu0 0.0
    %341 = vmatprep.subr.mxu0 0.0
    %342 = vmatpush1.xpose.msra.mxu0 0.0
    %343 = vmatprep.subr.mxu0 0.0
    %344 = vmatpush1.xpose.msra.mxu0 0.0
    %345 = vmatprep.subr.mxu0 0.0
    %346 = vmatpush1.xpose.msra.mxu0 %v317
    %347 = vmatprep.subr.mxu0 0.0
    %348 = vmatpush1.xpose.msra.mxu0 %v315
    %349 = vmatprep.subr.mxu0 0.0
    %350 = vmatpush1.xpose.msra.mxu0 %v313
    %351 = vmatprep.subr.mxu0 0.0
    %352 = vmatpush2.xpose.msra.mxu0 0.0
    %353 = vmatprep.subr.mxu0 0.0
    %354 = vmatpush2.xpose.msra.mxu0 0.0
    %355 = vmatprep.subr.mxu0 0.0
    %356 = vmatpush2.xpose.msra.mxu0 0.0
    %357 = vmatprep.subr.mxu0 0.0
    %358 = vmatpush2.xpose.msra.mxu0 0.0
    %359 = vmatprep.subr.mxu0 0.0
    %360 = vmatpush2.xpose.msra.mxu0 0.0
    %361 = vmatprep.subr.mxu0 0.0
    %362 = vmatpush2.xpose.msra.mxu0 0.0
    %363 = vmatprep.subr.mxu0 0.0
    %364 = vmatpush2.xpose.msra.mxu0 0.0
    %365 = vmatprep.subr.mxu0 0.0
    %366 = vmatpush2.xpose.msra.mxu0 0.0
    %367 = vmatprep.subr.mxu0 0.0
    %368 = vmatpush2.xpose.msra.mxu0 0.0
    %369 = vmatprep.subr.mxu0 0.0
    %370 = vmatpush2.xpose.msra.mxu0 0.0
    %371 = vmatprep.subr.mxu0 0.0
    %372 = vmatpush2.xpose.msra.mxu0 0.0
    %373 = vmatprep.subr.mxu0 0.0
    %374 = vmatpush2.xpose.msra.mxu0 0.0
    %375 = vmatprep.subr.mxu0 0.0
    %376 = vmatpush2.xpose.msra.mxu0 0.0
    %377 = vmatprep.subr.mxu0 0.0
    %378 = vmatpush2.xpose.msra.mxu0 0.0
    %379 = vmatprep.subr.mxu0 0.0
    %380 = vmatpush2.xpose.msra.mxu0 0.0
    %381 = vmatprep.subr.mxu0 0.0
    %382 = vmatpush2.xpose.msra.mxu0 0.0
    %383 = vmatprep.mubr.f32.mxu0 0.0
    %384 = vmatmul.mubr.f32.gmra.mxu0 %v307
    %v385 = vpop.f32.mrf.mxu0
    %v386 = vadd.f32 0.0, %v385
    %v387 = vpop.f32.mrf.mxu0
    %388 = vmatprep.mubr.f32.mxu0 0.0
    %389 = vmatmul.mubr.f32.gmra.mxu0 %v309
    %v390 = vpop.f32.mrf.mxu0
    %v391 = vadd.f32 0.0, %v390
    %v392 = vpop.f32.mrf.mxu0
    %393 = vmatprep.mubr.f32.mxu0 0.0
    %394 = vmatmul.mubr.f32.gmra.mxu0 %v311
    %v395 = vpop.f32.mrf.mxu0
    %v396 = vadd.f32 0.0, %v395
    %v397 = vpop.f32.mrf.mxu0
    %398 = vdwg.mxu0
    %v399 = vmul.f32 %v386, 0.35355338
    %v400 = vmul.f32 %v391, 0.35355338
    %v401 = vmul.f32 %v396, 0.35355338
    %v402 = vadd.f32 %v399, %v193
    %v403 = vadd.f32 %v400, %v194
    %v404 = vadd.f32 %v401, %v195
    %vm405 = vcmask 162816
    %v406 = vsel %vm405, %v402, -inf
    %407 = vmax.xlane.f32.xlu0 %v406
    %v408 = vpop.xlane.xlu0 %407
    %v409 = vsel %vm405, %v403, -inf
    %410 = vmax.xlane.f32.xlu0 %v409
    %v411 = vpop.xlane.xlu0 %410
    %vm412 = vcmask 158720
    %v413 = vsel %vm412, %v404, -inf
    %414 = vmax.xlane.f32.xlu0 %v413
    %v415 = vpop.xlane.xlu0 %414
    %v416 = vsub.f32 %v402, %v408
    %v417 = vsub.f32 %v403, %v411
    %v418 = vsub.f32 %v404, %v415
    %v419 = vmul.f32 %v416, 1.442695
    %v420 = vpow.pop %v419
    %v421 = vmul.f32 %v417, 1.442695
    %v422 = vpow.pop %v421
    %v423 = vmul.f32 %v418, 1.442695
    %v424 = vpow.pop %v423
    %v425 = vsel %vm405, %v420, 0.0
    %426 = vadd.xlane.f32.xlu0 %v425
    %v427 = vpop.xlane.xlu0 %426
    %v428 = vsel %vm405, %v422, 0.0
    %429 = vadd.xlane.f32.xlu0 %v428
    %v430 = vpop.xlane.xlu0 %429
    %v431 = vsel %vm412, %v424, 0.0
    %432 = vadd.xlane.f32.xlu0 %v431
    %v433 = vpop.xlane.xlu0 %432
    %v434 = vrcp.pop %v427
    %v435 = vrcp.pop %v430
    %v436 = vrcp.pop %v433
    %v437 = vmul.f32 %v420, %v434
    %v438 = vmul.f32 %v422, %v435
    %v439 = vmul.f32 %v424, %v436
    %440 = vrot.lane.b32.xlu0 %v284, 64
    %v441 = vpop.permute.xlu0 %440
    %442 = vrot.lane.b32.xlu0 %v289, 64
    %v443 = vpop.permute.xlu0 %442
    %444 = vrot.lane.b32.xlu0 %v294, 64
    %v445 = vpop.permute.xlu0 %444
    %v449 = vsel %vm405, %v437, 0
    %v452 = vsel %vm405, %v438, 0
    %v455 = vsel %vm405, %v439, 0
    %vm457 = vcmask 1043456
    %v458 = vsel %vm457, %v445, 0
    %460 = vmatprep.subr.mxu0 0.0
    %461 = vmatpush1.msra.mxu0 0.0
    %462 = vmatprep.subr.mxu0 0.0
    %463 = vmatpush1.msra.mxu0 0.0
    %464 = vmatprep.subr.mxu0 0.0
    %465 = vmatpush1.msra.mxu0 0.0
    %466 = vmatprep.subr.mxu0 0.0
    %467 = vmatpush1.msra.mxu0 0.0
    %468 = vmatprep.subr.mxu0 0.0
    %469 = vmatpush1.msra.mxu0 0.0
    %470 = vmatprep.subr.mxu0 0.0
    %471 = vmatpush1.msra.mxu0 0.0
    %472 = vmatprep.subr.mxu0 0.0
    %473 = vmatpush1.msra.mxu0 0.0
    %474 = vmatprep.subr.mxu0 0.0
    %475 = vmatpush1.msra.mxu0 0.0
    %476 = vmatprep.subr.mxu0 0.0
    %477 = vmatpush1.msra.mxu0 0.0
    %478 = vmatprep.subr.mxu0 0.0
    %479 = vmatpush1.msra.mxu0 0.0
    %480 = vmatprep.subr.mxu0 0.0
    %481 = vmatpush1.msra.mxu0 0.0
    %482 = vmatprep.subr.mxu0 0.0
    %483 = vmatpush1.msra.mxu0 0.0
    %484 = vmatprep.subr.mxu0 0.0
    %485 = vmatpush1.msra.mxu0 0.0
    %486 = vmatprep.subr.mxu0 0.0
    %487 = vmatpush1.msra.mxu0 %v458
    %488 = vmatprep.subr.mxu0 0.0
    %489 = vmatpush1.msra.mxu0 %v443
    %490 = vmatprep.subr.mxu0 0.0
    %491 = vmatpush1.msra.mxu0 %v441
    %492 = vmatprep.subr.mxu0 0.0
    %493 = vmatpush2.msra.mxu0 0.0
    %494 = vmatprep.subr.mxu0 0.0
    %495 = vmatpush2.msra.mxu0 0.0
    %496 = vmatprep.subr.mxu0 0.0
    %497 = vmatpush2.msra.mxu0 0.0
    %498 = vmatprep.subr.mxu0 0.0
    %499 = vmatpush2.msra.mxu0 0.0
    %500 = vmatprep.subr.mxu0 0.0
    %501 = vmatpush2.msra.mxu0 0.0
    %502 = vmatprep.subr.mxu0 0.0
    %503 = vmatpush2.msra.mxu0 0.0
    %504 = vmatprep.subr.mxu0 0.0
    %505 = vmatpush2.msra.mxu0 0.0
    %506 = vmatprep.subr.mxu0 0.0
    %507 = vmatpush2.msra.mxu0 0.0
    %508 = vmatprep.subr.mxu0 0.0
    %509 = vmatpush2.msra.mxu0 0.0
    %510 = vmatprep.subr.mxu0 0.0
    %511 = vmatpush2.msra.mxu0 0.0
    %512 = vmatprep.subr.mxu0 0.0
    %513 = vmatpush2.msra.mxu0 0.0
    %514 = vmatprep.subr.mxu0 0.0
    %515 = vmatpush2.msra.mxu0 0.0
    %516 = vmatprep.subr.mxu0 0.0
    %517 = vmatpush2.msra.mxu0 0.0
    %518 = vmatprep.subr.mxu0 0.0
    %519 = vmatpush2.msra.mxu0 0.0
    %520 = vmatprep.subr.mxu0 0.0
    %521 = vmatpush2.msra.mxu0 0.0
    %522 = vmatprep.subr.mxu0 0.0
    %523 = vmatpush2.msra.mxu0 0.0
    %524 = vmatprep.mubr.f32.mxu0 0.0
    %525 = vmatmul.mubr.f32.gmra.mxu0 %v449
    %v526 = vpop.f32.mrf.mxu0
    %v527 = vadd.f32 0.0, %v526
    %v528 = vpop.f32.mrf.mxu0
    %529 = vmatprep.mubr.f32.mxu0 0.0
    %530 = vmatmul.mubr.f32.gmra.mxu0 %v452
    %v531 = vpop.f32.mrf.mxu0
    %v532 = vadd.f32 0.0, %v531
    %v533 = vpop.f32.mrf.mxu0
    %534 = vmatprep.mubr.f32.mxu0 0.0
    %535 = vmatmul.mubr.f32.gmra.mxu0 %v455
    %v536 = vpop.f32.mrf.mxu0
    %v537 = vadd.f32 0.0, %v536
    %v538 = vpop.f32.mrf.mxu0
    %539 = vdwg.mxu0
    %v540 = vld [vmem:[%s8] sm:$0xff]
    %541 = vrot.lane.b32.xlu0 %v284, 120
    %v542 = vpop.permute.xlu0 %541
    %543 = vrot.lane.b32.xlu0 %v289, 120
    %v544 = vpop.permute.xlu0 %543
    %545 = vrot.lane.b32.xlu0 %v294, 120
    %v546 = vpop.permute.xlu0 %545
    %547 = vrot.lane.b32.xlu0 %v284, 88
    %v548 = vpop.permute.xlu0 %547
    %549 = vrot.lane.b32.xlu0 %v289, 88
    %v550 = vpop.permute.xlu0 %549
    %551 = vrot.lane.b32.xlu0 %v294, 88
    %v552 = vpop.permute.xlu0 %551
    %v553 = vsel %vm306, %v542, 0
    %v555 = vsel %vm306, %v544, 0
    %v557 = vsel %vm306, %v546, 0
    %v559 = vsel %vm306, %v548, 0
    %v561 = vsel %vm306, %v550, 0
    %v563 = vsel %vm306, %v552, 0
    %565 = vmatprep.subr.mxu0 0.0
    %566 = vmatpush1.xpose.msra.mxu0 0.0
    %567 = vmatprep.subr.mxu0 0.0
    %568 = vmatpush1.xpose.msra.mxu0 0.0
    %569 = vmatprep.subr.mxu0 0.0
    %570 = vmatpush1.xpose.msra.mxu0 0.0
    %571 = vmatprep.subr.mxu0 0.0
    %572 = vmatpush1.xpose.msra.mxu0 0.0
    %573 = vmatprep.subr.mxu0 0.0
    %574 = vmatpush1.xpose.msra.mxu0 0.0
    %575 = vmatprep.subr.mxu0 0.0
    %576 = vmatpush1.xpose.msra.mxu0 0.0
    %577 = vmatprep.subr.mxu0 0.0
    %578 = vmatpush1.xpose.msra.mxu0 0.0
    %579 = vmatprep.subr.mxu0 0.0
    %580 = vmatpush1.xpose.msra.mxu0 0.0
    %581 = vmatprep.subr.mxu0 0.0
    %582 = vmatpush1.xpose.msra.mxu0 0.0
    %583 = vmatprep.subr.mxu0 0.0
    %584 = vmatpush1.xpose.msra.mxu0 0.0
    %585 = vmatprep.subr.mxu0 0.0
    %586 = vmatpush1.xpose.msra.mxu0 0.0
    %587 = vmatprep.subr.mxu0 0.0
    %588 = vmatpush1.xpose.msra.mxu0 0.0
    %589 = vmatprep.subr.mxu0 0.0
    %590 = vmatpush1.xpose.msra.mxu0 0.0
    %591 = vmatprep.subr.mxu0 0.0
    %592 = vmatpush1.xpose.msra.mxu0 %v563
    %593 = vmatprep.subr.mxu0 0.0
    %594 = vmatpush1.xpose.msra.mxu0 %v561
    %595 = vmatprep.subr.mxu0 0.0
    %596 = vmatpush1.xpose.msra.mxu0 %v559
    %597 = vmatprep.subr.mxu0 0.0
    %598 = vmatpush2.xpose.msra.mxu0 0.0
    %599 = vmatprep.subr.mxu0 0.0
    %600 = vmatpush2.xpose.msra.mxu0 0.0
    %601 = vmatprep.subr.mxu0 0.0
    %602 = vmatpush2.xpose.msra.mxu0 0.0
    %603 = vmatprep.subr.mxu0 0.0
    %604 = vmatpush2.xpose.msra.mxu0 0.0
    %605 = vmatprep.subr.mxu0 0.0
    %606 = vmatpush2.xpose.msra.mxu0 0.0
    %607 = vmatprep.subr.mxu0 0.0
    %608 = vmatpush2.xpose.msra.mxu0 0.0
    %609 = vmatprep.subr.mxu0 0.0
    %610 = vmatpush2.xpose.msra.mxu0 0.0
    %611 = vmatprep.subr.mxu0 0.0
    %612 = vmatpush2.xpose.msra.mxu0 0.0
    %613 = vmatprep.subr.mxu0 0.0
    %614 = vmatpush2.xpose.msra.mxu0 0.0
    %615 = vmatprep.subr.mxu0 0.0
    %616 = vmatpush2.xpose.msra.mxu0 0.0
    %617 = vmatprep.subr.mxu0 0.0
    %618 = vmatpush2.xpose.msra.mxu0 0.0
    %619 = vmatprep.subr.mxu0 0.0
    %620 = vmatpush2.xpose.msra.mxu0 0.0
    %621 = vmatprep.subr.mxu0 0.0
    %622 = vmatpush2.xpose.msra.mxu0 0.0
    %623 = vmatprep.subr.mxu0 0.0
    %624 = vmatpush2.xpose.msra.mxu0 0.0
    %625 = vmatprep.subr.mxu0 0.0
    %626 = vmatpush2.xpose.msra.mxu0 0.0
    %627 = vmatprep.subr.mxu0 0.0
    %628 = vmatpush2.xpose.msra.mxu0 0.0
    %629 = vmatprep.mubr.f32.mxu0 0.0
    %630 = vmatmul.mubr.f32.gmra.mxu0 %v553
    %v631 = vpop.f32.mrf.mxu0
    %v632 = vadd.f32 0.0, %v631
    %v633 = vpop.f32.mrf.mxu0
    %634 = vmatprep.mubr.f32.mxu0 0.0
    %635 = vmatmul.mubr.f32.gmra.mxu0 %v555
    %v636 = vpop.f32.mrf.mxu0
    %v637 = vadd.f32 0.0, %v636
    %v638 = vpop.f32.mrf.mxu0
    %639 = vmatprep.mubr.f32.mxu0 0.0
    %640 = vmatmul.mubr.f32.gmra.mxu0 %v557
    %v641 = vpop.f32.mrf.mxu0
    %v642 = vadd.f32 0.0, %v641
    %v643 = vpop.f32.mrf.mxu0
    %644 = vdwg.mxu0
    %v645 = vmul.f32 %v632, 0.35355338
    %v646 = vmul.f32 %v637, 0.35355338
    %v647 = vmul.f32 %v642, 0.35355338
    %v648 = vadd.f32 %v645, %v193
    %v649 = vadd.f32 %v646, %v194
    %v650 = vadd.f32 %v647, %v195
    %v651 = vsel %vm405, %v648, -inf
    %652 = vmax.xlane.f32.xlu0 %v651
    %v653 = vpop.xlane.xlu0 %652
    %v654 = vsel %vm405, %v649, -inf
    %655 = vmax.xlane.f32.xlu0 %v654
    %v656 = vpop.xlane.xlu0 %655
    %v657 = vsel %vm412, %v650, -inf
    %658 = vmax.xlane.f32.xlu0 %v657
    %v659 = vpop.xlane.xlu0 %658
    %v660 = vsub.f32 %v648, %v653
    %v661 = vsub.f32 %v649, %v656
    %v662 = vsub.f32 %v650, %v659
    %v663 = vmul.f32 %v660, 1.442695
    %v664 = vpow.pop %v663
    %v665 = vmul.f32 %v661, 1.442695
    %v666 = vpow.pop %v665
    %v667 = vmul.f32 %v662, 1.442695
    %v668 = vpow.pop %v667
    %v669 = vsel %vm405, %v664, 0.0
    %670 = vadd.xlane.f32.xlu0 %v669
    %v671 = vpop.xlane.xlu0 %670
    %v672 = vsel %vm405, %v666, 0.0
    %673 = vadd.xlane.f32.xlu0 %v672
    %v674 = vpop.xlane.xlu0 %673
    %v675 = vsel %vm412, %v668, 0.0
    %676 = vadd.xlane.f32.xlu0 %v675
    %v677 = vpop.xlane.xlu0 %676
    %v678 = vrcp.pop %v671
    %v679 = vrcp.pop %v674
    %v680 = vrcp.pop %v677
    %v681 = vmul.f32 %v664, %v678
    %v682 = vmul.f32 %v666, %v679
    %v683 = vmul.f32 %v668, %v680
    %684 = vrot.lane.b32.xlu0 %v284, 56
    %v685 = vpop.permute.xlu0 %684
    %686 = vrot.lane.b32.xlu0 %v289, 56
    %v687 = vpop.permute.xlu0 %686
    %688 = vrot.lane.b32.xlu0 %v294, 56
    %v689 = vpop.permute.xlu0 %688
    %v693 = vsel %vm405, %v681, 0
    %v696 = vsel %vm405, %v682, 0
    %v699 = vsel %vm405, %v683, 0
    %v701 = vsel %vm457, %v689, 0
    %703 = vmatprep.subr.mxu0 0.0
    %704 = vmatpush1.msra.mxu0 0.0
    %705 = vmatprep.subr.mxu0 0.0
    %706 = vmatpush1.msra.mxu0 0.0
    %707 = vmatprep.subr.mxu0 0.0
    %708 = vmatpush1.msra.mxu0 0.0
    %709 = vmatprep.subr.mxu0 0.0
    %710 = vmatpush1.msra.mxu0 0.0
    %711 = vmatprep.subr.mxu0 0.0
    %712 = vmatpush1.msra.mxu0 0.0
    %713 = vmatprep.subr.mxu0 0.0
    %714 = vmatpush1.msra.mxu0 0.0
    %715 = vmatprep.subr.mxu0 0.0
    %716 = vmatpush1.msra.mxu0 0.0
    %717 = vmatprep.subr.mxu0 0.0
    %718 = vmatpush1.msra.mxu0 0.0
    %719 = vmatprep.subr.mxu0 0.0
    %720 = vmatpush1.msra.mxu0 0.0
    %721 = vmatprep.subr.mxu0 0.0
    %722 = vmatpush1.msra.mxu0 0.0
    %723 = vmatprep.subr.mxu0 0.0
    %724 = vmatpush1.msra.mxu0 0.0
    %725 = vmatprep.subr.mxu0 0.0
    %726 = vmatpush1.msra.mxu0 0.0
    %727 = vmatprep.subr.mxu0 0.0
    %728 = vmatpush1.msra.mxu0 0.0
    %729 = vmatprep.subr.mxu0 0.0
    %730 = vmatpush1.msra.mxu0 %v701
    %731 = vmatprep.subr.mxu0 0.0
    %732 = vmatpush1.msra.mxu0 %v687
    %733 = vmatprep.subr.mxu0 0.0
    %734 = vmatpush1.msra.mxu0 %v685
    %735 = vmatprep.subr.mxu0 0.0
    %736 = vmatpush2.msra.mxu0 0.0
    %737 = vmatprep.subr.mxu0 0.0
    %738 = vmatpush2.msra.mxu0 0.0
    %739 = vmatprep.subr.mxu0 0.0
    %740 = vmatpush2.msra.mxu0 0.0
    %741 = vmatprep.subr.mxu0 0.0
    %742 = vmatpush2.msra.mxu0 0.0
    %743 = vmatprep.subr.mxu0 0.0
    %744 = vmatpush2.msra.mxu0 0.0
    %745 = vmatprep.subr.mxu0 0.0
    %746 = vmatpush2.msra.mxu0 0.0
    %747 = vmatprep.subr.mxu0 0.0
    %748 = vmatpush2.msra.mxu0 0.0
    %749 = vmatprep.subr.mxu0 0.0
    %750 = vmatpush2.msra.mxu0 0.0
    %751 = vmatprep.subr.mxu0 0.0
    %752 = vmatpush2.msra.mxu0 0.0
    %753 = vmatprep.subr.mxu0 0.0
    %754 = vmatpush2.msra.mxu0 0.0
    %755 = vmatprep.subr.mxu0 0.0
    %756 = vmatpush2.msra.mxu0 0.0
    %757 = vmatprep.subr.mxu0 0.0
    %758 = vmatpush2.msra.mxu0 0.0
    %759 = vmatprep.subr.mxu0 0.0
    %760 = vmatpush2.msra.mxu0 0.0
    %761 = vmatprep.subr.mxu0 0.0
    %762 = vmatpush2.msra.mxu0 0.0
    %763 = vmatprep.subr.mxu0 0.0
    %764 = vmatpush2.msra.mxu0 0.0
    %765 = vmatprep.subr.mxu0 0.0
    %766 = vmatpush2.msra.mxu0 0.0
    %767 = vmatprep.mubr.f32.mxu0 0.0
    %768 = vmatmul.mubr.f32.gmra.mxu0 %v693
    %v769 = vpop.f32.mrf.mxu0
    %v770 = vadd.f32 0.0, %v769
    %v771 = vpop.f32.mrf.mxu0
    %772 = vmatprep.mubr.f32.mxu0 0.0
    %773 = vmatmul.mubr.f32.gmra.mxu0 %v696
    %v774 = vpop.f32.mrf.mxu0
    %v775 = vadd.f32 0.0, %v774
    %v776 = vpop.f32.mrf.mxu0
    %777 = vmatprep.mubr.f32.mxu0 0.0
    %778 = vmatmul.mubr.f32.gmra.mxu0 %v699
    %v779 = vpop.f32.mrf.mxu0
    %v780 = vadd.f32 0.0, %v779
    %v781 = vpop.f32.mrf.mxu0
    %782 = vdwg.mxu0
    %s783 = scalar_lea.vmem %s8, 8
    %v784 = vld [vmem:[%s783] sm:$0xff]
    %v786 = vsel %vm306, %v770, 0
    %v789 = vsel %vm306, %v775, 0
    %v792 = vsel %vm306, %v780, 0
    %794 = vmatprep.subr.mxu0 0.0
    %795 = vmatpush1.msra.mxu0 0.0
    %796 = vmatprep.subr.mxu0 0.0
    %797 = vmatpush1.msra.mxu0 0.0
    %798 = vmatprep.subr.mxu0 0.0
    %799 = vmatpush1.msra.mxu0 0.0
    %800 = vmatprep.subr.mxu0 0.0
    %801 = vmatpush1.msra.mxu0 0.0
    %802 = vmatprep.subr.mxu0 0.0
    %803 = vmatpush1.msra.mxu0 0.0
    %804 = vmatprep.subr.mxu0 0.0
    %805 = vmatpush1.msra.mxu0 0.0
    %806 = vmatprep.subr.mxu0 0.0
    %807 = vmatpush1.msra.mxu0 0.0
    %808 = vmatprep.subr.mxu0 0.0
    %809 = vmatpush1.msra.mxu0 0.0
    %810 = vmatprep.subr.mxu0 0.0
    %811 = vmatpush1.msra.mxu0 0.0
    %812 = vmatprep.subr.mxu0 0.0
    %813 = vmatpush1.msra.mxu0 0.0
    %814 = vmatprep.subr.mxu0 0.0
    %815 = vmatpush1.msra.mxu0 0.0
    %816 = vmatprep.subr.mxu0 0.0
    %817 = vmatpush1.msra.mxu0 0.0
    %818 = vmatprep.subr.mxu0 0.0
    %819 = vmatpush1.msra.mxu0 0.0
    %820 = vmatprep.subr.mxu0 0.0
    %821 = vmatpush1.msra.mxu0 0.0
    %822 = vmatprep.subr.mxu0 0.0
    %823 = vmatpush1.msra.mxu0 0.0
    %824 = vmatprep.subr.mxu0 0.0
    %825 = vmatpush1.msra.mxu0 %v784
    %826 = vmatprep.subr.mxu0 0.0
    %827 = vmatpush2.msra.mxu0 0.0
    %828 = vmatprep.subr.mxu0 0.0
    %829 = vmatpush2.msra.mxu0 0.0
    %830 = vmatprep.subr.mxu0 0.0
    %831 = vmatpush2.msra.mxu0 0.0
    %832 = vmatprep.subr.mxu0 0.0
    %833 = vmatpush2.msra.mxu0 0.0
    %834 = vmatprep.subr.mxu0 0.0
    %835 = vmatpush2.msra.mxu0 0.0
    %836 = vmatprep.subr.mxu0 0.0
    %837 = vmatpush2.msra.mxu0 0.0
    %838 = vmatprep.subr.mxu0 0.0
    %839 = vmatpush2.msra.mxu0 0.0
    %840 = vmatprep.subr.mxu0 0.0
    %841 = vmatpush2.msra.mxu0 0.0
    %842 = vmatprep.subr.mxu0 0.0
    %843 = vmatpush2.msra.mxu0 0.0
    %844 = vmatprep.subr.mxu0 0.0
    %845 = vmatpush2.msra.mxu0 0.0
    %846 = vmatprep.subr.mxu0 0.0
    %847 = vmatpush2.msra.mxu0 0.0
    %848 = vmatprep.subr.mxu0 0.0
    %849 = vmatpush2.msra.mxu0 0.0
    %850 = vmatprep.subr.mxu0 0.0
    %851 = vmatpush2.msra.mxu0 0.0
    %852 = vmatprep.subr.mxu0 0.0
    %853 = vmatpush2.msra.mxu0 0.0
    %854 = vmatprep.subr.mxu0 0.0
    %855 = vmatpush2.msra.mxu0 0.0
    %856 = vmatprep.subr.mxu0 0.0
    %857 = vmatpush2.msra.mxu0 0.0
    %858 = vmatprep.mubr.f32.mxu0 0.0
    %859 = vmatmul.mubr.f32.gmra.mxu0 %v786
    %v860 = vpop.f32.mrf.mxu0
    %v861 = vadd.f32 0.0, %v860
    %v862 = vpop.f32.mrf.mxu0
    %863 = vmatprep.mubr.f32.mxu0 0.0
    %864 = vmatmul.mubr.f32.gmra.mxu0 %v789
    %v865 = vpop.f32.mrf.mxu0
    %v866 = vadd.f32 0.0, %v865
    %v867 = vpop.f32.mrf.mxu0
    %868 = vmatprep.mubr.f32.mxu0 0.0
    %869 = vmatmul.mubr.f32.gmra.mxu0 %v792
    %v870 = vpop.f32.mrf.mxu0
    %v871 = vadd.f32 0.0, %v870
    %v872 = vpop.f32.mrf.mxu0
    %873 = vdwg.mxu0
    %v875 = vsel %vm306, %v527, 0
    %v878 = vsel %vm306, %v532, 0
    %v881 = vsel %vm306, %v537, 0
    %883 = vmatprep.subr.mxu0 0.0
    %884 = vmatpush1.msra.mxu0 0.0
    %885 = vmatprep.subr.mxu0 0.0
    %886 = vmatpush1.msra.mxu0 0.0
    %887 = vmatprep.subr.mxu0 0.0
    %888 = vmatpush1.msra.mxu0 0.0
    %889 = vmatprep.subr.mxu0 0.0
    %890 = vmatpush1.msra.mxu0 0.0
    %891 = vmatprep.subr.mxu0 0.0
    %892 = vmatpush1.msra.mxu0 0.0
    %893 = vmatprep.subr.mxu0 0.0
    %894 = vmatpush1.msra.mxu0 0.0
    %895 = vmatprep.subr.mxu0 0.0
    %896 = vmatpush1.msra.mxu0 0.0
    %897 = vmatprep.subr.mxu0 0.0
    %898 = vmatpush1.msra.mxu0 0.0
    %899 = vmatprep.subr.mxu0 0.0
    %900 = vmatpush1.msra.mxu0 0.0
    %901 = vmatprep.subr.mxu0 0.0
    %902 = vmatpush1.msra.mxu0 0.0
    %903 = vmatprep.subr.mxu0 0.0
    %904 = vmatpush1.msra.mxu0 0.0
    %905 = vmatprep.subr.mxu0 0.0
    %906 = vmatpush1.msra.mxu0 0.0
    %907 = vmatprep.subr.mxu0 0.0
    %908 = vmatpush1.msra.mxu0 0.0
    %909 = vmatprep.subr.mxu0 0.0
    %910 = vmatpush1.msra.mxu0 0.0
    %911 = vmatprep.subr.mxu0 0.0
    %912 = vmatpush1.msra.mxu0 0.0
    %913 = vmatprep.subr.mxu0 0.0
    %914 = vmatpush1.msra.mxu0 %v540
    %915 = vmatprep.subr.mxu0 0.0
    %916 = vmatpush2.msra.mxu0 0.0
    %917 = vmatprep.subr.mxu0 0.0
    %918 = vmatpush2.msra.mxu0 0.0
    %919 = vmatprep.subr.mxu0 0.0
    %920 = vmatpush2.msra.mxu0 0.0
    %921 = vmatprep.subr.mxu0 0.0
    %922 = vmatpush2.msra.mxu0 0.0
    %923 = vmatprep.subr.mxu0 0.0
    %924 = vmatpush2.msra.mxu0 0.0
    %925 = vmatprep.subr.mxu0 0.0
    %926 = vmatpush2.msra.mxu0 0.0
    %927 = vmatprep.subr.mxu0 0.0
    %928 = vmatpush2.msra.mxu0 0.0
    %929 = vmatprep.subr.mxu0 0.0
    %930 = vmatpush2.msra.mxu0 0.0
    %931 = vmatprep.subr.mxu0 0.0
    %932 = vmatpush2.msra.mxu0 0.0
    %933 = vmatprep.subr.mxu0 0.0
    %934 = vmatpush2.msra.mxu0 0.0
    %935 = vmatprep.subr.mxu0 0.0
    %936 = vmatpush2.msra.mxu0 0.0
    %937 = vmatprep.subr.mxu0 0.0
    %938 = vmatpush2.msra.mxu0 0.0
    %939 = vmatprep.subr.mxu0 0.0
    %940 = vmatpush2.msra.mxu0 0.0
    %941 = vmatprep.subr.mxu0 0.0
    %942 = vmatpush2.msra.mxu0 0.0
    %943 = vmatprep.subr.mxu0 0.0
    %944 = vmatpush2.msra.mxu0 0.0
    %945 = vmatprep.subr.mxu0 0.0
    %946 = vmatpush2.msra.mxu0 0.0
    %947 = vmatprep.mubr.f32.mxu0 0.0
    %948 = vmatmul.mubr.f32.gmra.mxu0 %v875
    %v949 = vpop.f32.mrf.mxu0
    %v950 = vadd.f32 %v861, %v949
    %v951 = vpop.f32.mrf.mxu0
    %952 = vmatprep.mubr.f32.mxu0 0.0
    %953 = vmatmul.mubr.f32.gmra.mxu0 %v878
    %v954 = vpop.f32.mrf.mxu0
    %v955 = vadd.f32 %v866, %v954
    %v956 = vpop.f32.mrf.mxu0
    %957 = vmatprep.mubr.f32.mxu0 0.0
    %958 = vmatmul.mubr.f32.gmra.mxu0 %v881
    %v959 = vpop.f32.mrf.mxu0
    %v960 = vadd.f32 %v871, %v959
    %v961 = vpop.f32.mrf.mxu0
    %962 = vdwg.mxu0
    %963 = vrot.lane.b32.xlu0 %v284, 112
    %v964 = vpop.permute.xlu0 %963
    %965 = vrot.lane.b32.xlu0 %v289, 112
    %v966 = vpop.permute.xlu0 %965
    %967 = vrot.lane.b32.xlu0 %v294, 112
    %v968 = vpop.permute.xlu0 %967
    %969 = vrot.lane.b32.xlu0 %v284, 80
    %v970 = vpop.permute.xlu0 %969
    %971 = vrot.lane.b32.xlu0 %v289, 80
    %v972 = vpop.permute.xlu0 %971
    %973 = vrot.lane.b32.xlu0 %v294, 80
    %v974 = vpop.permute.xlu0 %973
    %v975 = vsel %vm306, %v964, 0
    %v977 = vsel %vm306, %v966, 0
    %v979 = vsel %vm306, %v968, 0
    %v981 = vsel %vm306, %v970, 0
    %v983 = vsel %vm306, %v972, 0
    %v985 = vsel %vm306, %v974, 0
    %987 = vmatprep.subr.mxu0 0.0
    %988 = vmatpush1.xpose.msra.mxu0 0.0
    %989 = vmatprep.subr.mxu0 0.0
    %990 = vmatpush1.xpose.msra.mxu0 0.0
    %991 = vmatprep.subr.mxu0 0.0
    %992 = vmatpush1.xpose.msra.mxu0 0.0
    %993 = vmatprep.subr.mxu0 0.0
    %994 = vmatpush1.xpose.msra.mxu0 0.0
    %995 = vmatprep.subr.mxu0 0.0
    %996 = vmatpush1.xpose.msra.mxu0 0.0
    %997 = vmatprep.subr.mxu0 0.0
    %998 = vmatpush1.xpose.msra.mxu0 0.0
    %999 = vmatprep.subr.mxu0 0.0
    %1000 = vmatpush1.xpose.msra.mxu0 0.0
    %1001 = vmatprep.subr.mxu0 0.0
    %1002 = vmatpush1.xpose.msra.mxu0 0.0
    %1003 = vmatprep.subr.mxu0 0.0
    %1004 = vmatpush1.xpose.msra.mxu0 0.0
    %1005 = vmatprep.subr.mxu0 0.0
    %1006 = vmatpush1.xpose.msra.mxu0 0.0
    %1007 = vmatprep.subr.mxu0 0.0
    %1008 = vmatpush1.xpose.msra.mxu0 0.0
    %1009 = vmatprep.subr.mxu0 0.0
    %1010 = vmatpush1.xpose.msra.mxu0 0.0
    %1011 = vmatprep.subr.mxu0 0.0
    %1012 = vmatpush1.xpose.msra.mxu0 0.0
    %1013 = vmatprep.subr.mxu0 0.0
    %1014 = vmatpush1.xpose.msra.mxu0 %v985
    %1015 = vmatprep.subr.mxu0 0.0
    %1016 = vmatpush1.xpose.msra.mxu0 %v983
    %1017 = vmatprep.subr.mxu0 0.0
    %1018 = vmatpush1.xpose.msra.mxu0 %v981
    %1019 = vmatprep.subr.mxu0 0.0
    %1020 = vmatpush2.xpose.msra.mxu0 0.0
    %1021 = vmatprep.subr.mxu0 0.0
    %1022 = vmatpush2.xpose.msra.mxu0 0.0
    %1023 = vmatprep.subr.mxu0 0.0
    %1024 = vmatpush2.xpose.msra.mxu0 0.0
    %1025 = vmatprep.subr.mxu0 0.0
    %1026 = vmatpush2.xpose.msra.mxu0 0.0
    %1027 = vmatprep.subr.mxu0 0.0
    %1028 = vmatpush2.xpose.msra.mxu0 0.0
    %1029 = vmatprep.subr.mxu0 0.0
    %1030 = vmatpush2.xpose.msra.mxu0 0.0
    %1031 = vmatprep.subr.mxu0 0.0
    %1032 = vmatpush2.xpose.msra.mxu0 0.0
    %1033 = vmatprep.subr.mxu0 0.0
    %1034 = vmatpush2.xpose.msra.mxu0 0.0
    %1035 = vmatprep.subr.mxu0 0.0
    %1036 = vmatpush2.xpose.msra.mxu0 0.0
    %1037 = vmatprep.subr.mxu0 0.0
    %1038 = vmatpush2.xpose.msra.mxu0 0.0
    %1039 = vmatprep.subr.mxu0 0.0
    %1040 = vmatpush2.xpose.msra.mxu0 0.0
    %1041 = vmatprep.subr.mxu0 0.0
    %1042 = vmatpush2.xpose.msra.mxu0 0.0
    %1043 = vmatprep.subr.mxu0 0.0
    %1044 = vmatpush2.xpose.msra.mxu0 0.0
    %1045 = vmatprep.subr.mxu0 0.0
    %1046 = vmatpush2.xpose.msra.mxu0 0.0
    %1047 = vmatprep.subr.mxu0 0.0
    %1048 = vmatpush2.xpose.msra.mxu0 0.0
    %1049 = vmatprep.subr.mxu0 0.0
    %1050 = vmatpush2.xpose.msra.mxu0 0.0
    %1051 = vmatprep.mubr.f32.mxu0 0.0
    %1052 = vmatmul.mubr.f32.gmra.mxu0 %v975
    %v1053 = vpop.f32.mrf.mxu0
    %v1054 = vadd.f32 0.0, %v1053
    %v1055 = vpop.f32.mrf.mxu0
    %1056 = vmatprep.mubr.f32.mxu0 0.0
    %1057 = vmatmul.mubr.f32.gmra.mxu0 %v977
    %v1058 = vpop.f32.mrf.mxu0
    %v1059 = vadd.f32 0.0, %v1058
    %v1060 = vpop.f32.mrf.mxu0
    %1061 = vmatprep.mubr.f32.mxu0 0.0
    %1062 = vmatmul.mubr.f32.gmra.mxu0 %v979
    %v1063 = vpop.f32.mrf.mxu0
    %v1064 = vadd.f32 0.0, %v1063
    %v1065 = vpop.f32.mrf.mxu0
    %1066 = vdwg.mxu0
    %v1067 = vmul.f32 %v1054, 0.35355338
    %v1068 = vmul.f32 %v1059, 0.35355338
    %v1069 = vmul.f32 %v1064, 0.35355338
    %v1070 = vadd.f32 %v1067, %v193
    %v1071 = vadd.f32 %v1068, %v194
    %v1072 = vadd.f32 %v1069, %v195
    %v1073 = vsel %vm405, %v1070, -inf
    %1074 = vmax.xlane.f32.xlu0 %v1073
    %v1075 = vpop.xlane.xlu0 %1074
    %v1076 = vsel %vm405, %v1071, -inf
    %1077 = vmax.xlane.f32.xlu0 %v1076
    %v1078 = vpop.xlane.xlu0 %1077
    %v1079 = vsel %vm412, %v1072, -inf
    %1080 = vmax.xlane.f32.xlu0 %v1079
    %v1081 = vpop.xlane.xlu0 %1080
    %v1082 = vsub.f32 %v1070, %v1075
    %v1083 = vsub.f32 %v1071, %v1078
    %v1084 = vsub.f32 %v1072, %v1081
    %v1085 = vmul.f32 %v1082, 1.442695
    %v1086 = vpow.pop %v1085
    %v1087 = vmul.f32 %v1083, 1.442695
    %v1088 = vpow.pop %v1087
    %v1089 = vmul.f32 %v1084, 1.442695
    %v1090 = vpow.pop %v1089
    %v1091 = vsel %vm405, %v1086, 0.0
    %1092 = vadd.xlane.f32.xlu0 %v1091
    %v1093 = vpop.xlane.xlu0 %1092
    %v1094 = vsel %vm405, %v1088, 0.0
    %1095 = vadd.xlane.f32.xlu0 %v1094
    %v1096 = vpop.xlane.xlu0 %1095
    %v1097 = vsel %vm412, %v1090, 0.0
    %1098 = vadd.xlane.f32.xlu0 %v1097
    %v1099 = vpop.xlane.xlu0 %1098
    %v1100 = vrcp.pop %v1093
    %v1101 = vrcp.pop %v1096
    %v1102 = vrcp.pop %v1099
    %v1103 = vmul.f32 %v1086, %v1100
    %v1104 = vmul.f32 %v1088, %v1101
    %v1105 = vmul.f32 %v1090, %v1102
    %1106 = vrot.lane.b32.xlu0 %v284, 48
    %v1107 = vpop.permute.xlu0 %1106
    %1108 = vrot.lane.b32.xlu0 %v289, 48
    %v1109 = vpop.permute.xlu0 %1108
    %1110 = vrot.lane.b32.xlu0 %v294, 48
    %v1111 = vpop.permute.xlu0 %1110
    %v1115 = vsel %vm405, %v1103, 0
    %v1118 = vsel %vm405, %v1104, 0
    %v1121 = vsel %vm405, %v1105, 0
    %v1123 = vsel %vm457, %v1111, 0
    %1125 = vmatprep.subr.mxu0 0.0
    %1126 = vmatpush1.msra.mxu0 0.0
    %1127 = vmatprep.subr.mxu0 0.0
    %1128 = vmatpush1.msra.mxu0 0.0
    %1129 = vmatprep.subr.mxu0 0.0
    %1130 = vmatpush1.msra.mxu0 0.0
    %1131 = vmatprep.subr.mxu0 0.0
    %1132 = vmatpush1.msra.mxu0 0.0
    %1133 = vmatprep.subr.mxu0 0.0
    %1134 = vmatpush1.msra.mxu0 0.0
    %1135 = vmatprep.subr.mxu0 0.0
    %1136 = vmatpush1.msra.mxu0 0.0
    %1137 = vmatprep.subr.mxu0 0.0
    %1138 = vmatpush1.msra.mxu0 0.0
    %1139 = vmatprep.subr.mxu0 0.0
    %1140 = vmatpush1.msra.mxu0 0.0
    %1141 = vmatprep.subr.mxu0 0.0
    %1142 = vmatpush1.msra.mxu0 0.0
    %1143 = vmatprep.subr.mxu0 0.0
    %1144 = vmatpush1.msra.mxu0 0.0
    %1145 = vmatprep.subr.mxu0 0.0
    %1146 = vmatpush1.msra.mxu0 0.0
    %1147 = vmatprep.subr.mxu0 0.0
    %1148 = vmatpush1.msra.mxu0 0.0
    %1149 = vmatprep.subr.mxu0 0.0
    %1150 = vmatpush1.msra.mxu0 0.0
    %1151 = vmatprep.subr.mxu0 0.0
    %1152 = vmatpush1.msra.mxu0 %v1123
    %1153 = vmatprep.subr.mxu0 0.0
    %1154 = vmatpush1.msra.mxu0 %v1109
    %1155 = vmatprep.subr.mxu0 0.0
    %1156 = vmatpush1.msra.mxu0 %v1107
    %1157 = vmatprep.subr.mxu0 0.0
    %1158 = vmatpush2.msra.mxu0 0.0
    %1159 = vmatprep.subr.mxu0 0.0
    %1160 = vmatpush2.msra.mxu0 0.0
    %1161 = vmatprep.subr.mxu0 0.0
    %1162 = vmatpush2.msra.mxu0 0.0
    %1163 = vmatprep.subr.mxu0 0.0
    %1164 = vmatpush2.msra.mxu0 0.0
    %1165 = vmatprep.subr.mxu0 0.0
    %1166 = vmatpush2.msra.mxu0 0.0
    %1167 = vmatprep.subr.mxu0 0.0
    %1168 = vmatpush2.msra.mxu0 0.0
    %1169 = vmatprep.subr.mxu0 0.0
    %1170 = vmatpush2.msra.mxu0 0.0
    %1171 = vmatprep.subr.mxu0 0.0
    %1172 = vmatpush2.msra.mxu0 0.0
    %1173 = vmatprep.subr.mxu0 0.0
    %1174 = vmatpush2.msra.mxu0 0.0
    %1175 = vmatprep.subr.mxu0 0.0
    %1176 = vmatpush2.msra.mxu0 0.0
    %1177 = vmatprep.subr.mxu0 0.0
    %1178 = vmatpush2.msra.mxu0 0.0
    %1179 = vmatprep.subr.mxu0 0.0
    %1180 = vmatpush2.msra.mxu0 0.0
    %1181 = vmatprep.subr.mxu0 0.0
    %1182 = vmatpush2.msra.mxu0 0.0
    %1183 = vmatprep.subr.mxu0 0.0
    %1184 = vmatpush2.msra.mxu0 0.0
    %1185 = vmatprep.subr.mxu0 0.0
    %1186 = vmatpush2.msra.mxu0 0.0
    %1187 = vmatprep.subr.mxu0 0.0
    %1188 = vmatpush2.msra.mxu0 0.0
    %1189 = vmatprep.mubr.f32.mxu0 0.0
    %1190 = vmatmul.mubr.f32.gmra.mxu0 %v1115
    %v1191 = vpop.f32.mrf.mxu0
    %v1192 = vadd.f32 0.0, %v1191
    %v1193 = vpop.f32.mrf.mxu0
    %1194 = vmatprep.mubr.f32.mxu0 0.0
    %1195 = vmatmul.mubr.f32.gmra.mxu0 %v1118
    %v1196 = vpop.f32.mrf.mxu0
    %v1197 = vadd.f32 0.0, %v1196
    %v1198 = vpop.f32.mrf.mxu0
    %1199 = vmatprep.mubr.f32.mxu0 0.0
    %1200 = vmatmul.mubr.f32.gmra.mxu0 %v1121
    %v1201 = vpop.f32.mrf.mxu0
    %v1202 = vadd.f32 0.0, %v1201
    %v1203 = vpop.f32.mrf.mxu0
    %1204 = vdwg.mxu0
    %s1205 = scalar_lea.vmem %s8, 16
    %v1206 = vld [vmem:[%s1205] sm:$0xff]
    %v1208 = vsel %vm306, %v1192, 0
    %v1211 = vsel %vm306, %v1197, 0
    %v1214 = vsel %vm306, %v1202, 0
    %1216 = vmatprep.subr.mxu0 0.0
    %1217 = vmatpush1.msra.mxu0 0.0
    %1218 = vmatprep.subr.mxu0 0.0
    %1219 = vmatpush1.msra.mxu0 0.0
    %1220 = vmatprep.subr.mxu0 0.0
    %1221 = vmatpush1.msra.mxu0 0.0
    %1222 = vmatprep.subr.mxu0 0.0
    %1223 = vmatpush1.msra.mxu0 0.0
    %1224 = vmatprep.subr.mxu0 0.0
    %1225 = vmatpush1.msra.mxu0 0.0
    %1226 = vmatprep.subr.mxu0 0.0
    %1227 = vmatpush1.msra.mxu0 0.0
    %1228 = vmatprep.subr.mxu0 0.0
    %1229 = vmatpush1.msra.mxu0 0.0
    %1230 = vmatprep.subr.mxu0 0.0
    %1231 = vmatpush1.msra.mxu0 0.0
    %1232 = vmatprep.subr.mxu0 0.0
    %1233 = vmatpush1.msra.mxu0 0.0
    %1234 = vmatprep.subr.mxu0 0.0
    %1235 = vmatpush1.msra.mxu0 0.0
    %1236 = vmatprep.subr.mxu0 0.0
    %1237 = vmatpush1.msra.mxu0 0.0
    %1238 = vmatprep.subr.mxu0 0.0
    %1239 = vmatpush1.msra.mxu0 0.0
    %1240 = vmatprep.subr.mxu0 0.0
    %1241 = vmatpush1.msra.mxu0 0.0
    %1242 = vmatprep.subr.mxu0 0.0
    %1243 = vmatpush1.msra.mxu0 0.0
    %1244 = vmatprep.subr.mxu0 0.0
    %1245 = vmatpush1.msra.mxu0 0.0
    %1246 = vmatprep.subr.mxu0 0.0
    %1247 = vmatpush1.msra.mxu0 %v1206
    %1248 = vmatprep.subr.mxu0 0.0
    %1249 = vmatpush2.msra.mxu0 0.0
    %1250 = vmatprep.subr.mxu0 0.0
    %1251 = vmatpush2.msra.mxu0 0.0
    %1252 = vmatprep.subr.mxu0 0.0
    %1253 = vmatpush2.msra.mxu0 0.0
    %1254 = vmatprep.subr.mxu0 0.0
    %1255 = vmatpush2.msra.mxu0 0.0
    %1256 = vmatprep.subr.mxu0 0.0
    %1257 = vmatpush2.msra.mxu0 0.0
    %1258 = vmatprep.subr.mxu0 0.0
    %1259 = vmatpush2.msra.mxu0 0.0
    %1260 = vmatprep.subr.mxu0 0.0
    %1261 = vmatpush2.msra.mxu0 0.0
    %1262 = vmatprep.subr.mxu0 0.0
    %1263 = vmatpush2.msra.mxu0 0.0
    %1264 = vmatprep.subr.mxu0 0.0
    %1265 = vmatpush2.msra.mxu0 0.0
    %1266 = vmatprep.subr.mxu0 0.0
    %1267 = vmatpush2.msra.mxu0 0.0
    %1268 = vmatprep.subr.mxu0 0.0
    %1269 = vmatpush2.msra.mxu0 0.0
    %1270 = vmatprep.subr.mxu0 0.0
    %1271 = vmatpush2.msra.mxu0 0.0
    %1272 = vmatprep.subr.mxu0 0.0
    %1273 = vmatpush2.msra.mxu0 0.0
    %1274 = vmatprep.subr.mxu0 0.0
    %1275 = vmatpush2.msra.mxu0 0.0
    %1276 = vmatprep.subr.mxu0 0.0
    %1277 = vmatpush2.msra.mxu0 0.0
    %1278 = vmatprep.subr.mxu0 0.0
    %1279 = vmatpush2.msra.mxu0 0.0
    %1280 = vmatprep.mubr.f32.mxu0 0.0
    %1281 = vmatmul.mubr.f32.gmra.mxu0 %v1208
    %v1282 = vpop.f32.mrf.mxu0
    %v1283 = vadd.f32 0.0, %v1282
    %v1284 = vpop.f32.mrf.mxu0
    %1285 = vmatprep.mubr.f32.mxu0 0.0
    %1286 = vmatmul.mubr.f32.gmra.mxu0 %v1211
    %v1287 = vpop.f32.mrf.mxu0
    %v1288 = vadd.f32 0.0, %v1287
    %v1289 = vpop.f32.mrf.mxu0
    %1290 = vmatprep.mubr.f32.mxu0 0.0
    %1291 = vmatmul.mubr.f32.gmra.mxu0 %v1214
    %v1292 = vpop.f32.mrf.mxu0
    %v1293 = vadd.f32 0.0, %v1292
    %v1294 = vpop.f32.mrf.mxu0
    %1295 = vdwg.mxu0
    %v1296 = vadd.f32 %v950, %v1283
    %v1297 = vadd.f32 %v955, %v1288
    %v1298 = vadd.f32 %v960, %v1293
    %1299 = vrot.lane.b32.xlu0 %v284, 104
    %v1300 = vpop.permute.xlu0 %1299
    %1301 = vrot.lane.b32.xlu0 %v289, 104
    %v1302 = vpop.permute.xlu0 %1301
    %1303 = vrot.lane.b32.xlu0 %v294, 104
    %v1304 = vpop.permute.xlu0 %1303
    %1305 = vrot.lane.b32.xlu0 %v284, 72
    %v1306 = vpop.permute.xlu0 %1305
    %1307 = vrot.lane.b32.xlu0 %v289, 72
    %v1308 = vpop.permute.xlu0 %1307
    %1309 = vrot.lane.b32.xlu0 %v294, 72
    %v1310 = vpop.permute.xlu0 %1309
    %v1311 = vsel %vm306, %v1300, 0
    %v1313 = vsel %vm306, %v1302, 0
    %v1315 = vsel %vm306, %v1304, 0
    %v1317 = vsel %vm306, %v1306, 0
    %v1319 = vsel %vm306, %v1308, 0
    %v1321 = vsel %vm306, %v1310, 0
    %1323 = vmatprep.subr.mxu0 0.0
    %1324 = vmatpush1.xpose.msra.mxu0 0.0
    %1325 = vmatprep.subr.mxu0 0.0
    %1326 = vmatpush1.xpose.msra.mxu0 0.0
    %1327 = vmatprep.subr.mxu0 0.0
    %1328 = vmatpush1.xpose.msra.mxu0 0.0
    %1329 = vmatprep.subr.mxu0 0.0
    %1330 = vmatpush1.xpose.msra.mxu0 0.0
    %1331 = vmatprep.subr.mxu0 0.0
    %1332 = vmatpush1.xpose.msra.mxu0 0.0
    %1333 = vmatprep.subr.mxu0 0.0
    %1334 = vmatpush1.xpose.msra.mxu0 0.0
    %1335 = vmatprep.subr.mxu0 0.0
    %1336 = vmatpush1.xpose.msra.mxu0 0.0
    %1337 = vmatprep.subr.mxu0 0.0
    %1338 = vmatpush1.xpose.msra.mxu0 0.0
    %1339 = vmatprep.subr.mxu0 0.0
    %1340 = vmatpush1.xpose.msra.mxu0 0.0
    %1341 = vmatprep.subr.mxu0 0.0
    %1342 = vmatpush1.xpose.msra.mxu0 0.0
    %1343 = vmatprep.subr.mxu0 0.0
    %1344 = vmatpush1.xpose.msra.mxu0 0.0
    %1345 = vmatprep.subr.mxu0 0.0
    %1346 = vmatpush1.xpose.msra.mxu0 0.0
    %1347 = vmatprep.subr.mxu0 0.0
    %1348 = vmatpush1.xpose.msra.mxu0 0.0
    %1349 = vmatprep.subr.mxu0 0.0
    %1350 = vmatpush1.xpose.msra.mxu0 %v1321
    %1351 = vmatprep.subr.mxu0 0.0
    %1352 = vmatpush1.xpose.msra.mxu0 %v1319
    %1353 = vmatprep.subr.mxu0 0.0
    %1354 = vmatpush1.xpose.msra.mxu0 %v1317
    %1355 = vmatprep.subr.mxu0 0.0
    %1356 = vmatpush2.xpose.msra.mxu0 0.0
    %1357 = vmatprep.subr.mxu0 0.0
    %1358 = vmatpush2.xpose.msra.mxu0 0.0
    %1359 = vmatprep.subr.mxu0 0.0
    %1360 = vmatpush2.xpose.msra.mxu0 0.0
    %1361 = vmatprep.subr.mxu0 0.0
    %1362 = vmatpush2.xpose.msra.mxu0 0.0
    %1363 = vmatprep.subr.mxu0 0.0
    %1364 = vmatpush2.xpose.msra.mxu0 0.0
    %1365 = vmatprep.subr.mxu0 0.0
    %1366 = vmatpush2.xpose.msra.mxu0 0.0
    %1367 = vmatprep.subr.mxu0 0.0
    %1368 = vmatpush2.xpose.msra.mxu0 0.0
    %1369 = vmatprep.subr.mxu0 0.0
    %1370 = vmatpush2.xpose.msra.mxu0 0.0
    %1371 = vmatprep.subr.mxu0 0.0
    %1372 = vmatpush2.xpose.msra.mxu0 0.0
    %1373 = vmatprep.subr.mxu0 0.0
    %1374 = vmatpush2.xpose.msra.mxu0 0.0
    %1375 = vmatprep.subr.mxu0 0.0
    %1376 = vmatpush2.xpose.msra.mxu0 0.0
    %1377 = vmatprep.subr.mxu0 0.0
    %1378 = vmatpush2.xpose.msra.mxu0 0.0
    %1379 = vmatprep.subr.mxu0 0.0
    %1380 = vmatpush2.xpose.msra.mxu0 0.0
    %1381 = vmatprep.subr.mxu0 0.0
    %1382 = vmatpush2.xpose.msra.mxu0 0.0
    %1383 = vmatprep.subr.mxu0 0.0
    %1384 = vmatpush2.xpose.msra.mxu0 0.0
    %1385 = vmatprep.subr.mxu0 0.0
    %1386 = vmatpush2.xpose.msra.mxu0 0.0
    %1387 = vmatprep.mubr.f32.mxu0 0.0
    %1388 = vmatmul.mubr.f32.gmra.mxu0 %v1311
    %v1389 = vpop.f32.mrf.mxu0
    %v1390 = vadd.f32 0.0, %v1389
    %v1391 = vpop.f32.mrf.mxu0
    %1392 = vmatprep.mubr.f32.mxu0 0.0
    %1393 = vmatmul.mubr.f32.gmra.mxu0 %v1313
    %v1394 = vpop.f32.mrf.mxu0
    %v1395 = vadd.f32 0.0, %v1394
    %v1396 = vpop.f32.mrf.mxu0
    %1397 = vmatprep.mubr.f32.mxu0 0.0
    %1398 = vmatmul.mubr.f32.gmra.mxu0 %v1315
    %v1399 = vpop.f32.mrf.mxu0
    %v1400 = vadd.f32 0.0, %v1399
    %v1401 = vpop.f32.mrf.mxu0
    %1402 = vdwg.mxu0
    %v1403 = vmul.f32 %v1390, 0.35355338
    %v1404 = vmul.f32 %v1395, 0.35355338
    %v1405 = vmul.f32 %v1400, 0.35355338
    %v1406 = vadd.f32 %v1403, %v193
    %v1407 = vadd.f32 %v1404, %v194
    %v1408 = vadd.f32 %v1405, %v195
    %v1409 = vsel %vm405, %v1406, -inf
    %1410 = vmax.xlane.f32.xlu0 %v1409
    %v1411 = vpop.xlane.xlu0 %1410
    %v1412 = vsel %vm405, %v1407, -inf
    %1413 = vmax.xlane.f32.xlu0 %v1412
    %v1414 = vpop.xlane.xlu0 %1413
    %v1415 = vsel %vm412, %v1408, -inf
    %1416 = vmax.xlane.f32.xlu0 %v1415
    %v1417 = vpop.xlane.xlu0 %1416
    %v1418 = vsub.f32 %v1406, %v1411
    %v1419 = vsub.f32 %v1407, %v1414
    %v1420 = vsub.f32 %v1408, %v1417
    %v1421 = vmul.f32 %v1418, 1.442695
    %v1422 = vpow.pop %v1421
    %v1423 = vmul.f32 %v1419, 1.442695
    %v1424 = vpow.pop %v1423
    %v1425 = vmul.f32 %v1420, 1.442695
    %v1426 = vpow.pop %v1425
    %v1427 = vsel %vm405, %v1422, 0.0
    %1428 = vadd.xlane.f32.xlu0 %v1427
    %v1429 = vpop.xlane.xlu0 %1428
    %v1430 = vsel %vm405, %v1424, 0.0
    %1431 = vadd.xlane.f32.xlu0 %v1430
    %v1432 = vpop.xlane.xlu0 %1431
    %v1433 = vsel %vm412, %v1426, 0.0
    %1434 = vadd.xlane.f32.xlu0 %v1433
    %v1435 = vpop.xlane.xlu0 %1434
    %v1436 = vrcp.pop %v1429
    %v1437 = vrcp.pop %v1432
    %v1438 = vrcp.pop %v1435
    %v1439 = vmul.f32 %v1422, %v1436
    %v1440 = vmul.f32 %v1424, %v1437
    %v1441 = vmul.f32 %v1426, %v1438
    %1442 = vrot.lane.b32.xlu0 %v284, 40
    %v1443 = vpop.permute.xlu0 %1442
    %1444 = vrot.lane.b32.xlu0 %v289, 40
    %v1445 = vpop.permute.xlu0 %1444
    %1446 = vrot.lane.b32.xlu0 %v294, 40
    %v1447 = vpop.permute.xlu0 %1446
    %v1451 = vsel %vm405, %v1439, 0
    %v1454 = vsel %vm405, %v1440, 0
    %v1457 = vsel %vm405, %v1441, 0
    %v1459 = vsel %vm457, %v1447, 0
    %1461 = vmatprep.subr.mxu0 0.0
    %1462 = vmatpush1.msra.mxu0 0.0
    %1463 = vmatprep.subr.mxu0 0.0
    %1464 = vmatpush1.msra.mxu0 0.0
    %1465 = vmatprep.subr.mxu0 0.0
    %1466 = vmatpush1.msra.mxu0 0.0
    %1467 = vmatprep.subr.mxu0 0.0
    %1468 = vmatpush1.msra.mxu0 0.0
    %1469 = vmatprep.subr.mxu0 0.0
    %1470 = vmatpush1.msra.mxu0 0.0
    %1471 = vmatprep.subr.mxu0 0.0
    %1472 = vmatpush1.msra.mxu0 0.0
    %1473 = vmatprep.subr.mxu0 0.0
    %1474 = vmatpush1.msra.mxu0 0.0
    %1475 = vmatprep.subr.mxu0 0.0
    %1476 = vmatpush1.msra.mxu0 0.0
    %1477 = vmatprep.subr.mxu0 0.0
    %1478 = vmatpush1.msra.mxu0 0.0
    %1479 = vmatprep.subr.mxu0 0.0
    %1480 = vmatpush1.msra.mxu0 0.0
    %1481 = vmatprep.subr.mxu0 0.0
    %1482 = vmatpush1.msra.mxu0 0.0
    %1483 = vmatprep.subr.mxu0 0.0
    %1484 = vmatpush1.msra.mxu0 0.0
    %1485 = vmatprep.subr.mxu0 0.0
    %1486 = vmatpush1.msra.mxu0 0.0
    %1487 = vmatprep.subr.mxu0 0.0
    %1488 = vmatpush1.msra.mxu0 %v1459
    %1489 = vmatprep.subr.mxu0 0.0
    %1490 = vmatpush1.msra.mxu0 %v1445
    %1491 = vmatprep.subr.mxu0 0.0
    %1492 = vmatpush1.msra.mxu0 %v1443
    %1493 = vmatprep.subr.mxu0 0.0
    %1494 = vmatpush2.msra.mxu0 0.0
    %1495 = vmatprep.subr.mxu0 0.0
    %1496 = vmatpush2.msra.mxu0 0.0
    %1497 = vmatprep.subr.mxu0 0.0
    %1498 = vmatpush2.msra.mxu0 0.0
    %1499 = vmatprep.subr.mxu0 0.0
    %1500 = vmatpush2.msra.mxu0 0.0
    %1501 = vmatprep.subr.mxu0 0.0
    %1502 = vmatpush2.msra.mxu0 0.0
    %1503 = vmatprep.subr.mxu0 0.0
    %1504 = vmatpush2.msra.mxu0 0.0
    %1505 = vmatprep.subr.mxu0 0.0
    %1506 = vmatpush2.msra.mxu0 0.0
    %1507 = vmatprep.subr.mxu0 0.0
    %1508 = vmatpush2.msra.mxu0 0.0
    %1509 = vmatprep.subr.mxu0 0.0
    %1510 = vmatpush2.msra.mxu0 0.0
    %1511 = vmatprep.subr.mxu0 0.0
    %1512 = vmatpush2.msra.mxu0 0.0
    %1513 = vmatprep.subr.mxu0 0.0
    %1514 = vmatpush2.msra.mxu0 0.0
    %1515 = vmatprep.subr.mxu0 0.0
    %1516 = vmatpush2.msra.mxu0 0.0
    %1517 = vmatprep.subr.mxu0 0.0
    %1518 = vmatpush2.msra.mxu0 0.0
    %1519 = vmatprep.subr.mxu0 0.0
    %1520 = vmatpush2.msra.mxu0 0.0
    %1521 = vmatprep.subr.mxu0 0.0
    %1522 = vmatpush2.msra.mxu0 0.0
    %1523 = vmatprep.subr.mxu0 0.0
    %1524 = vmatpush2.msra.mxu0 0.0
    %1525 = vmatprep.mubr.f32.mxu0 0.0
    %1526 = vmatmul.mubr.f32.gmra.mxu0 %v1451
    %v1527 = vpop.f32.mrf.mxu0
    %v1528 = vadd.f32 0.0, %v1527
    %v1529 = vpop.f32.mrf.mxu0
    %1530 = vmatprep.mubr.f32.mxu0 0.0
    %1531 = vmatmul.mubr.f32.gmra.mxu0 %v1454
    %v1532 = vpop.f32.mrf.mxu0
    %v1533 = vadd.f32 0.0, %v1532
    %v1534 = vpop.f32.mrf.mxu0
    %1535 = vmatprep.mubr.f32.mxu0 0.0
    %1536 = vmatmul.mubr.f32.gmra.mxu0 %v1457
    %v1537 = vpop.f32.mrf.mxu0
    %v1538 = vadd.f32 0.0, %v1537
    %v1539 = vpop.f32.mrf.mxu0
    %1540 = vdwg.mxu0
    %s1541 = scalar_lea.vmem %s8, 24
    %v1542 = vld [vmem:[%s1541] sm:$0xff]
    %v1544 = vsel %vm306, %v1528, 0
    %v1547 = vsel %vm306, %v1533, 0
    %v1550 = vsel %vm306, %v1538, 0
    %1552 = vmatprep.subr.mxu0 0.0
    %1553 = vmatpush1.msra.mxu0 0.0
    %1554 = vmatprep.subr.mxu0 0.0
    %1555 = vmatpush1.msra.mxu0 0.0
    %1556 = vmatprep.subr.mxu0 0.0
    %1557 = vmatpush1.msra.mxu0 0.0
    %1558 = vmatprep.subr.mxu0 0.0
    %1559 = vmatpush1.msra.mxu0 0.0
    %1560 = vmatprep.subr.mxu0 0.0
    %1561 = vmatpush1.msra.mxu0 0.0
    %1562 = vmatprep.subr.mxu0 0.0
    %1563 = vmatpush1.msra.mxu0 0.0
    %1564 = vmatprep.subr.mxu0 0.0
    %1565 = vmatpush1.msra.mxu0 0.0
    %1566 = vmatprep.subr.mxu0 0.0
    %1567 = vmatpush1.msra.mxu0 0.0
    %1568 = vmatprep.subr.mxu0 0.0
    %1569 = vmatpush1.msra.mxu0 0.0
    %1570 = vmatprep.subr.mxu0 0.0
    %1571 = vmatpush1.msra.mxu0 0.0
    %1572 = vmatprep.subr.mxu0 0.0
    %1573 = vmatpush1.msra.mxu0 0.0
    %1574 = vmatprep.subr.mxu0 0.0
    %1575 = vmatpush1.msra.mxu0 0.0
    %1576 = vmatprep.subr.mxu0 0.0
    %1577 = vmatpush1.msra.mxu0 0.0
    %1578 = vmatprep.subr.mxu0 0.0
    %1579 = vmatpush1.msra.mxu0 0.0
    %1580 = vmatprep.subr.mxu0 0.0
    %1581 = vmatpush1.msra.mxu0 0.0
    %1582 = vmatprep.subr.mxu0 0.0
    %1583 = vmatpush1.msra.mxu0 %v1542
    %1584 = vmatprep.subr.mxu0 0.0
    %1585 = vmatpush2.msra.mxu0 0.0
    %1586 = vmatprep.subr.mxu0 0.0
    %1587 = vmatpush2.msra.mxu0 0.0
    %1588 = vmatprep.subr.mxu0 0.0
    %1589 = vmatpush2.msra.mxu0 0.0
    %1590 = vmatprep.subr.mxu0 0.0
    %1591 = vmatpush2.msra.mxu0 0.0
    %1592 = vmatprep.subr.mxu0 0.0
    %1593 = vmatpush2.msra.mxu0 0.0
    %1594 = vmatprep.subr.mxu0 0.0
    %1595 = vmatpush2.msra.mxu0 0.0
    %1596 = vmatprep.subr.mxu0 0.0
    %1597 = vmatpush2.msra.mxu0 0.0
    %1598 = vmatprep.subr.mxu0 0.0
    %1599 = vmatpush2.msra.mxu0 0.0
    %1600 = vmatprep.subr.mxu0 0.0
    %1601 = vmatpush2.msra.mxu0 0.0
    %1602 = vmatprep.subr.mxu0 0.0
    %1603 = vmatpush2.msra.mxu0 0.0
    %1604 = vmatprep.subr.mxu0 0.0
    %1605 = vmatpush2.msra.mxu0 0.0
    %1606 = vmatprep.subr.mxu0 0.0
    %1607 = vmatpush2.msra.mxu0 0.0
    %1608 = vmatprep.subr.mxu0 0.0
    %1609 = vmatpush2.msra.mxu0 0.0
    %1610 = vmatprep.subr.mxu0 0.0
    %1611 = vmatpush2.msra.mxu0 0.0
    %1612 = vmatprep.subr.mxu0 0.0
    %1613 = vmatpush2.msra.mxu0 0.0
    %1614 = vmatprep.subr.mxu0 0.0
    %1615 = vmatpush2.msra.mxu0 0.0
    %1616 = vmatprep.mubr.f32.mxu0 0.0
    %1617 = vmatmul.mubr.f32.gmra.mxu0 %v1544
    %v1618 = vpop.f32.mrf.mxu0
    %v1619 = vadd.f32 0.0, %v1618
    %v1620 = vpop.f32.mrf.mxu0
    %1621 = vmatprep.mubr.f32.mxu0 0.0
    %1622 = vmatmul.mubr.f32.gmra.mxu0 %v1547
    %v1623 = vpop.f32.mrf.mxu0
    %v1624 = vadd.f32 0.0, %v1623
    %v1625 = vpop.f32.mrf.mxu0
    %1626 = vmatprep.mubr.f32.mxu0 0.0
    %1627 = vmatmul.mubr.f32.gmra.mxu0 %v1550
    %v1628 = vpop.f32.mrf.mxu0
    %v1629 = vadd.f32 0.0, %v1628
    %v1630 = vpop.f32.mrf.mxu0
    %1631 = vdwg.mxu0
    %v1632 = vadd.f32 %v1296, %v1619
    %v1633 = vadd.f32 %v1297, %v1624
    %v1634 = vadd.f32 %v1298, %v1629
    %v1635 = vadd.f32 %v180, %v1632
    %v1636 = vadd.f32 %v185, %v1633
    %v1637 = vadd.f32 %v190, %v1634
    %v1638 = vld [vmem:[%s9] sm:$0x1]
    %v1640 = vlaneseq
    %v1641 = vshrl.u32 %v1640, 7
    %v1642 = vsub.s32 0, %v1641
    %v1643 = vrot.slane %v1638, %v1642
    %v1645 = vadd.f32 %v1635, %v1643
    %v1646 = vadd.f32 %v1636, %v1643
    %v1647 = vadd.f32 %v1637, %v1643
    %v1648 = vld [vmem:[%s10] sm:$0x1]
    %v1649 = vld [vmem:[%s11] sm:$0x1]
    %v1650 = vsel %vm207, %v1645, 0.0
    %1651 = vadd.xlane.f32.xlu0 %v1650
    %v1652 = vpop.xlane.xlu0 %1651
    %v1653 = vsel %vm207, %v1646, 0.0
    %1654 = vadd.xlane.f32.xlu0 %v1653
    %v1655 = vpop.xlane.xlu0 %1654
    %vm1656 = vcmask 257024
    %v1657 = vsel %vm1656, %v1647, 0.0
    %1658 = vadd.xlane.f32.xlu0 %v1657
    %v1659 = vpop.xlane.xlu0 %1658
    %v1660 = vrcp.pop 32.0
    %v1661 = vmul.f32 %v1652, %v1660
    %v1662 = vmul.f32 %v1655, %v1660
    %v1663 = vmul.f32 %v1659, %v1660
    %v1664 = vsub.f32 %v1645, %v1661
    %v1665 = vsub.f32 %v1646, %v1662
    %v1666 = vsub.f32 %v1647, %v1663
    %v1667 = vmul.f32 %v1664, %v1664
    %v1668 = vmul.f32 %v1665, %v1665
    %v1669 = vmul.f32 %v1666, %v1666
    %v1670 = vsel %vm207, %v1667, 0.0
    %1671 = vadd.xlane.f32.xlu0 %v1670
    %v1672 = vpop.xlane.xlu0 %1671
    %v1673 = vsel %vm207, %v1668, 0.0
    %1674 = vadd.xlane.f32.xlu0 %v1673
    %v1675 = vpop.xlane.xlu0 %1674
    %v1676 = vsel %vm1656, %v1669, 0.0
    %1677 = vadd.xlane.f32.xlu0 %v1676
    %v1678 = vpop.xlane.xlu0 %1677
    %v1679 = vmul.f32 %v1672, %v1660
    %v1680 = vmul.f32 %v1675, %v1660
    %v1681 = vmul.f32 %v1678, %v1660
    %v1682 = vadd.f32 %v1679, 1e-05
    %v1683 = vadd.f32 %v1680, 1e-05
    %v1684 = vadd.f32 %v1681, 1e-05
    %v1685 = vrsqrt.pop %v1682
    %v1686 = vrsqrt.pop %v1683
    %v1687 = vrsqrt.pop %v1684
    %v1688 = vmul.f32 %v1664, %v1685
    %v1689 = vmul.f32 %v1665, %v1686
    %v1690 = vmul.f32 %v1666, %v1687
    %v1692 = vlaneseq
    %v1693 = vshrl.u32 %v1692, 7
    %v1694 = vsub.s32 0, %v1693
    %v1695 = vrot.slane %v1648, %v1694
    %v1697 = vmul.f32 %v1688, %v1695
    %v1698 = vmul.f32 %v1689, %v1695
    %v1699 = vmul.f32 %v1690, %v1695
    %v1701 = vlaneseq
    %v1702 = vshrl.u32 %v1701, 7
    %v1703 = vsub.s32 0, %v1702
    %v1704 = vrot.slane %v1649, %v1703
    %v1706 = vadd.f32 %v1697, %v1704
    %v1707 = vadd.f32 %v1698, %v1704
    %v1708 = vadd.f32 %v1699, %v1704
    %v1709 = vld [vmem:[%s12] sm:$0xff]
    %v1710 = vld [vmem:[%s12 + $0x8] sm:$0xff]
    %v1711 = vld [vmem:[%s12 + $0x10] sm:$0xff]
    %v1712 = vld [vmem:[%s12 + $0x18] sm:$0xff]
    %v1713 = vld [vmem:[%s13] sm:$0x1]
    %v1715 = vlaneseq
    %v1716 = vshrl.u32 %v1715, 7
    %v1717 = vsub.s32 0, %v1716
    %v1718 = vrot.slane %v1713, %v1717
    %v1721 = vsel %vm207, %v1706, 0
    %v1724 = vsel %vm207, %v1707, 0
    %v1727 = vsel %vm207, %v1708, 0
    %1729 = vmatprep.subr.mxu0 0.0
    %1730 = vmatpush1.msra.mxu0 0.0
    %1731 = vmatprep.subr.mxu0 0.0
    %1732 = vmatpush1.msra.mxu0 0.0
    %1733 = vmatprep.subr.mxu0 0.0
    %1734 = vmatpush1.msra.mxu0 0.0
    %1735 = vmatprep.subr.mxu0 0.0
    %1736 = vmatpush1.msra.mxu0 0.0
    %1737 = vmatprep.subr.mxu0 0.0
    %1738 = vmatpush1.msra.mxu0 0.0
    %1739 = vmatprep.subr.mxu0 0.0
    %1740 = vmatpush1.msra.mxu0 0.0
    %1741 = vmatprep.subr.mxu0 0.0
    %1742 = vmatpush1.msra.mxu0 0.0
    %1743 = vmatprep.subr.mxu0 0.0
    %1744 = vmatpush1.msra.mxu0 0.0
    %1745 = vmatprep.subr.mxu0 0.0
    %1746 = vmatpush1.msra.mxu0 0.0
    %1747 = vmatprep.subr.mxu0 0.0
    %1748 = vmatpush1.msra.mxu0 0.0
    %1749 = vmatprep.subr.mxu0 0.0
    %1750 = vmatpush1.msra.mxu0 0.0
    %1751 = vmatprep.subr.mxu0 0.0
    %1752 = vmatpush1.msra.mxu0 0.0
    %1753 = vmatprep.subr.mxu0 0.0
    %1754 = vmatpush1.msra.mxu0 %v1712
    %1755 = vmatprep.subr.mxu0 0.0
    %1756 = vmatpush1.msra.mxu0 %v1711
    %1757 = vmatprep.subr.mxu0 0.0
    %1758 = vmatpush1.msra.mxu0 %v1710
    %1759 = vmatprep.subr.mxu0 0.0
    %1760 = vmatpush1.msra.mxu0 %v1709
    %1761 = vmatprep.subr.mxu0 0.0
    %1762 = vmatpush2.msra.mxu0 0.0
    %1763 = vmatprep.subr.mxu0 0.0
    %1764 = vmatpush2.msra.mxu0 0.0
    %1765 = vmatprep.subr.mxu0 0.0
    %1766 = vmatpush2.msra.mxu0 0.0
    %1767 = vmatprep.subr.mxu0 0.0
    %1768 = vmatpush2.msra.mxu0 0.0
    %1769 = vmatprep.subr.mxu0 0.0
    %1770 = vmatpush2.msra.mxu0 0.0
    %1771 = vmatprep.subr.mxu0 0.0
    %1772 = vmatpush2.msra.mxu0 0.0
    %1773 = vmatprep.subr.mxu0 0.0
    %1774 = vmatpush2.msra.mxu0 0.0
    %1775 = vmatprep.subr.mxu0 0.0
    %1776 = vmatpush2.msra.mxu0 0.0
    %1777 = vmatprep.subr.mxu0 0.0
    %1778 = vmatpush2.msra.mxu0 0.0
    %1779 = vmatprep.subr.mxu0 0.0
    %1780 = vmatpush2.msra.mxu0 0.0
    %1781 = vmatprep.subr.mxu0 0.0
    %1782 = vmatpush2.msra.mxu0 0.0
    %1783 = vmatprep.subr.mxu0 0.0
    %1784 = vmatpush2.msra.mxu0 0.0
    %1785 = vmatprep.subr.mxu0 0.0
    %1786 = vmatpush2.msra.mxu0 0.0
    %1787 = vmatprep.subr.mxu0 0.0
    %1788 = vmatpush2.msra.mxu0 0.0
    %1789 = vmatprep.subr.mxu0 0.0
    %1790 = vmatpush2.msra.mxu0 0.0
    %1791 = vmatprep.subr.mxu0 0.0
    %1792 = vmatpush2.msra.mxu0 0.0
    %1793 = vmatprep.mubr.f32.mxu0 0.0
    %1794 = vmatmul.mubr.f32.gmra.mxu0 %v1721
    %v1795 = vpop.f32.mrf.mxu0
    %v1796 = vadd.f32 %v1718, %v1795
    %v1797 = vpop.f32.mrf.mxu0
    %1798 = vmatprep.mubr.f32.mxu0 0.0
    %1799 = vmatmul.mubr.f32.gmra.mxu0 %v1724
    %v1800 = vpop.f32.mrf.mxu0
    %v1801 = vadd.f32 %v1718, %v1800
    %v1802 = vpop.f32.mrf.mxu0
    %1803 = vmatprep.mubr.f32.mxu0 0.0
    %1804 = vmatmul.mubr.f32.gmra.mxu0 %v1727
    %v1805 = vpop.f32.mrf.mxu0
    %v1806 = vadd.f32 %v1718, %v1805
    %v1807 = vpop.f32.mrf.mxu0
    %1808 = vdwg.mxu0
    %v1809 = vmul.f32 %v1796, 0.5
    %v1810 = vmul.f32 %v1801, 0.5
    %v1811 = vmul.f32 %v1806, 0.5
    %v1812 = vmul.f32 %v1796, 0.70710677
    %v1813 = vmul.f32 %v1801, 0.70710677
    %v1814 = vmul.f32 %v1806, 0.70710677
    %vm1815 = vcmp.ge.f32.partialorder %v1812, 0.0
    %vm1816 = vcmp.ge.f32.partialorder %v1813, 0.0
    %vm1817 = vcmp.ge.f32.partialorder %v1814, 0.0
    %v1818 = vsel %vm1815, 1.0, -1.0
    %v1819 = vsel %vm1816, 1.0, -1.0
    %v1820 = vsel %vm1817, 1.0, -1.0
    %v1821 = vand.u32 2147483647, %v1812
    %v1822 = vand.u32 2147483647, %v1813
    %v1823 = vand.u32 2147483647, %v1814
    %v1824 = vmul.f32 %v1821, 0.3275911
    %v1825 = vmul.f32 %v1822, 0.3275911
    %v1826 = vmul.f32 %v1823, 0.3275911
    %v1827 = vadd.f32 %v1824, 1.0
    %v1828 = vadd.f32 %v1825, 1.0
    %v1829 = vadd.f32 %v1826, 1.0
    %v1830 = vrcp.pop %v1827
    %v1831 = vmul.f32 1.0, %v1830
    %v1832 = vrcp.pop %v1828
    %v1833 = vmul.f32 1.0, %v1832
    %v1834 = vrcp.pop %v1829
    %v1835 = vmul.f32 1.0, %v1834
    %v1836 = vmul.f32 %v1831, 1.0614054
    %v1837 = vmul.f32 %v1833, 1.0614054
    %v1838 = vmul.f32 %v1835, 1.0614054
    %v1839 = vadd.f32 %v1836, -1.4531521
    %v1840 = vadd.f32 %v1837, -1.4531521
    %v1841 = vadd.f32 %v1838, -1.4531521
    %v1842 = vmul.f32 %v1839, %v1831
    %v1843 = vmul.f32 %v1840, %v1833
    %v1844 = vmul.f32 %v1841, %v1835
    %v1845 = vadd.f32 %v1842, 1.4214138
    %v1846 = vadd.f32 %v1843, 1.4214138
    %v1847 = vadd.f32 %v1844, 1.4214138
    %v1848 = vmul.f32 %v1845, %v1831
    %v1849 = vmul.f32 %v1846, %v1833
    %v1850 = vmul.f32 %v1847, %v1835
    %v1851 = vadd.f32 %v1848, -0.28449672
    %v1852 = vadd.f32 %v1849, -0.28449672
    %v1853 = vadd.f32 %v1850, -0.28449672
    %v1854 = vmul.f32 %v1851, %v1831
    %v1855 = vmul.f32 %v1852, %v1833
    %v1856 = vmul.f32 %v1853, %v1835
    %v1857 = vadd.f32 %v1854, 0.2548296
    %v1858 = vadd.f32 %v1855, 0.2548296
    %v1859 = vadd.f32 %v1856, 0.2548296
    %v1860 = vmul.f32 %v1857, %v1831
    %v1861 = vmul.f32 %v1858, %v1833
    %v1862 = vmul.f32 %v1859, %v1835
    %v1863 = vsub.f32 0.0, %v1821
    %v1864 = vsub.f32 0.0, %v1822
    %v1865 = vsub.f32 0.0, %v1823
    %v1866 = vmul.f32 %v1863, %v1821
    %v1867 = vmul.f32 %v1864, %v1822
    %v1868 = vmul.f32 %v1865, %v1823
    %v1869 = vmul.f32 %v1866, 1.442695
    %v1870 = vpow.pop %v1869
    %v1871 = vmul.f32 %v1867, 1.442695
    %v1872 = vpow.pop %v1871
    %v1873 = vmul.f32 %v1868, 1.442695
    %v1874 = vpow.pop %v1873
    %v1875 = vmul.f32 %v1860, %v1870
    %v1876 = vmul.f32 %v1861, %v1872
    %v1877 = vmul.f32 %v1862, %v1874
    %v1878 = vsub.f32 1.0, %v1875
    %v1879 = vsub.f32 1.0, %v1876
    %v1880 = vsub.f32 1.0, %v1877
    %v1881 = vmul.f32 %v1818, %v1878
    %v1882 = vmul.f32 %v1819, %v1879
    %v1883 = vmul.f32 %v1820, %v1880
    %v1884 = vadd.f32 %v1881, 1.0
    %v1885 = vadd.f32 %v1882, 1.0
    %v1886 = vadd.f32 %v1883, 1.0
    %v1887 = vmul.f32 %v1809, %v1884
    %v1888 = vmul.f32 %v1810, %v1885
    %v1889 = vmul.f32 %v1811, %v1886
    %v1890 = vld [vmem:[%s14] sm:$0xff]
    %v1891 = vld [vmem:[%s14 + $0x8] sm:$0xff]
    %v1892 = vld [vmem:[%s14 + $0x10] sm:$0xff]
    %v1893 = vld [vmem:[%s14 + $0x18] sm:$0xff]
    %v1894 = vld [vmem:[%s14 + $0x20] sm:$0xff]
    %v1895 = vld [vmem:[%s14 + $0x28] sm:$0xff]
    %v1896 = vld [vmem:[%s14 + $0x30] sm:$0xff]
    %v1897 = vld [vmem:[%s14 + $0x38] sm:$0xff]
    %v1898 = vld [vmem:[%s15] sm:$0x1]
    %v1900 = vlaneseq
    %v1901 = vshrl.u32 %v1900, 7
    %v1902 = vsub.s32 0, %v1901
    %v1903 = vrot.slane %v1898, %v1902
    %v1906 = vsel %vm103, %v1887, 0
    %v1909 = vsel %vm103, %v1888, 0
    %v1912 = vsel %vm103, %v1889, 0
    %1914 = vmatprep.subr.mxu0 0.0
    %1915 = vmatpush1.msra.mxu0 0.0
    %1916 = vmatprep.subr.mxu0 0.0
    %1917 = vmatpush1.msra.mxu0 0.0
    %1918 = vmatprep.subr.mxu0 0.0
    %1919 = vmatpush1.msra.mxu0 0.0
    %1920 = vmatprep.subr.mxu0 0.0
    %1921 = vmatpush1.msra.mxu0 0.0
    %1922 = vmatprep.subr.mxu0 0.0
    %1923 = vmatpush1.msra.mxu0 0.0
    %1924 = vmatprep.subr.mxu0 0.0
    %1925 = vmatpush1.msra.mxu0 0.0
    %1926 = vmatprep.subr.mxu0 0.0
    %1927 = vmatpush1.msra.mxu0 0.0
    %1928 = vmatprep.subr.mxu0 0.0
    %1929 = vmatpush1.msra.mxu0 0.0
    %1930 = vmatprep.subr.mxu0 0.0
    %1931 = vmatpush1.msra.mxu0 %v1897
    %1932 = vmatprep.subr.mxu0 0.0
    %1933 = vmatpush1.msra.mxu0 %v1896
    %1934 = vmatprep.subr.mxu0 0.0
    %1935 = vmatpush1.msra.mxu0 %v1895
    %1936 = vmatprep.subr.mxu0 0.0
    %1937 = vmatpush1.msra.mxu0 %v1894
    %1938 = vmatprep.subr.mxu0 0.0
    %1939 = vmatpush1.msra.mxu0 %v1893
    %1940 = vmatprep.subr.mxu0 0.0
    %1941 = vmatpush1.msra.mxu0 %v1892
    %1942 = vmatprep.subr.mxu0 0.0
    %1943 = vmatpush1.msra.mxu0 %v1891
    %1944 = vmatprep.subr.mxu0 0.0
    %1945 = vmatpush1.msra.mxu0 %v1890
    %1946 = vmatprep.subr.mxu0 0.0
    %1947 = vmatpush2.msra.mxu0 0.0
    %1948 = vmatprep.subr.mxu0 0.0
    %1949 = vmatpush2.msra.mxu0 0.0
    %1950 = vmatprep.subr.mxu0 0.0
    %1951 = vmatpush2.msra.mxu0 0.0
    %1952 = vmatprep.subr.mxu0 0.0
    %1953 = vmatpush2.msra.mxu0 0.0
    %1954 = vmatprep.subr.mxu0 0.0
    %1955 = vmatpush2.msra.mxu0 0.0
    %1956 = vmatprep.subr.mxu0 0.0
    %1957 = vmatpush2.msra.mxu0 0.0
    %1958 = vmatprep.subr.mxu0 0.0
    %1959 = vmatpush2.msra.mxu0 0.0
    %1960 = vmatprep.subr.mxu0 0.0
    %1961 = vmatpush2.msra.mxu0 0.0
    %1962 = vmatprep.subr.mxu0 0.0
    %1963 = vmatpush2.msra.mxu0 0.0
    %1964 = vmatprep.subr.mxu0 0.0
    %1965 = vmatpush2.msra.mxu0 0.0
    %1966 = vmatprep.subr.mxu0 0.0
    %1967 = vmatpush2.msra.mxu0 0.0
    %1968 = vmatprep.subr.mxu0 0.0
    %1969 = vmatpush2.msra.mxu0 0.0
    %1970 = vmatprep.subr.mxu0 0.0
    %1971 = vmatpush2.msra.mxu0 0.0
    %1972 = vmatprep.subr.mxu0 0.0
    %1973 = vmatpush2.msra.mxu0 0.0
    %1974 = vmatprep.subr.mxu0 0.0
    %1975 = vmatpush2.msra.mxu0 0.0
    %1976 = vmatprep.subr.mxu0 0.0
    %1977 = vmatpush2.msra.mxu0 0.0
    %1978 = vmatprep.mubr.f32.mxu0 0.0
    %1979 = vmatmul.mubr.f32.gmra.mxu0 %v1906
    %v1980 = vpop.f32.mrf.mxu0
    %v1981 = vadd.f32 %v1903, %v1980
    %v1982 = vpop.f32.mrf.mxu0
    %1983 = vmatprep.mubr.f32.mxu0 0.0
    %1984 = vmatmul.mubr.f32.gmra.mxu0 %v1909
    %v1985 = vpop.f32.mrf.mxu0
    %v1986 = vadd.f32 %v1903, %v1985
    %v1987 = vpop.f32.mrf.mxu0
    %1988 = vmatprep.mubr.f32.mxu0 0.0
    %1989 = vmatmul.mubr.f32.gmra.mxu0 %v1912
    %v1990 = vpop.f32.mrf.mxu0
    %v1991 = vadd.f32 %v1903, %v1990
    %v1992 = vpop.f32.mrf.mxu0
    %1993 = vdwg.mxu0
    %v1994 = vadd.f32 %v1706, %v1981
    %v1995 = vadd.f32 %v1707, %v1986
    %v1996 = vadd.f32 %v1708, %v1991
    %v1997 = vld [vmem:[%s16] sm:$0x1]
    %v1998 = vld [vmem:[%s17] sm:$0x1]
    %v1999 = vsel %vm207, %v1994, 0.0
    %2000 = vadd.xlane.f32.xlu0 %v1999
    %v2001 = vpop.xlane.xlu0 %2000
    %v2002 = vsel %vm207, %v1995, 0.0
    %2003 = vadd.xlane.f32.xlu0 %v2002
    %v2004 = vpop.xlane.xlu0 %2003
    %v2005 = vsel %vm1656, %v1996, 0.0
    %2006 = vadd.xlane.f32.xlu0 %v2005
    %v2007 = vpop.xlane.xlu0 %2006
    %v2008 = vmul.f32 %v2001, %v1660
    %v2009 = vmul.f32 %v2004, %v1660
    %v2010 = vmul.f32 %v2007, %v1660
    %v2011 = vsub.f32 %v1994, %v2008
    %v2012 = vsub.f32 %v1995, %v2009
    %v2013 = vsub.f32 %v1996, %v2010
    %v2014 = vmul.f32 %v2011, %v2011
    %v2015 = vmul.f32 %v2012, %v2012
    %v2016 = vmul.f32 %v2013, %v2013
    %v2017 = vsel %vm207, %v2014, 0.0
    %2018 = vadd.xlane.f32.xlu0 %v2017
    %v2019 = vpop.xlane.xlu0 %2018
    %v2020 = vsel %vm207, %v2015, 0.0
    %2021 = vadd.xlane.f32.xlu0 %v2020
    %v2022 = vpop.xlane.xlu0 %2021
    %v2023 = vsel %vm1656, %v2016, 0.0
    %2024 = vadd.xlane.f32.xlu0 %v2023
    %v2025 = vpop.xlane.xlu0 %2024
    %v2026 = vmul.f32 %v2019, %v1660
    %v2027 = vmul.f32 %v2022, %v1660
    %v2028 = vmul.f32 %v2025, %v1660
    %v2029 = vadd.f32 %v2026, 1e-05
    %v2030 = vadd.f32 %v2027, 1e-05
    %v2031 = vadd.f32 %v2028, 1e-05
    %v2032 = vrsqrt.pop %v2029
    %v2033 = vrsqrt.pop %v2030
    %v2034 = vrsqrt.pop %v2031
    %v2035 = vmul.f32 %v2011, %v2032
    %v2036 = vmul.f32 %v2012, %v2033
    %v2037 = vmul.f32 %v2013, %v2034
    %v2039 = vlaneseq
    %v2040 = vshrl.u32 %v2039, 7
    %v2041 = vsub.s32 0, %v2040
    %v2042 = vrot.slane %v1997, %v2041
    %v2044 = vmul.f32 %v2035, %v2042
    %v2045 = vmul.f32 %v2036, %v2042
    %v2046 = vmul.f32 %v2037, %v2042
    %v2048 = vlaneseq
    %v2049 = vshrl.u32 %v2048, 7
    %v2050 = vsub.s32 0, %v2049
    %v2051 = vrot.slane %v1998, %v2050
    %v2053 = vadd.f32 %v2044, %v2051
    %v2054 = vadd.f32 %v2045, %v2051
    %v2055 = vadd.f32 %v2046, %v2051
    %s2056 = scalar_lea.vmem %s6, 32
    %v2057 = vld [vmem:[%s2056] sm:$0xff]
    %v2058 = vld [vmem:[%s2056 + $0x8] sm:$0xff]
    %v2059 = vld [vmem:[%s2056 + $0x10] sm:$0xff]
    %v2060 = vld [vmem:[%s2056 + $0x18] sm:$0xff]
    %s2061 = scalar_lea.vmem %s7, 1
    %v2062 = vld [vmem:[%s2061] sm:$0x1]
    %v2064 = vlaneseq
    %v2065 = vshrl.u32 %v2064, 7
    %v2066 = vsub.s32 0, %v2065
    %v2067 = vrot.slane %v2062, %v2066
    %v2070 = vsel %vm207, %v2053, 0
    %v2073 = vsel %vm207, %v2054, 0
    %v2076 = vsel %vm207, %v2055, 0
    %2078 = vmatprep.subr.mxu0 0.0
    %2079 = vmatpush1.msra.mxu0 0.0
    %2080 = vmatprep.subr.mxu0 0.0
    %2081 = vmatpush1.msra.mxu0 0.0
    %2082 = vmatprep.subr.mxu0 0.0
    %2083 = vmatpush1.msra.mxu0 0.0
    %2084 = vmatprep.subr.mxu0 0.0
    %2085 = vmatpush1.msra.mxu0 0.0
    %2086 = vmatprep.subr.mxu0 0.0
    %2087 = vmatpush1.msra.mxu0 0.0
    %2088 = vmatprep.subr.mxu0 0.0
    %2089 = vmatpush1.msra.mxu0 0.0
    %2090 = vmatprep.subr.mxu0 0.0
    %2091 = vmatpush1.msra.mxu0 0.0
    %2092 = vmatprep.subr.mxu0 0.0
    %2093 = vmatpush1.msra.mxu0 0.0
    %2094 = vmatprep.subr.mxu0 0.0
    %2095 = vmatpush1.msra.mxu0 0.0
    %2096 = vmatprep.subr.mxu0 0.0
    %2097 = vmatpush1.msra.mxu0 0.0
    %2098 = vmatprep.subr.mxu0 0.0
    %2099 = vmatpush1.msra.mxu0 0.0
    %2100 = vmatprep.subr.mxu0 0.0
    %2101 = vmatpush1.msra.mxu0 0.0
    %2102 = vmatprep.subr.mxu0 0.0
    %2103 = vmatpush1.msra.mxu0 %v2060
    %2104 = vmatprep.subr.mxu0 0.0
    %2105 = vmatpush1.msra.mxu0 %v2059
    %2106 = vmatprep.subr.mxu0 0.0
    %2107 = vmatpush1.msra.mxu0 %v2058
    %2108 = vmatprep.subr.mxu0 0.0
    %2109 = vmatpush1.msra.mxu0 %v2057
    %2110 = vmatprep.subr.mxu0 0.0
    %2111 = vmatpush2.msra.mxu0 0.0
    %2112 = vmatprep.subr.mxu0 0.0
    %2113 = vmatpush2.msra.mxu0 0.0
    %2114 = vmatprep.subr.mxu0 0.0
    %2115 = vmatpush2.msra.mxu0 0.0
    %2116 = vmatprep.subr.mxu0 0.0
    %2117 = vmatpush2.msra.mxu0 0.0
    %2118 = vmatprep.subr.mxu0 0.0
    %2119 = vmatpush2.msra.mxu0 0.0
    %2120 = vmatprep.subr.mxu0 0.0
    %2121 = vmatpush2.msra.mxu0 0.0
    %2122 = vmatprep.subr.mxu0 0.0
    %2123 = vmatpush2.msra.mxu0 0.0
    %2124 = vmatprep.subr.mxu0 0.0
    %2125 = vmatpush2.msra.mxu0 0.0
    %2126 = vmatprep.subr.mxu0 0.0
    %2127 = vmatpush2.msra.mxu0 0.0
    %2128 = vmatprep.subr.mxu0 0.0
    %2129 = vmatpush2.msra.mxu0 0.0
    %2130 = vmatprep.subr.mxu0 0.0
    %2131 = vmatpush2.msra.mxu0 0.0
    %2132 = vmatprep.subr.mxu0 0.0
    %2133 = vmatpush2.msra.mxu0 0.0
    %2134 = vmatprep.subr.mxu0 0.0
    %2135 = vmatpush2.msra.mxu0 0.0
    %2136 = vmatprep.subr.mxu0 0.0
    %2137 = vmatpush2.msra.mxu0 0.0
    %2138 = vmatprep.subr.mxu0 0.0
    %2139 = vmatpush2.msra.mxu0 0.0
    %2140 = vmatprep.subr.mxu0 0.0
    %2141 = vmatpush2.msra.mxu0 0.0
    %2142 = vmatprep.mubr.f32.mxu0 0.0
    %2143 = vmatmul.mubr.f32.gmra.mxu0 %v2070
    %v2144 = vpop.f32.mrf.mxu0
    %v2145 = vadd.f32 %v2067, %v2144
    %v2146 = vpop.f32.mrf.mxu0
    %2147 = vmatprep.mubr.f32.mxu0 0.0
    %2148 = vmatmul.mubr.f32.gmra.mxu0 %v2073
    %v2149 = vpop.f32.mrf.mxu0
    %v2150 = vadd.f32 %v2067, %v2149
    %v2151 = vpop.f32.mrf.mxu0
    %2152 = vmatprep.mubr.f32.mxu0 0.0
    %2153 = vmatmul.mubr.f32.gmra.mxu0 %v2076
    %v2154 = vpop.f32.mrf.mxu0
    %v2155 = vadd.f32 %v2067, %v2154
    %v2156 = vpop.f32.mrf.mxu0
    %2157 = vdwg.mxu0
    %2161 = vrot.lane.b32.xlu0 %v2145, 96
    %v2162 = vpop.permute.xlu0 %2161
    %2163 = vrot.lane.b32.xlu0 %v2150, 96
    %v2164 = vpop.permute.xlu0 %2163
    %2165 = vrot.lane.b32.xlu0 %v2155, 96
    %v2166 = vpop.permute.xlu0 %2165
    %v2167 = vsel %vm306, %v2145, 0
    %v2169 = vsel %vm306, %v2150, 0
    %v2171 = vsel %vm306, %v2155, 0
    %v2173 = vsel %vm306, %v2162, 0
    %v2175 = vsel %vm306, %v2164, 0
    %v2177 = vsel %vm306, %v2166, 0
    %2179 = vmatprep.subr.mxu0 0.0
    %2180 = vmatpush1.xpose.msra.mxu0 0.0
    %2181 = vmatprep.subr.mxu0 0.0
    %2182 = vmatpush1.xpose.msra.mxu0 0.0
    %2183 = vmatprep.subr.mxu0 0.0
    %2184 = vmatpush1.xpose.msra.mxu0 0.0
    %2185 = vmatprep.subr.mxu0 0.0
    %2186 = vmatpush1.xpose.msra.mxu0 0.0
    %2187 = vmatprep.subr.mxu0 0.0
    %2188 = vmatpush1.xpose.msra.mxu0 0.0
    %2189 = vmatprep.subr.mxu0 0.0
    %2190 = vmatpush1.xpose.msra.mxu0 0.0
    %2191 = vmatprep.subr.mxu0 0.0
    %2192 = vmatpush1.xpose.msra.mxu0 0.0
    %2193 = vmatprep.subr.mxu0 0.0
    %2194 = vmatpush1.xpose.msra.mxu0 0.0
    %2195 = vmatprep.subr.mxu0 0.0
    %2196 = vmatpush1.xpose.msra.mxu0 0.0
    %2197 = vmatprep.subr.mxu0 0.0
    %2198 = vmatpush1.xpose.msra.mxu0 0.0
    %2199 = vmatprep.subr.mxu0 0.0
    %2200 = vmatpush1.xpose.msra.mxu0 0.0
    %2201 = vmatprep.subr.mxu0 0.0
    %2202 = vmatpush1.xpose.msra.mxu0 0.0
    %2203 = vmatprep.subr.mxu0 0.0
    %2204 = vmatpush1.xpose.msra.mxu0 0.0
    %2205 = vmatprep.subr.mxu0 0.0
    %2206 = vmatpush1.xpose.msra.mxu0 %v2177
    %2207 = vmatprep.subr.mxu0 0.0
    %2208 = vmatpush1.xpose.msra.mxu0 %v2175
    %2209 = vmatprep.subr.mxu0 0.0
    %2210 = vmatpush1.xpose.msra.mxu0 %v2173
    %2211 = vmatprep.subr.mxu0 0.0
    %2212 = vmatpush2.xpose.msra.mxu0 0.0
    %2213 = vmatprep.subr.mxu0 0.0
    %2214 = vmatpush2.xpose.msra.mxu0 0.0
    %2215 = vmatprep.subr.mxu0 0.0
    %2216 = vmatpush2.xpose.msra.mxu0 0.0
    %2217 = vmatprep.subr.mxu0 0.0
    %2218 = vmatpush2.xpose.msra.mxu0 0.0
    %2219 = vmatprep.subr.mxu0 0.0
    %2220 = vmatpush2.xpose.msra.mxu0 0.0
    %2221 = vmatprep.subr.mxu0 0.0
    %2222 = vmatpush2.xpose.msra.mxu0 0.0
    %2223 = vmatprep.subr.mxu0 0.0
    %2224 = vmatpush2.xpose.msra.mxu0 0.0
    %2225 = vmatprep.subr.mxu0 0.0
    %2226 = vmatpush2.xpose.msra.mxu0 0.0
    %2227 = vmatprep.subr.mxu0 0.0
    %2228 = vmatpush2.xpose.msra.mxu0 0.0
    %2229 = vmatprep.subr.mxu0 0.0
    %2230 = vmatpush2.xpose.msra.mxu0 0.0
    %2231 = vmatprep.subr.mxu0 0.0
    %2232 = vmatpush2.xpose.msra.mxu0 0.0
    %2233 = vmatprep.subr.mxu0 0.0
    %2234 = vmatpush2.xpose.msra.mxu0 0.0
    %2235 = vmatprep.subr.mxu0 0.0
    %2236 = vmatpush2.xpose.msra.mxu0 0.0
    %2237 = vmatprep.subr.mxu0 0.0
    %2238 = vmatpush2.xpose.msra.mxu0 0.0
    %2239 = vmatprep.subr.mxu0 0.0
    %2240 = vmatpush2.xpose.msra.mxu0 0.0
    %2241 = vmatprep.subr.mxu0 0.0
    %2242 = vmatpush2.xpose.msra.mxu0 0.0
    %2243 = vmatprep.mubr.f32.mxu0 0.0
    %2244 = vmatmul.mubr.f32.gmra.mxu0 %v2167
    %v2245 = vpop.f32.mrf.mxu0
    %v2246 = vadd.f32 0.0, %v2245
    %v2247 = vpop.f32.mrf.mxu0
    %2248 = vmatprep.mubr.f32.mxu0 0.0
    %2249 = vmatmul.mubr.f32.gmra.mxu0 %v2169
    %v2250 = vpop.f32.mrf.mxu0
    %v2251 = vadd.f32 0.0, %v2250
    %v2252 = vpop.f32.mrf.mxu0
    %2253 = vmatprep.mubr.f32.mxu0 0.0
    %2254 = vmatmul.mubr.f32.gmra.mxu0 %v2171
    %v2255 = vpop.f32.mrf.mxu0
    %v2256 = vadd.f32 0.0, %v2255
    %v2257 = vpop.f32.mrf.mxu0
    %2258 = vdwg.mxu0
    %v2259 = vmul.f32 %v2246, 0.35355338
    %v2260 = vmul.f32 %v2251, 0.35355338
    %v2261 = vmul.f32 %v2256, 0.35355338
    %v2262 = vadd.f32 %v2259, %v193
    %v2263 = vadd.f32 %v2260, %v194
    %v2264 = vadd.f32 %v2261, %v195
    %v2265 = vsel %vm405, %v2262, -inf
    %2266 = vmax.xlane.f32.xlu0 %v2265
    %v2267 = vpop.xlane.xlu0 %2266
    %v2268 = vsel %vm405, %v2263, -inf
    %2269 = vmax.xlane.f32.xlu0 %v2268
    %v2270 = vpop.xlane.xlu0 %2269
    %v2271 = vsel %vm412, %v2264, -inf
    %2272 = vmax.xlane.f32.xlu0 %v2271
    %v2273 = vpop.xlane.xlu0 %2272
    %v2274 = vsub.f32 %v2262, %v2267
    %v2275 = vsub.f32 %v2263, %v2270
    %v2276 = vsub.f32 %v2264, %v2273
    %v2277 = vmul.f32 %v2274, 1.442695
    %v2278 = vpow.pop %v2277
    %v2279 = vmul.f32 %v2275, 1.442695
    %v2280 = vpow.pop %v2279
    %v2281 = vmul.f32 %v2276, 1.442695
    %v2282 = vpow.pop %v2281
    %v2283 = vsel %vm405, %v2278, 0.0
    %2284 = vadd.xlane.f32.xlu0 %v2283
    %v2285 = vpop.xlane.xlu0 %2284
    %v2286 = vsel %vm405, %v2280, 0.0
    %2287 = vadd.xlane.f32.xlu0 %v2286
    %v2288 = vpop.xlane.xlu0 %2287
    %v2289 = vsel %vm412, %v2282, 0.0
    %2290 = vadd.xlane.f32.xlu0 %v2289
    %v2291 = vpop.xlane.xlu0 %2290
    %v2292 = vrcp.pop %v2285
    %v2293 = vrcp.pop %v2288
    %v2294 = vrcp.pop %v2291
    %v2295 = vmul.f32 %v2278, %v2292
    %v2296 = vmul.f32 %v2280, %v2293
    %v2297 = vmul.f32 %v2282, %v2294
    %2298 = vrot.lane.b32.xlu0 %v2145, 64
    %v2299 = vpop.permute.xlu0 %2298
    %2300 = vrot.lane.b32.xlu0 %v2150, 64
    %v2301 = vpop.permute.xlu0 %2300
    %2302 = vrot.lane.b32.xlu0 %v2155, 64
    %v2303 = vpop.permute.xlu0 %2302
    %v2307 = vsel %vm405, %v2295, 0
    %v2310 = vsel %vm405, %v2296, 0
    %v2313 = vsel %vm405, %v2297, 0
    %v2315 = vsel %vm457, %v2303, 0
    %2317 = vmatprep.subr.mxu0 0.0
    %2318 = vmatpush1.msra.mxu0 0.0
    %2319 = vmatprep.subr.mxu0 0.0
    %2320 = vmatpush1.msra.mxu0 0.0
    %2321 = vmatprep.subr.mxu0 0.0
    %2322 = vmatpush1.msra.mxu0 0.0
    %2323 = vmatprep.subr.mxu0 0.0
    %2324 = vmatpush1.msra.mxu0 0.0
    %2325 = vmatprep.subr.mxu0 0.0
    %2326 = vmatpush1.msra.mxu0 0.0
    %2327 = vmatprep.subr.mxu0 0.0
    %2328 = vmatpush1.msra.mxu0 0.0
    %2329 = vmatprep.subr.mxu0 0.0
    %2330 = vmatpush1.msra.mxu0 0.0
    %2331 = vmatprep.subr.mxu0 0.0
    %2332 = vmatpush1.msra.mxu0 0.0
    %2333 = vmatprep.subr.mxu0 0.0
    %2334 = vmatpush1.msra.mxu0 0.0
    %2335 = vmatprep.subr.mxu0 0.0
    %2336 = vmatpush1.msra.mxu0 0.0
    %2337 = vmatprep.subr.mxu0 0.0
    %2338 = vmatpush1.msra.mxu0 0.0
    %2339 = vmatprep.subr.mxu0 0.0
    %2340 = vmatpush1.msra.mxu0 0.0
    %2341 = vmatprep.subr.mxu0 0.0
    %2342 = vmatpush1.msra.mxu0 0.0
    %2343 = vmatprep.subr.mxu0 0.0
    %2344 = vmatpush1.msra.mxu0 %v2315
    %2345 = vmatprep.subr.mxu0 0.0
    %2346 = vmatpush1.msra.mxu0 %v2301
    %2347 = vmatprep.subr.mxu0 0.0
    %2348 = vmatpush1.msra.mxu0 %v2299
    %2349 = vmatprep.subr.mxu0 0.0
    %2350 = vmatpush2.msra.mxu0 0.0
    %2351 = vmatprep.subr.mxu0 0.0
    %2352 = vmatpush2.msra.mxu0 0.0
    %2353 = vmatprep.subr.mxu0 0.0
    %2354 = vmatpush2.msra.mxu0 0.0
    %2355 = vmatprep.subr.mxu0 0.0
    %2356 = vmatpush2.msra.mxu0 0.0
    %2357 = vmatprep.subr.mxu0 0.0
    %2358 = vmatpush2.msra.mxu0 0.0
    %2359 = vmatprep.subr.mxu0 0.0
    %2360 = vmatpush2.msra.mxu0 0.0
    %2361 = vmatprep.subr.mxu0 0.0
    %2362 = vmatpush2.msra.mxu0 0.0
    %2363 = vmatprep.subr.mxu0 0.0
    %2364 = vmatpush2.msra.mxu0 0.0
    %2365 = vmatprep.subr.mxu0 0.0
    %2366 = vmatpush2.msra.mxu0 0.0
    %2367 = vmatprep.subr.mxu0 0.0
    %2368 = vmatpush2.msra.mxu0 0.0
    %2369 = vmatprep.subr.mxu0 0.0
    %2370 = vmatpush2.msra.mxu0 0.0
    %2371 = vmatprep.subr.mxu0 0.0
    %2372 = vmatpush2.msra.mxu0 0.0
    %2373 = vmatprep.subr.mxu0 0.0
    %2374 = vmatpush2.msra.mxu0 0.0
    %2375 = vmatprep.subr.mxu0 0.0
    %2376 = vmatpush2.msra.mxu0 0.0
    %2377 = vmatprep.subr.mxu0 0.0
    %2378 = vmatpush2.msra.mxu0 0.0
    %2379 = vmatprep.subr.mxu0 0.0
    %2380 = vmatpush2.msra.mxu0 0.0
    %2381 = vmatprep.mubr.f32.mxu0 0.0
    %2382 = vmatmul.mubr.f32.gmra.mxu0 %v2307
    %v2383 = vpop.f32.mrf.mxu0
    %v2384 = vadd.f32 0.0, %v2383
    %v2385 = vpop.f32.mrf.mxu0
    %2386 = vmatprep.mubr.f32.mxu0 0.0
    %2387 = vmatmul.mubr.f32.gmra.mxu0 %v2310
    %v2388 = vpop.f32.mrf.mxu0
    %v2389 = vadd.f32 0.0, %v2388
    %v2390 = vpop.f32.mrf.mxu0
    %2391 = vmatprep.mubr.f32.mxu0 0.0
    %2392 = vmatmul.mubr.f32.gmra.mxu0 %v2313
    %v2393 = vpop.f32.mrf.mxu0
    %v2394 = vadd.f32 0.0, %v2393
    %v2395 = vpop.f32.mrf.mxu0
    %2396 = vdwg.mxu0
    %s2397 = scalar_lea.vmem %s8, 32
    %v2398 = vld [vmem:[%s2397] sm:$0xff]
    %2399 = vrot.lane.b32.xlu0 %v2145, 120
    %v2400 = vpop.permute.xlu0 %2399
    %2401 = vrot.lane.b32.xlu0 %v2150, 120
    %v2402 = vpop.permute.xlu0 %2401
    %2403 = vrot.lane.b32.xlu0 %v2155, 120
    %v2404 = vpop.permute.xlu0 %2403
    %2405 = vrot.lane.b32.xlu0 %v2145, 88
    %v2406 = vpop.permute.xlu0 %2405
    %2407 = vrot.lane.b32.xlu0 %v2150, 88
    %v2408 = vpop.permute.xlu0 %2407
    %2409 = vrot.lane.b32.xlu0 %v2155, 88
    %v2410 = vpop.permute.xlu0 %2409
    %v2411 = vsel %vm306, %v2400, 0
    %v2413 = vsel %vm306, %v2402, 0
    %v2415 = vsel %vm306, %v2404, 0
    %v2417 = vsel %vm306, %v2406, 0
    %v2419 = vsel %vm306, %v2408, 0
    %v2421 = vsel %vm306, %v2410, 0
    %2423 = vmatprep.subr.mxu0 0.0
    %2424 = vmatpush1.xpose.msra.mxu0 0.0
    %2425 = vmatprep.subr.mxu0 0.0
    %2426 = vmatpush1.xpose.msra.mxu0 0.0
    %2427 = vmatprep.subr.mxu0 0.0
    %2428 = vmatpush1.xpose.msra.mxu0 0.0
    %2429 = vmatprep.subr.mxu0 0.0
    %2430 = vmatpush1.xpose.msra.mxu0 0.0
    %2431 = vmatprep.subr.mxu0 0.0
    %2432 = vmatpush1.xpose.msra.mxu0 0.0
    %2433 = vmatprep.subr.mxu0 0.0
    %2434 = vmatpush1.xpose.msra.mxu0 0.0
    %2435 = vmatprep.subr.mxu0 0.0
    %2436 = vmatpush1.xpose.msra.mxu0 0.0
    %2437 = vmatprep.subr.mxu0 0.0
    %2438 = vmatpush1.xpose.msra.mxu0 0.0
    %2439 = vmatprep.subr.mxu0 0.0
    %2440 = vmatpush1.xpose.msra.mxu0 0.0
    %2441 = vmatprep.subr.mxu0 0.0
    %2442 = vmatpush1.xpose.msra.mxu0 0.0
    %2443 = vmatprep.subr.mxu0 0.0
    %2444 = vmatpush1.xpose.msra.mxu0 0.0
    %2445 = vmatprep.subr.mxu0 0.0
    %2446 = vmatpush1.xpose.msra.mxu0 0.0
    %2447 = vmatprep.subr.mxu0 0.0
    %2448 = vmatpush1.xpose.msra.mxu0 0.0
    %2449 = vmatprep.subr.mxu0 0.0
    %2450 = vmatpush1.xpose.msra.mxu0 %v2421
    %2451 = vmatprep.subr.mxu0 0.0
    %2452 = vmatpush1.xpose.msra.mxu0 %v2419
    %2453 = vmatprep.subr.mxu0 0.0
    %2454 = vmatpush1.xpose.msra.mxu0 %v2417
    %2455 = vmatprep.subr.mxu0 0.0
    %2456 = vmatpush2.xpose.msra.mxu0 0.0
    %2457 = vmatprep.subr.mxu0 0.0
    %2458 = vmatpush2.xpose.msra.mxu0 0.0
    %2459 = vmatprep.subr.mxu0 0.0
    %2460 = vmatpush2.xpose.msra.mxu0 0.0
    %2461 = vmatprep.subr.mxu0 0.0
    %2462 = vmatpush2.xpose.msra.mxu0 0.0
    %2463 = vmatprep.subr.mxu0 0.0
    %2464 = vmatpush2.xpose.msra.mxu0 0.0
    %2465 = vmatprep.subr.mxu0 0.0
    %2466 = vmatpush2.xpose.msra.mxu0 0.0
    %2467 = vmatprep.subr.mxu0 0.0
    %2468 = vmatpush2.xpose.msra.mxu0 0.0
    %2469 = vmatprep.subr.mxu0 0.0
    %2470 = vmatpush2.xpose.msra.mxu0 0.0
    %2471 = vmatprep.subr.mxu0 0.0
    %2472 = vmatpush2.xpose.msra.mxu0 0.0
    %2473 = vmatprep.subr.mxu0 0.0
    %2474 = vmatpush2.xpose.msra.mxu0 0.0
    %2475 = vmatprep.subr.mxu0 0.0
    %2476 = vmatpush2.xpose.msra.mxu0 0.0
    %2477 = vmatprep.subr.mxu0 0.0
    %2478 = vmatpush2.xpose.msra.mxu0 0.0
    %2479 = vmatprep.subr.mxu0 0.0
    %2480 = vmatpush2.xpose.msra.mxu0 0.0
    %2481 = vmatprep.subr.mxu0 0.0
    %2482 = vmatpush2.xpose.msra.mxu0 0.0
    %2483 = vmatprep.subr.mxu0 0.0
    %2484 = vmatpush2.xpose.msra.mxu0 0.0
    %2485 = vmatprep.subr.mxu0 0.0
    %2486 = vmatpush2.xpose.msra.mxu0 0.0
    %2487 = vmatprep.mubr.f32.mxu0 0.0
    %2488 = vmatmul.mubr.f32.gmra.mxu0 %v2411
    %v2489 = vpop.f32.mrf.mxu0
    %v2490 = vadd.f32 0.0, %v2489
    %v2491 = vpop.f32.mrf.mxu0
    %2492 = vmatprep.mubr.f32.mxu0 0.0
    %2493 = vmatmul.mubr.f32.gmra.mxu0 %v2413
    %v2494 = vpop.f32.mrf.mxu0
    %v2495 = vadd.f32 0.0, %v2494
    %v2496 = vpop.f32.mrf.mxu0
    %2497 = vmatprep.mubr.f32.mxu0 0.0
    %2498 = vmatmul.mubr.f32.gmra.mxu0 %v2415
    %v2499 = vpop.f32.mrf.mxu0
    %v2500 = vadd.f32 0.0, %v2499
    %v2501 = vpop.f32.mrf.mxu0
    %2502 = vdwg.mxu0
    %v2503 = vmul.f32 %v2490, 0.35355338
    %v2504 = vmul.f32 %v2495, 0.35355338
    %v2505 = vmul.f32 %v2500, 0.35355338
    %v2506 = vadd.f32 %v2503, %v193
    %v2507 = vadd.f32 %v2504, %v194
    %v2508 = vadd.f32 %v2505, %v195
    %v2509 = vsel %vm405, %v2506, -inf
    %2510 = vmax.xlane.f32.xlu0 %v2509
    %v2511 = vpop.xlane.xlu0 %2510
    %v2512 = vsel %vm405, %v2507, -inf
    %2513 = vmax.xlane.f32.xlu0 %v2512
    %v2514 = vpop.xlane.xlu0 %2513
    %v2515 = vsel %vm412, %v2508, -inf
    %2516 = vmax.xlane.f32.xlu0 %v2515
    %v2517 = vpop.xlane.xlu0 %2516
    %v2518 = vsub.f32 %v2506, %v2511
    %v2519 = vsub.f32 %v2507, %v2514
    %v2520 = vsub.f32 %v2508, %v2517
    %v2521 = vmul.f32 %v2518, 1.442695
    %v2522 = vpow.pop %v2521
    %v2523 = vmul.f32 %v2519, 1.442695
    %v2524 = vpow.pop %v2523
    %v2525 = vmul.f32 %v2520, 1.442695
    %v2526 = vpow.pop %v2525
    %v2527 = vsel %vm405, %v2522, 0.0
    %2528 = vadd.xlane.f32.xlu0 %v2527
    %v2529 = vpop.xlane.xlu0 %2528
    %v2530 = vsel %vm405, %v2524, 0.0
    %2531 = vadd.xlane.f32.xlu0 %v2530
    %v2532 = vpop.xlane.xlu0 %2531
    %v2533 = vsel %vm412, %v2526, 0.0
    %2534 = vadd.xlane.f32.xlu0 %v2533
    %v2535 = vpop.xlane.xlu0 %2534
    %v2536 = vrcp.pop %v2529
    %v2537 = vrcp.pop %v2532
    %v2538 = vrcp.pop %v2535
    %v2539 = vmul.f32 %v2522, %v2536
    %v2540 = vmul.f32 %v2524, %v2537
    %v2541 = vmul.f32 %v2526, %v2538
    %2542 = vrot.lane.b32.xlu0 %v2145, 56
    %v2543 = vpop.permute.xlu0 %2542
    %2544 = vrot.lane.b32.xlu0 %v2150, 56
    %v2545 = vpop.permute.xlu0 %2544
    %2546 = vrot.lane.b32.xlu0 %v2155, 56
    %v2547 = vpop.permute.xlu0 %2546
    %v2551 = vsel %vm405, %v2539, 0
    %v2554 = vsel %vm405, %v2540, 0
    %v2557 = vsel %vm405, %v2541, 0
    %v2559 = vsel %vm457, %v2547, 0
    %2561 = vmatprep.subr.mxu0 0.0
    %2562 = vmatpush1.msra.mxu0 0.0
    %2563 = vmatprep.subr.mxu0 0.0
    %2564 = vmatpush1.msra.mxu0 0.0
    %2565 = vmatprep.subr.mxu0 0.0
    %2566 = vmatpush1.msra.mxu0 0.0
    %2567 = vmatprep.subr.mxu0 0.0
    %2568 = vmatpush1.msra.mxu0 0.0
    %2569 = vmatprep.subr.mxu0 0.0
    %2570 = vmatpush1.msra.mxu0 0.0
    %2571 = vmatprep.subr.mxu0 0.0
    %2572 = vmatpush1.msra.mxu0 0.0
    %2573 = vmatprep.subr.mxu0 0.0
    %2574 = vmatpush1.msra.mxu0 0.0
    %2575 = vmatprep.subr.mxu0 0.0
    %2576 = vmatpush1.msra.mxu0 0.0
    %2577 = vmatprep.subr.mxu0 0.0
    %2578 = vmatpush1.msra.mxu0 0.0
    %2579 = vmatprep.subr.mxu0 0.0
    %2580 = vmatpush1.msra.mxu0 0.0
    %2581 = vmatprep.subr.mxu0 0.0
    %2582 = vmatpush1.msra.mxu0 0.0
    %2583 = vmatprep.subr.mxu0 0.0
    %2584 = vmatpush1.msra.mxu0 0.0
    %2585 = vmatprep.subr.mxu0 0.0
    %2586 = vmatpush1.msra.mxu0 0.0
    %2587 = vmatprep.subr.mxu0 0.0
    %2588 = vmatpush1.msra.mxu0 %v2559
    %2589 = vmatprep.subr.mxu0 0.0
    %2590 = vmatpush1.msra.mxu0 %v2545
    %2591 = vmatprep.subr.mxu0 0.0
    %2592 = vmatpush1.msra.mxu0 %v2543
    %2593 = vmatprep.subr.mxu0 0.0
    %2594 = vmatpush2.msra.mxu0 0.0
    %2595 = vmatprep.subr.mxu0 0.0
    %2596 = vmatpush2.msra.mxu0 0.0
    %2597 = vmatprep.subr.mxu0 0.0
    %2598 = vmatpush2.msra.mxu0 0.0
    %2599 = vmatprep.subr.mxu0 0.0
    %2600 = vmatpush2.msra.mxu0 0.0
    %2601 = vmatprep.subr.mxu0 0.0
    %2602 = vmatpush2.msra.mxu0 0.0
    %2603 = vmatprep.subr.mxu0 0.0
    %2604 = vmatpush2.msra.mxu0 0.0
    %2605 = vmatprep.subr.mxu0 0.0
    %2606 = vmatpush2.msra.mxu0 0.0
    %2607 = vmatprep.subr.mxu0 0.0
    %2608 = vmatpush2.msra.mxu0 0.0
    %2609 = vmatprep.subr.mxu0 0.0
    %2610 = vmatpush2.msra.mxu0 0.0
    %2611 = vmatprep.subr.mxu0 0.0
    %2612 = vmatpush2.msra.mxu0 0.0
    %2613 = vmatprep.subr.mxu0 0.0
    %2614 = vmatpush2.msra.mxu0 0.0
    %2615 = vmatprep.subr.mxu0 0.0
    %2616 = vmatpush2.msra.mxu0 0.0
    %2617 = vmatprep.subr.mxu0 0.0
    %2618 = vmatpush2.msra.mxu0 0.0
    %2619 = vmatprep.subr.mxu0 0.0
    %2620 = vmatpush2.msra.mxu0 0.0
    %2621 = vmatprep.subr.mxu0 0.0
    %2622 = vmatpush2.msra.mxu0 0.0
    %2623 = vmatprep.subr.mxu0 0.0
    %2624 = vmatpush2.msra.mxu0 0.0
    %2625 = vmatprep.mubr.f32.mxu0 0.0
    %2626 = vmatmul.mubr.f32.gmra.mxu0 %v2551
    %v2627 = vpop.f32.mrf.mxu0
    %v2628 = vadd.f32 0.0, %v2627
    %v2629 = vpop.f32.mrf.mxu0
    %2630 = vmatprep.mubr.f32.mxu0 0.0
    %2631 = vmatmul.mubr.f32.gmra.mxu0 %v2554
    %v2632 = vpop.f32.mrf.mxu0
    %v2633 = vadd.f32 0.0, %v2632
    %v2634 = vpop.f32.mrf.mxu0
    %2635 = vmatprep.mubr.f32.mxu0 0.0
    %2636 = vmatmul.mubr.f32.gmra.mxu0 %v2557
    %v2637 = vpop.f32.mrf.mxu0
    %v2638 = vadd.f32 0.0, %v2637
    %v2639 = vpop.f32.mrf.mxu0
    %2640 = vdwg.mxu0
    %s2641 = scalar_lea.vmem %s8, 40
    %v2642 = vld [vmem:[%s2641] sm:$0xff]
    %v2644 = vsel %vm306, %v2628, 0
    %v2647 = vsel %vm306, %v2633, 0
    %v2650 = vsel %vm306, %v2638, 0
    %2652 = vmatprep.subr.mxu0 0.0
    %2653 = vmatpush1.msra.mxu0 0.0
    %2654 = vmatprep.subr.mxu0 0.0
    %2655 = vmatpush1.msra.mxu0 0.0
    %2656 = vmatprep.subr.mxu0 0.0
    %2657 = vmatpush1.msra.mxu0 0.0
    %2658 = vmatprep.subr.mxu0 0.0
    %2659 = vmatpush1.msra.mxu0 0.0
    %2660 = vmatprep.subr.mxu0 0.0
    %2661 = vmatpush1.msra.mxu0 0.0
    %2662 = vmatprep.subr.mxu0 0.0
    %2663 = vmatpush1.msra.mxu0 0.0
    %2664 = vmatprep.subr.mxu0 0.0
    %2665 = vmatpush1.msra.mxu0 0.0
    %2666 = vmatprep.subr.mxu0 0.0
    %2667 = vmatpush1.msra.mxu0 0.0
    %2668 = vmatprep.subr.mxu0 0.0
    %2669 = vmatpush1.msra.mxu0 0.0
    %2670 = vmatprep.subr.mxu0 0.0
    %2671 = vmatpush1.msra.mxu0 0.0
    %2672 = vmatprep.subr.mxu0 0.0
    %2673 = vmatpush1.msra.mxu0 0.0
    %2674 = vmatprep.subr.mxu0 0.0
    %2675 = vmatpush1.msra.mxu0 0.0
    %2676 = vmatprep.subr.mxu0 0.0
    %2677 = vmatpush1.msra.mxu0 0.0
    %2678 = vmatprep.subr.mxu0 0.0
    %2679 = vmatpush1.msra.mxu0 0.0
    %2680 = vmatprep.subr.mxu0 0.0
    %2681 = vmatpush1.msra.mxu0 0.0
    %2682 = vmatprep.subr.mxu0 0.0
    %2683 = vmatpush1.msra.mxu0 %v2642
    %2684 = vmatprep.subr.mxu0 0.0
    %2685 = vmatpush2.msra.mxu0 0.0
    %2686 = vmatprep.subr.mxu0 0.0
    %2687 = vmatpush2.msra.mxu0 0.0
    %2688 = vmatprep.subr.mxu0 0.0
    %2689 = vmatpush2.msra.mxu0 0.0
    %2690 = vmatprep.subr.mxu0 0.0
    %2691 = vmatpush2.msra.mxu0 0.0
    %2692 = vmatprep.subr.mxu0 0.0
    %2693 = vmatpush2.msra.mxu0 0.0
    %2694 = vmatprep.subr.mxu0 0.0
    %2695 = vmatpush2.msra.mxu0 0.0
    %2696 = vmatprep.subr.mxu0 0.0
    %2697 = vmatpush2.msra.mxu0 0.0
    %2698 = vmatprep.subr.mxu0 0.0
    %2699 = vmatpush2.msra.mxu0 0.0
    %2700 = vmatprep.subr.mxu0 0.0
    %2701 = vmatpush2.msra.mxu0 0.0
    %2702 = vmatprep.subr.mxu0 0.0
    %2703 = vmatpush2.msra.mxu0 0.0
    %2704 = vmatprep.subr.mxu0 0.0
    %2705 = vmatpush2.msra.mxu0 0.0
    %2706 = vmatprep.subr.mxu0 0.0
    %2707 = vmatpush2.msra.mxu0 0.0
    %2708 = vmatprep.subr.mxu0 0.0
    %2709 = vmatpush2.msra.mxu0 0.0
    %2710 = vmatprep.subr.mxu0 0.0
    %2711 = vmatpush2.msra.mxu0 0.0
    %2712 = vmatprep.subr.mxu0 0.0
    %2713 = vmatpush2.msra.mxu0 0.0
    %2714 = vmatprep.subr.mxu0 0.0
    %2715 = vmatpush2.msra.mxu0 0.0
    %2716 = vmatprep.mubr.f32.mxu0 0.0
    %2717 = vmatmul.mubr.f32.gmra.mxu0 %v2644
    %v2718 = vpop.f32.mrf.mxu0
    %v2719 = vadd.f32 0.0, %v2718
    %v2720 = vpop.f32.mrf.mxu0
    %2721 = vmatprep.mubr.f32.mxu0 0.0
    %2722 = vmatmul.mubr.f32.gmra.mxu0 %v2647
    %v2723 = vpop.f32.mrf.mxu0
    %v2724 = vadd.f32 0.0, %v2723
    %v2725 = vpop.f32.mrf.mxu0
    %2726 = vmatprep.mubr.f32.mxu0 0.0
    %2727 = vmatmul.mubr.f32.gmra.mxu0 %v2650
    %v2728 = vpop.f32.mrf.mxu0
    %v2729 = vadd.f32 0.0, %v2728
    %v2730 = vpop.f32.mrf.mxu0
    %2731 = vdwg.mxu0
    %v2733 = vsel %vm306, %v2384, 0
    %v2736 = vsel %vm306, %v2389, 0
    %v2739 = vsel %vm306, %v2394, 0
    %2741 = vmatprep.subr.mxu0 0.0
    %2742 = vmatpush1.msra.mxu0 0.0
    %2743 = vmatprep.subr.mxu0 0.0
    %2744 = vmatpush1.msra.mxu0 0.0
    %2745 = vmatprep.subr.mxu0 0.0
    %2746 = vmatpush1.msra.mxu0 0.0
    %2747 = vmatprep.subr.mxu0 0.0
    %2748 = vmatpush1.msra.mxu0 0.0
    %2749 = vmatprep.subr.mxu0 0.0
    %2750 = vmatpush1.msra.mxu0 0.0
    %2751 = vmatprep.subr.mxu0 0.0
    %2752 = vmatpush1.msra.mxu0 0.0
    %2753 = vmatprep.subr.mxu0 0.0
    %2754 = vmatpush1.msra.mxu0 0.0
    %2755 = vmatprep.subr.mxu0 0.0
    %2756 = vmatpush1.msra.mxu0 0.0
    %2757 = vmatprep.subr.mxu0 0.0
    %2758 = vmatpush1.msra.mxu0 0.0
    %2759 = vmatprep.subr.mxu0 0.0
    %2760 = vmatpush1.msra.mxu0 0.0
    %2761 = vmatprep.subr.mxu0 0.0
    %2762 = vmatpush1.msra.mxu0 0.0
    %2763 = vmatprep.subr.mxu0 0.0
    %2764 = vmatpush1.msra.mxu0 0.0
    %2765 = vmatprep.subr.mxu0 0.0
    %2766 = vmatpush1.msra.mxu0 0.0
    %2767 = vmatprep.subr.mxu0 0.0
    %2768 = vmatpush1.msra.mxu0 0.0
    %2769 = vmatprep.subr.mxu0 0.0
    %2770 = vmatpush1.msra.mxu0 0.0
    %2771 = vmatprep.subr.mxu0 0.0
    %2772 = vmatpush1.msra.mxu0 %v2398
    %2773 = vmatprep.subr.mxu0 0.0
    %2774 = vmatpush2.msra.mxu0 0.0
    %2775 = vmatprep.subr.mxu0 0.0
    %2776 = vmatpush2.msra.mxu0 0.0
    %2777 = vmatprep.subr.mxu0 0.0
    %2778 = vmatpush2.msra.mxu0 0.0
    %2779 = vmatprep.subr.mxu0 0.0
    %2780 = vmatpush2.msra.mxu0 0.0
    %2781 = vmatprep.subr.mxu0 0.0
    %2782 = vmatpush2.msra.mxu0 0.0
    %2783 = vmatprep.subr.mxu0 0.0
    %2784 = vmatpush2.msra.mxu0 0.0
    %2785 = vmatprep.subr.mxu0 0.0
    %2786 = vmatpush2.msra.mxu0 0.0
    %2787 = vmatprep.subr.mxu0 0.0
    %2788 = vmatpush2.msra.mxu0 0.0
    %2789 = vmatprep.subr.mxu0 0.0
    %2790 = vmatpush2.msra.mxu0 0.0
    %2791 = vmatprep.subr.mxu0 0.0
    %2792 = vmatpush2.msra.mxu0 0.0
    %2793 = vmatprep.subr.mxu0 0.0
    %2794 = vmatpush2.msra.mxu0 0.0
    %2795 = vmatprep.subr.mxu0 0.0
    %2796 = vmatpush2.msra.mxu0 0.0
    %2797 = vmatprep.subr.mxu0 0.0
    %2798 = vmatpush2.msra.mxu0 0.0
    %2799 = vmatprep.subr.mxu0 0.0
    %2800 = vmatpush2.msra.mxu0 0.0
    %2801 = vmatprep.subr.mxu0 0.0
    %2802 = vmatpush2.msra.mxu0 0.0
    %2803 = vmatprep.subr.mxu0 0.0
    %2804 = vmatpush2.msra.mxu0 0.0
    %2805 = vmatprep.mubr.f32.mxu0 0.0
    %2806 = vmatmul.mubr.f32.gmra.mxu0 %v2733
    %v2807 = vpop.f32.mrf.mxu0
    %v2808 = vadd.f32 %v2719, %v2807
    %v2809 = vpop.f32.mrf.mxu0
    %2810 = vmatprep.mubr.f32.mxu0 0.0
    %2811 = vmatmul.mubr.f32.gmra.mxu0 %v2736
    %v2812 = vpop.f32.mrf.mxu0
    %v2813 = vadd.f32 %v2724, %v2812
    %v2814 = vpop.f32.mrf.mxu0
    %2815 = vmatprep.mubr.f32.mxu0 0.0
    %2816 = vmatmul.mubr.f32.gmra.mxu0 %v2739
    %v2817 = vpop.f32.mrf.mxu0
    %v2818 = vadd.f32 %v2729, %v2817
    %v2819 = vpop.f32.mrf.mxu0
    %2820 = vdwg.mxu0
    %2821 = vrot.lane.b32.xlu0 %v2145, 112
    %v2822 = vpop.permute.xlu0 %2821
    %2823 = vrot.lane.b32.xlu0 %v2150, 112
    %v2824 = vpop.permute.xlu0 %2823
    %2825 = vrot.lane.b32.xlu0 %v2155, 112
    %v2826 = vpop.permute.xlu0 %2825
    %2827 = vrot.lane.b32.xlu0 %v2145, 80
    %v2828 = vpop.permute.xlu0 %2827
    %2829 = vrot.lane.b32.xlu0 %v2150, 80
    %v2830 = vpop.permute.xlu0 %2829
    %2831 = vrot.lane.b32.xlu0 %v2155, 80
    %v2832 = vpop.permute.xlu0 %2831
    %v2833 = vsel %vm306, %v2822, 0
    %v2835 = vsel %vm306, %v2824, 0
    %v2837 = vsel %vm306, %v2826, 0
    %v2839 = vsel %vm306, %v2828, 0
    %v2841 = vsel %vm306, %v2830, 0
    %v2843 = vsel %vm306, %v2832, 0
    %2845 = vmatprep.subr.mxu0 0.0
    %2846 = vmatpush1.xpose.msra.mxu0 0.0
    %2847 = vmatprep.subr.mxu0 0.0
    %2848 = vmatpush1.xpose.msra.mxu0 0.0
    %2849 = vmatprep.subr.mxu0 0.0
    %2850 = vmatpush1.xpose.msra.mxu0 0.0
    %2851 = vmatprep.subr.mxu0 0.0
    %2852 = vmatpush1.xpose.msra.mxu0 0.0
    %2853 = vmatprep.subr.mxu0 0.0
    %2854 = vmatpush1.xpose.msra.mxu0 0.0
    %2855 = vmatprep.subr.mxu0 0.0
    %2856 = vmatpush1.xpose.msra.mxu0 0.0
    %2857 = vmatprep.subr.mxu0 0.0
    %2858 = vmatpush1.xpose.msra.mxu0 0.0
    %2859 = vmatprep.subr.mxu0 0.0
    %2860 = vmatpush1.xpose.msra.mxu0 0.0
    %2861 = vmatprep.subr.mxu0 0.0
    %2862 = vmatpush1.xpose.msra.mxu0 0.0
    %2863 = vmatprep.subr.mxu0 0.0
    %2864 = vmatpush1.xpose.msra.mxu0 0.0
    %2865 = vmatprep.subr.mxu0 0.0
    %2866 = vmatpush1.xpose.msra.mxu0 0.0
    %2867 = vmatprep.subr.mxu0 0.0
    %2868 = vmatpush1.xpose.msra.mxu0 0.0
    %2869 = vmatprep.subr.mxu0 0.0
    %2870 = vmatpush1.xpose.msra.mxu0 0.0
    %2871 = vmatprep.subr.mxu0 0.0
    %2872 = vmatpush1.xpose.msra.mxu0 %v2843
    %2873 = vmatprep.subr.mxu0 0.0
    %2874 = vmatpush1.xpose.msra.mxu0 %v2841
    %2875 = vmatprep.subr.mxu0 0.0
    %2876 = vmatpush1.xpose.msra.mxu0 %v2839
    %2877 = vmatprep.subr.mxu0 0.0
    %2878 = vmatpush2.xpose.msra.mxu0 0.0
    %2879 = vmatprep.subr.mxu0 0.0
    %2880 = vmatpush2.xpose.msra.mxu0 0.0
    %2881 = vmatprep.subr.mxu0 0.0
    %2882 = vmatpush2.xpose.msra.mxu0 0.0
    %2883 = vmatprep.subr.mxu0 0.0
    %2884 = vmatpush2.xpose.msra.mxu0 0.0
    %2885 = vmatprep.subr.mxu0 0.0
    %2886 = vmatpush2.xpose.msra.mxu0 0.0
    %2887 = vmatprep.subr.mxu0 0.0
    %2888 = vmatpush2.xpose.msra.mxu0 0.0
    %2889 = vmatprep.subr.mxu0 0.0
    %2890 = vmatpush2.xpose.msra.mxu0 0.0
    %2891 = vmatprep.subr.mxu0 0.0
    %2892 = vmatpush2.xpose.msra.mxu0 0.0
    %2893 = vmatprep.subr.mxu0 0.0
    %2894 = vmatpush2.xpose.msra.mxu0 0.0
    %2895 = vmatprep.subr.mxu0 0.0
    %2896 = vmatpush2.xpose.msra.mxu0 0.0
    %2897 = vmatprep.subr.mxu0 0.0
    %2898 = vmatpush2.xpose.msra.mxu0 0.0
    %2899 = vmatprep.subr.mxu0 0.0
    %2900 = vmatpush2.xpose.msra.mxu0 0.0
    %2901 = vmatprep.subr.mxu0 0.0
    %2902 = vmatpush2.xpose.msra.mxu0 0.0
    %2903 = vmatprep.subr.mxu0 0.0
    %2904 = vmatpush2.xpose.msra.mxu0 0.0
    %2905 = vmatprep.subr.mxu0 0.0
    %2906 = vmatpush2.xpose.msra.mxu0 0.0
    %2907 = vmatprep.subr.mxu0 0.0
    %2908 = vmatpush2.xpose.msra.mxu0 0.0
    %2909 = vmatprep.mubr.f32.mxu0 0.0
    %2910 = vmatmul.mubr.f32.gmra.mxu0 %v2833
    %v2911 = vpop.f32.mrf.mxu0
    %v2912 = vadd.f32 0.0, %v2911
    %v2913 = vpop.f32.mrf.mxu0
    %2914 = vmatprep.mubr.f32.mxu0 0.0
    %2915 = vmatmul.mubr.f32.gmra.mxu0 %v2835
    %v2916 = vpop.f32.mrf.mxu0
    %v2917 = vadd.f32 0.0, %v2916
    %v2918 = vpop.f32.mrf.mxu0
    %2919 = vmatprep.mubr.f32.mxu0 0.0
    %2920 = vmatmul.mubr.f32.gmra.mxu0 %v2837
    %v2921 = vpop.f32.mrf.mxu0
    %v2922 = vadd.f32 0.0, %v2921
    %v2923 = vpop.f32.mrf.mxu0
    %2924 = vdwg.mxu0
    %v2925 = vmul.f32 %v2912, 0.35355338
    %v2926 = vmul.f32 %v2917, 0.35355338
    %v2927 = vmul.f32 %v2922, 0.35355338
    %v2928 = vadd.f32 %v2925, %v193
    %v2929 = vadd.f32 %v2926, %v194
    %v2930 = vadd.f32 %v2927, %v195
    %v2931 = vsel %vm405, %v2928, -inf
    %2932 = vmax.xlane.f32.xlu0 %v2931
    %v2933 = vpop.xlane.xlu0 %2932
    %v2934 = vsel %vm405, %v2929, -inf
    %2935 = vmax.xlane.f32.xlu0 %v2934
    %v2936 = vpop.xlane.xlu0 %2935
    %v2937 = vsel %vm412, %v2930, -inf
    %2938 = vmax.xlane.f32.xlu0 %v2937
    %v2939 = vpop.xlane.xlu0 %2938
    %v2940 = vsub.f32 %v2928, %v2933
    %v2941 = vsub.f32 %v2929, %v2936
    %v2942 = vsub.f32 %v2930, %v2939
    %v2943 = vmul.f32 %v2940, 1.442695
    %v2944 = vpow.pop %v2943
    %v2945 = vmul.f32 %v2941, 1.442695
    %v2946 = vpow.pop %v2945
    %v2947 = vmul.f32 %v2942, 1.442695
    %v2948 = vpow.pop %v2947
    %v2949 = vsel %vm405, %v2944, 0.0
    %2950 = vadd.xlane.f32.xlu0 %v2949
    %v2951 = vpop.xlane.xlu0 %2950
    %v2952 = vsel %vm405, %v2946, 0.0
    %2953 = vadd.xlane.f32.xlu0 %v2952
    %v2954 = vpop.xlane.xlu0 %2953
    %v2955 = vsel %vm412, %v2948, 0.0
    %2956 = vadd.xlane.f32.xlu0 %v2955
    %v2957 = vpop.xlane.xlu0 %2956
    %v2958 = vrcp.pop %v2951
    %v2959 = vrcp.pop %v2954
    %v2960 = vrcp.pop %v2957
    %v2961 = vmul.f32 %v2944, %v2958
    %v2962 = vmul.f32 %v2946, %v2959
    %v2963 = vmul.f32 %v2948, %v2960
    %2964 = vrot.lane.b32.xlu0 %v2145, 48
    %v2965 = vpop.permute.xlu0 %2964
    %2966 = vrot.lane.b32.xlu0 %v2150, 48
    %v2967 = vpop.permute.xlu0 %2966
    %2968 = vrot.lane.b32.xlu0 %v2155, 48
    %v2969 = vpop.permute.xlu0 %2968
    %v2973 = vsel %vm405, %v2961, 0
    %v2976 = vsel %vm405, %v2962, 0
    %v2979 = vsel %vm405, %v2963, 0
    %v2981 = vsel %vm457, %v2969, 0
    %2983 = vmatprep.subr.mxu0 0.0
    %2984 = vmatpush1.msra.mxu0 0.0
    %2985 = vmatprep.subr.mxu0 0.0
    %2986 = vmatpush1.msra.mxu0 0.0
    %2987 = vmatprep.subr.mxu0 0.0
    %2988 = vmatpush1.msra.mxu0 0.0
    %2989 = vmatprep.subr.mxu0 0.0
    %2990 = vmatpush1.msra.mxu0 0.0
    %2991 = vmatprep.subr.mxu0 0.0
    %2992 = vmatpush1.msra.mxu0 0.0
    %2993 = vmatprep.subr.mxu0 0.0
    %2994 = vmatpush1.msra.mxu0 0.0
    %2995 = vmatprep.subr.mxu0 0.0
    %2996 = vmatpush1.msra.mxu0 0.0
    %2997 = vmatprep.subr.mxu0 0.0
    %2998 = vmatpush1.msra.mxu0 0.0
    %2999 = vmatprep.subr.mxu0 0.0
    %3000 = vmatpush1.msra.mxu0 0.0
    %3001 = vmatprep.subr.mxu0 0.0
    %3002 = vmatpush1.msra.mxu0 0.0
    %3003 = vmatprep.subr.mxu0 0.0
    %3004 = vmatpush1.msra.mxu0 0.0
    %3005 = vmatprep.subr.mxu0 0.0
    %3006 = vmatpush1.msra.mxu0 0.0
    %3007 = vmatprep.subr.mxu0 0.0
    %3008 = vmatpush1.msra.mxu0 0.0
    %3009 = vmatprep.subr.mxu0 0.0
    %3010 = vmatpush1.msra.mxu0 %v2981
    %3011 = vmatprep.subr.mxu0 0.0
    %3012 = vmatpush1.msra.mxu0 %v2967
    %3013 = vmatprep.subr.mxu0 0.0
    %3014 = vmatpush1.msra.mxu0 %v2965
    %3015 = vmatprep.subr.mxu0 0.0
    %3016 = vmatpush2.msra.mxu0 0.0
    %3017 = vmatprep.subr.mxu0 0.0
    %3018 = vmatpush2.msra.mxu0 0.0
    %3019 = vmatprep.subr.mxu0 0.0
    %3020 = vmatpush2.msra.mxu0 0.0
    %3021 = vmatprep.subr.mxu0 0.0
    %3022 = vmatpush2.msra.mxu0 0.0
    %3023 = vmatprep.subr.mxu0 0.0
    %3024 = vmatpush2.msra.mxu0 0.0
    %3025 = vmatprep.subr.mxu0 0.0
    %3026 = vmatpush2.msra.mxu0 0.0
    %3027 = vmatprep.subr.mxu0 0.0
    %3028 = vmatpush2.msra.mxu0 0.0
    %3029 = vmatprep.subr.mxu0 0.0
    %3030 = vmatpush2.msra.mxu0 0.0
    %3031 = vmatprep.subr.mxu0 0.0
    %3032 = vmatpush2.msra.mxu0 0.0
    %3033 = vmatprep.subr.mxu0 0.0
    %3034 = vmatpush2.msra.mxu0 0.0
    %3035 = vmatprep.subr.mxu0 0.0
    %3036 = vmatpush2.msra.mxu0 0.0
    %3037 = vmatprep.subr.mxu0 0.0
    %3038 = vmatpush2.msra.mxu0 0.0
    %3039 = vmatprep.subr.mxu0 0.0
    %3040 = vmatpush2.msra.mxu0 0.0
    %3041 = vmatprep.subr.mxu0 0.0
    %3042 = vmatpush2.msra.mxu0 0.0
    %3043 = vmatprep.subr.mxu0 0.0
    %3044 = vmatpush2.msra.mxu0 0.0
    %3045 = vmatprep.subr.mxu0 0.0
    %3046 = vmatpush2.msra.mxu0 0.0
    %3047 = vmatprep.mubr.f32.mxu0 0.0
    %3048 = vmatmul.mubr.f32.gmra.mxu0 %v2973
    %v3049 = vpop.f32.mrf.mxu0
    %v3050 = vadd.f32 0.0, %v3049
    %v3051 = vpop.f32.mrf.mxu0
    %3052 = vmatprep.mubr.f32.mxu0 0.0
    %3053 = vmatmul.mubr.f32.gmra.mxu0 %v2976
    %v3054 = vpop.f32.mrf.mxu0
    %v3055 = vadd.f32 0.0, %v3054
    %v3056 = vpop.f32.mrf.mxu0
    %3057 = vmatprep.mubr.f32.mxu0 0.0
    %3058 = vmatmul.mubr.f32.gmra.mxu0 %v2979
    %v3059 = vpop.f32.mrf.mxu0
    %v3060 = vadd.f32 0.0, %v3059
    %v3061 = vpop.f32.mrf.mxu0
    %3062 = vdwg.mxu0
    %s3063 = scalar_lea.vmem %s8, 48
    %v3064 = vld [vmem:[%s3063] sm:$0xff]
    %v3066 = vsel %vm306, %v3050, 0
    %v3069 = vsel %vm306, %v3055, 0
    %v3072 = vsel %vm306, %v3060, 0
    %3074 = vmatprep.subr.mxu0 0.0
    %3075 = vmatpush1.msra.mxu0 0.0
    %3076 = vmatprep.subr.mxu0 0.0
    %3077 = vmatpush1.msra.mxu0 0.0
    %3078 = vmatprep.subr.mxu0 0.0
    %3079 = vmatpush1.msra.mxu0 0.0
    %3080 = vmatprep.subr.mxu0 0.0
    %3081 = vmatpush1.msra.mxu0 0.0
    %3082 = vmatprep.subr.mxu0 0.0
    %3083 = vmatpush1.msra.mxu0 0.0
    %3084 = vmatprep.subr.mxu0 0.0
    %3085 = vmatpush1.msra.mxu0 0.0
    %3086 = vmatprep.subr.mxu0 0.0
    %3087 = vmatpush1.msra.mxu0 0.0
    %3088 = vmatprep.subr.mxu0 0.0
    %3089 = vmatpush1.msra.mxu0 0.0
    %3090 = vmatprep.subr.mxu0 0.0
    %3091 = vmatpush1.msra.mxu0 0.0
    %3092 = vmatprep.subr.mxu0 0.0
    %3093 = vmatpush1.msra.mxu0 0.0
    %3094 = vmatprep.subr.mxu0 0.0
    %3095 = vmatpush1.msra.mxu0 0.0
    %3096 = vmatprep.subr.mxu0 0.0
    %3097 = vmatpush1.msra.mxu0 0.0
    %3098 = vmatprep.subr.mxu0 0.0
    %3099 = vmatpush1.msra.mxu0 0.0
    %3100 = vmatprep.subr.mxu0 0.0
    %3101 = vmatpush1.msra.mxu0 0.0
    %3102 = vmatprep.subr.mxu0 0.0
    %3103 = vmatpush1.msra.mxu0 0.0
    %3104 = vmatprep.subr.mxu0 0.0
    %3105 = vmatpush1.msra.mxu0 %v3064
    %3106 = vmatprep.subr.mxu0 0.0
    %3107 = vmatpush2.msra.mxu0 0.0
    %3108 = vmatprep.subr.mxu0 0.0
    %3109 = vmatpush2.msra.mxu0 0.0
    %3110 = vmatprep.subr.mxu0 0.0
    %3111 = vmatpush2.msra.mxu0 0.0
    %3112 = vmatprep.subr.mxu0 0.0
    %3113 = vmatpush2.msra.mxu0 0.0
    %3114 = vmatprep.subr.mxu0 0.0
    %3115 = vmatpush2.msra.mxu0 0.0
    %3116 = vmatprep.subr.mxu0 0.0
    %3117 = vmatpush2.msra.mxu0 0.0
    %3118 = vmatprep.subr.mxu0 0.0
    %3119 = vmatpush2.msra.mxu0 0.0
    %3120 = vmatprep.subr.mxu0 0.0
    %3121 = vmatpush2.msra.mxu0 0.0
    %3122 = vmatprep.subr.mxu0 0.0
    %3123 = vmatpush2.msra.mxu0 0.0
    %3124 = vmatprep.subr.mxu0 0.0
    %3125 = vmatpush2.msra.mxu0 0.0
    %3126 = vmatprep.subr.mxu0 0.0
    %3127 = vmatpush2.msra.mxu0 0.0
    %3128 = vmatprep.subr.mxu0 0.0
    %3129 = vmatpush2.msra.mxu0 0.0
    %3130 = vmatprep.subr.mxu0 0.0
    %3131 = vmatpush2.msra.mxu0 0.0
    %3132 = vmatprep.subr.mxu0 0.0
    %3133 = vmatpush2.msra.mxu0 0.0
    %3134 = vmatprep.subr.mxu0 0.0
    %3135 = vmatpush2.msra.mxu0 0.0
    %3136 = vmatprep.subr.mxu0 0.0
    %3137 = vmatpush2.msra.mxu0 0.0
    %3138 = vmatprep.mubr.f32.mxu0 0.0
    %3139 = vmatmul.mubr.f32.gmra.mxu0 %v3066
    %v3140 = vpop.f32.mrf.mxu0
    %v3141 = vadd.f32 0.0, %v3140
    %v3142 = vpop.f32.mrf.mxu0
    %3143 = vmatprep.mubr.f32.mxu0 0.0
    %3144 = vmatmul.mubr.f32.gmra.mxu0 %v3069
    %v3145 = vpop.f32.mrf.mxu0
    %v3146 = vadd.f32 0.0, %v3145
    %v3147 = vpop.f32.mrf.mxu0
    %3148 = vmatprep.mubr.f32.mxu0 0.0
    %3149 = vmatmul.mubr.f32.gmra.mxu0 %v3072
    %v3150 = vpop.f32.mrf.mxu0
    %v3151 = vadd.f32 0.0, %v3150
    %v3152 = vpop.f32.mrf.mxu0
    %3153 = vdwg.mxu0
    %v3154 = vadd.f32 %v2808, %v3141
    %v3155 = vadd.f32 %v2813, %v3146
    %v3156 = vadd.f32 %v2818, %v3151
    %3157 = vrot.lane.b32.xlu0 %v2145, 104
    %v3158 = vpop.permute.xlu0 %3157
    %3159 = vrot.lane.b32.xlu0 %v2150, 104
    %v3160 = vpop.permute.xlu0 %3159
    %3161 = vrot.lane.b32.xlu0 %v2155, 104
    %v3162 = vpop.permute.xlu0 %3161
    %3163 = vrot.lane.b32.xlu0 %v2145, 72
    %v3164 = vpop.permute.xlu0 %3163
    %3165 = vrot.lane.b32.xlu0 %v2150, 72
    %v3166 = vpop.permute.xlu0 %3165
    %3167 = vrot.lane.b32.xlu0 %v2155, 72
    %v3168 = vpop.permute.xlu0 %3167
    %v3169 = vsel %vm306, %v3158, 0
    %v3171 = vsel %vm306, %v3160, 0
    %v3173 = vsel %vm306, %v3162, 0
    %v3175 = vsel %vm306, %v3164, 0
    %v3177 = vsel %vm306, %v3166, 0
    %v3179 = vsel %vm306, %v3168, 0
    %3181 = vmatprep.subr.mxu0 0.0
    %3182 = vmatpush1.xpose.msra.mxu0 0.0
    %3183 = vmatprep.subr.mxu0 0.0
    %3184 = vmatpush1.xpose.msra.mxu0 0.0
    %3185 = vmatprep.subr.mxu0 0.0
    %3186 = vmatpush1.xpose.msra.mxu0 0.0
    %3187 = vmatprep.subr.mxu0 0.0
    %3188 = vmatpush1.xpose.msra.mxu0 0.0
    %3189 = vmatprep.subr.mxu0 0.0
    %3190 = vmatpush1.xpose.msra.mxu0 0.0
    %3191 = vmatprep.subr.mxu0 0.0
    %3192 = vmatpush1.xpose.msra.mxu0 0.0
    %3193 = vmatprep.subr.mxu0 0.0
    %3194 = vmatpush1.xpose.msra.mxu0 0.0
    %3195 = vmatprep.subr.mxu0 0.0
    %3196 = vmatpush1.xpose.msra.mxu0 0.0
    %3197 = vmatprep.subr.mxu0 0.0
    %3198 = vmatpush1.xpose.msra.mxu0 0.0
    %3199 = vmatprep.subr.mxu0 0.0
    %3200 = vmatpush1.xpose.msra.mxu0 0.0
    %3201 = vmatprep.subr.mxu0 0.0
    %3202 = vmatpush1.xpose.msra.mxu0 0.0
    %3203 = vmatprep.subr.mxu0 0.0
    %3204 = vmatpush1.xpose.msra.mxu0 0.0
    %3205 = vmatprep.subr.mxu0 0.0
    %3206 = vmatpush1.xpose.msra.mxu0 0.0
    %3207 = vmatprep.subr.mxu0 0.0
    %3208 = vmatpush1.xpose.msra.mxu0 %v3179
    %3209 = vmatprep.subr.mxu0 0.0
    %3210 = vmatpush1.xpose.msra.mxu0 %v3177
    %3211 = vmatprep.subr.mxu0 0.0
    %3212 = vmatpush1.xpose.msra.mxu0 %v3175
    %3213 = vmatprep.subr.mxu0 0.0
    %3214 = vmatpush2.xpose.msra.mxu0 0.0
    %3215 = vmatprep.subr.mxu0 0.0
    %3216 = vmatpush2.xpose.msra.mxu0 0.0
    %3217 = vmatprep.subr.mxu0 0.0
    %3218 = vmatpush2.xpose.msra.mxu0 0.0
    %3219 = vmatprep.subr.mxu0 0.0
    %3220 = vmatpush2.xpose.msra.mxu0 0.0
    %3221 = vmatprep.subr.mxu0 0.0
    %3222 = vmatpush2.xpose.msra.mxu0 0.0
    %3223 = vmatprep.subr.mxu0 0.0
    %3224 = vmatpush2.xpose.msra.mxu0 0.0
    %3225 = vmatprep.subr.mxu0 0.0
    %3226 = vmatpush2.xpose.msra.mxu0 0.0
    %3227 = vmatprep.subr.mxu0 0.0
    %3228 = vmatpush2.xpose.msra.mxu0 0.0
    %3229 = vmatprep.subr.mxu0 0.0
    %3230 = vmatpush2.xpose.msra.mxu0 0.0
    %3231 = vmatprep.subr.mxu0 0.0
    %3232 = vmatpush2.xpose.msra.mxu0 0.0
    %3233 = vmatprep.subr.mxu0 0.0
    %3234 = vmatpush2.xpose.msra.mxu0 0.0
    %3235 = vmatprep.subr.mxu0 0.0
    %3236 = vmatpush2.xpose.msra.mxu0 0.0
    %3237 = vmatprep.subr.mxu0 0.0
    %3238 = vmatpush2.xpose.msra.mxu0 0.0
    %3239 = vmatprep.subr.mxu0 0.0
    %3240 = vmatpush2.xpose.msra.mxu0 0.0
    %3241 = vmatprep.subr.mxu0 0.0
    %3242 = vmatpush2.xpose.msra.mxu0 0.0
    %3243 = vmatprep.subr.mxu0 0.0
    %3244 = vmatpush2.xpose.msra.mxu0 0.0
    %3245 = vmatprep.mubr.f32.mxu0 0.0
    %3246 = vmatmul.mubr.f32.gmra.mxu0 %v3169
    %v3247 = vpop.f32.mrf.mxu0
    %v3248 = vadd.f32 0.0, %v3247
    %v3249 = vpop.f32.mrf.mxu0
    %3250 = vmatprep.mubr.f32.mxu0 0.0
    %3251 = vmatmul.mubr.f32.gmra.mxu0 %v3171
    %v3252 = vpop.f32.mrf.mxu0
    %v3253 = vadd.f32 0.0, %v3252
    %v3254 = vpop.f32.mrf.mxu0
    %3255 = vmatprep.mubr.f32.mxu0 0.0
    %3256 = vmatmul.mubr.f32.gmra.mxu0 %v3173
    %v3257 = vpop.f32.mrf.mxu0
    %v3258 = vadd.f32 0.0, %v3257
    %v3259 = vpop.f32.mrf.mxu0
    %3260 = vdwg.mxu0
    %v3261 = vmul.f32 %v3248, 0.35355338
    %v3262 = vmul.f32 %v3253, 0.35355338
    %v3263 = vmul.f32 %v3258, 0.35355338
    %v3264 = vadd.f32 %v3261, %v193
    %v3265 = vadd.f32 %v3262, %v194
    %v3266 = vadd.f32 %v3263, %v195
    %v3267 = vsel %vm405, %v3264, -inf
    %3268 = vmax.xlane.f32.xlu0 %v3267
    %v3269 = vpop.xlane.xlu0 %3268
    %v3270 = vsel %vm405, %v3265, -inf
    %3271 = vmax.xlane.f32.xlu0 %v3270
    %v3272 = vpop.xlane.xlu0 %3271
    %v3273 = vsel %vm412, %v3266, -inf
    %3274 = vmax.xlane.f32.xlu0 %v3273
    %v3275 = vpop.xlane.xlu0 %3274
    %v3276 = vsub.f32 %v3264, %v3269
    %v3277 = vsub.f32 %v3265, %v3272
    %v3278 = vsub.f32 %v3266, %v3275
    %v3279 = vmul.f32 %v3276, 1.442695
    %v3280 = vpow.pop %v3279
    %v3281 = vmul.f32 %v3277, 1.442695
    %v3282 = vpow.pop %v3281
    %v3283 = vmul.f32 %v3278, 1.442695
    %v3284 = vpow.pop %v3283
    %v3285 = vsel %vm405, %v3280, 0.0
    %3286 = vadd.xlane.f32.xlu0 %v3285
    %v3287 = vpop.xlane.xlu0 %3286
    %v3288 = vsel %vm405, %v3282, 0.0
    %3289 = vadd.xlane.f32.xlu0 %v3288
    %v3290 = vpop.xlane.xlu0 %3289
    %v3291 = vsel %vm412, %v3284, 0.0
    %3292 = vadd.xlane.f32.xlu0 %v3291
    %v3293 = vpop.xlane.xlu0 %3292
    %v3294 = vrcp.pop %v3287
    %v3295 = vrcp.pop %v3290
    %v3296 = vrcp.pop %v3293
    %v3297 = vmul.f32 %v3280, %v3294
    %v3298 = vmul.f32 %v3282, %v3295
    %v3299 = vmul.f32 %v3284, %v3296
    %3300 = vrot.lane.b32.xlu0 %v2145, 40
    %v3301 = vpop.permute.xlu0 %3300
    %3302 = vrot.lane.b32.xlu0 %v2150, 40
    %v3303 = vpop.permute.xlu0 %3302
    %3304 = vrot.lane.b32.xlu0 %v2155, 40
    %v3305 = vpop.permute.xlu0 %3304
    %v3309 = vsel %vm405, %v3297, 0
    %v3312 = vsel %vm405, %v3298, 0
    %v3315 = vsel %vm405, %v3299, 0
    %v3317 = vsel %vm457, %v3305, 0
    %3319 = vmatprep.subr.mxu0 0.0
    %3320 = vmatpush1.msra.mxu0 0.0
    %3321 = vmatprep.subr.mxu0 0.0
    %3322 = vmatpush1.msra.mxu0 0.0
    %3323 = vmatprep.subr.mxu0 0.0
    %3324 = vmatpush1.msra.mxu0 0.0
    %3325 = vmatprep.subr.mxu0 0.0
    %3326 = vmatpush1.msra.mxu0 0.0
    %3327 = vmatprep.subr.mxu0 0.0
    %3328 = vmatpush1.msra.mxu0 0.0
    %3329 = vmatprep.subr.mxu0 0.0
    %3330 = vmatpush1.msra.mxu0 0.0
    %3331 = vmatprep.subr.mxu0 0.0
    %3332 = vmatpush1.msra.mxu0 0.0
    %3333 = vmatprep.subr.mxu0 0.0
    %3334 = vmatpush1.msra.mxu0 0.0
    %3335 = vmatprep.subr.mxu0 0.0
    %3336 = vmatpush1.msra.mxu0 0.0
    %3337 = vmatprep.subr.mxu0 0.0
    %3338 = vmatpush1.msra.mxu0 0.0
    %3339 = vmatprep.subr.mxu0 0.0
    %3340 = vmatpush1.msra.mxu0 0.0
    %3341 = vmatprep.subr.mxu0 0.0
    %3342 = vmatpush1.msra.mxu0 0.0
    %3343 = vmatprep.subr.mxu0 0.0
    %3344 = vmatpush1.msra.mxu0 0.0
    %3345 = vmatprep.subr.mxu0 0.0
    %3346 = vmatpush1.msra.mxu0 %v3317
    %3347 = vmatprep.subr.mxu0 0.0
    %3348 = vmatpush1.msra.mxu0 %v3303
    %3349 = vmatprep.subr.mxu0 0.0
    %3350 = vmatpush1.msra.mxu0 %v3301
    %3351 = vmatprep.subr.mxu0 0.0
    %3352 = vmatpush2.msra.mxu0 0.0
    %3353 = vmatprep.subr.mxu0 0.0
    %3354 = vmatpush2.msra.mxu0 0.0
    %3355 = vmatprep.subr.mxu0 0.0
    %3356 = vmatpush2.msra.mxu0 0.0
    %3357 = vmatprep.subr.mxu0 0.0
    %3358 = vmatpush2.msra.mxu0 0.0
    %3359 = vmatprep.subr.mxu0 0.0
    %3360 = vmatpush2.msra.mxu0 0.0
    %3361 = vmatprep.subr.mxu0 0.0
    %3362 = vmatpush2.msra.mxu0 0.0
    %3363 = vmatprep.subr.mxu0 0.0
    %3364 = vmatpush2.msra.mxu0 0.0
    %3365 = vmatprep.subr.mxu0 0.0
    %3366 = vmatpush2.msra.mxu0 0.0
    %3367 = vmatprep.subr.mxu0 0.0
    %3368 = vmatpush2.msra.mxu0 0.0
    %3369 = vmatprep.subr.mxu0 0.0
    %3370 = vmatpush2.msra.mxu0 0.0
    %3371 = vmatprep.subr.mxu0 0.0
    %3372 = vmatpush2.msra.mxu0 0.0
    %3373 = vmatprep.subr.mxu0 0.0
    %3374 = vmatpush2.msra.mxu0 0.0
    %3375 = vmatprep.subr.mxu0 0.0
    %3376 = vmatpush2.msra.mxu0 0.0
    %3377 = vmatprep.subr.mxu0 0.0
    %3378 = vmatpush2.msra.mxu0 0.0
    %3379 = vmatprep.subr.mxu0 0.0
    %3380 = vmatpush2.msra.mxu0 0.0
    %3381 = vmatprep.subr.mxu0 0.0
    %3382 = vmatpush2.msra.mxu0 0.0
    %3383 = vmatprep.mubr.f32.mxu0 0.0
    %3384 = vmatmul.mubr.f32.gmra.mxu0 %v3309
    %v3385 = vpop.f32.mrf.mxu0
    %v3386 = vadd.f32 0.0, %v3385
    %v3387 = vpop.f32.mrf.mxu0
    %3388 = vmatprep.mubr.f32.mxu0 0.0
    %3389 = vmatmul.mubr.f32.gmra.mxu0 %v3312
    %v3390 = vpop.f32.mrf.mxu0
    %v3391 = vadd.f32 0.0, %v3390
    %v3392 = vpop.f32.mrf.mxu0
    %3393 = vmatprep.mubr.f32.mxu0 0.0
    %3394 = vmatmul.mubr.f32.gmra.mxu0 %v3315
    %v3395 = vpop.f32.mrf.mxu0
    %v3396 = vadd.f32 0.0, %v3395
    %v3397 = vpop.f32.mrf.mxu0
    %3398 = vdwg.mxu0
    %s3399 = scalar_lea.vmem %s8, 56
    %v3400 = vld [vmem:[%s3399] sm:$0xff]
    %v3402 = vsel %vm306, %v3386, 0
    %v3405 = vsel %vm306, %v3391, 0
    %v3408 = vsel %vm306, %v3396, 0
    %3410 = vmatprep.subr.mxu0 0.0
    %3411 = vmatpush1.msra.mxu0 0.0
    %3412 = vmatprep.subr.mxu0 0.0
    %3413 = vmatpush1.msra.mxu0 0.0
    %3414 = vmatprep.subr.mxu0 0.0
    %3415 = vmatpush1.msra.mxu0 0.0
    %3416 = vmatprep.subr.mxu0 0.0
    %3417 = vmatpush1.msra.mxu0 0.0
    %3418 = vmatprep.subr.mxu0 0.0
    %3419 = vmatpush1.msra.mxu0 0.0
    %3420 = vmatprep.subr.mxu0 0.0
    %3421 = vmatpush1.msra.mxu0 0.0
    %3422 = vmatprep.subr.mxu0 0.0
    %3423 = vmatpush1.msra.mxu0 0.0
    %3424 = vmatprep.subr.mxu0 0.0
    %3425 = vmatpush1.msra.mxu0 0.0
    %3426 = vmatprep.subr.mxu0 0.0
    %3427 = vmatpush1.msra.mxu0 0.0
    %3428 = vmatprep.subr.mxu0 0.0
    %3429 = vmatpush1.msra.mxu0 0.0
    %3430 = vmatprep.subr.mxu0 0.0
    %3431 = vmatpush1.msra.mxu0 0.0
    %3432 = vmatprep.subr.mxu0 0.0
    %3433 = vmatpush1.msra.mxu0 0.0
    %3434 = vmatprep.subr.mxu0 0.0
    %3435 = vmatpush1.msra.mxu0 0.0
    %3436 = vmatprep.subr.mxu0 0.0
    %3437 = vmatpush1.msra.mxu0 0.0
    %3438 = vmatprep.subr.mxu0 0.0
    %3439 = vmatpush1.msra.mxu0 0.0
    %3440 = vmatprep.subr.mxu0 0.0
    %3441 = vmatpush1.msra.mxu0 %v3400
    %3442 = vmatprep.subr.mxu0 0.0
    %3443 = vmatpush2.msra.mxu0 0.0
    %3444 = vmatprep.subr.mxu0 0.0
    %3445 = vmatpush2.msra.mxu0 0.0
    %3446 = vmatprep.subr.mxu0 0.0
    %3447 = vmatpush2.msra.mxu0 0.0
    %3448 = vmatprep.subr.mxu0 0.0
    %3449 = vmatpush2.msra.mxu0 0.0
    %3450 = vmatprep.subr.mxu0 0.0
    %3451 = vmatpush2.msra.mxu0 0.0
    %3452 = vmatprep.subr.mxu0 0.0
    %3453 = vmatpush2.msra.mxu0 0.0
    %3454 = vmatprep.subr.mxu0 0.0
    %3455 = vmatpush2.msra.mxu0 0.0
    %3456 = vmatprep.subr.mxu0 0.0
    %3457 = vmatpush2.msra.mxu0 0.0
    %3458 = vmatprep.subr.mxu0 0.0
    %3459 = vmatpush2.msra.mxu0 0.0
    %3460 = vmatprep.subr.mxu0 0.0
    %3461 = vmatpush2.msra.mxu0 0.0
    %3462 = vmatprep.subr.mxu0 0.0
    %3463 = vmatpush2.msra.mxu0 0.0
    %3464 = vmatprep.subr.mxu0 0.0
    %3465 = vmatpush2.msra.mxu0 0.0
    %3466 = vmatprep.subr.mxu0 0.0
    %3467 = vmatpush2.msra.mxu0 0.0
    %3468 = vmatprep.subr.mxu0 0.0
    %3469 = vmatpush2.msra.mxu0 0.0
    %3470 = vmatprep.subr.mxu0 0.0
    %3471 = vmatpush2.msra.mxu0 0.0
    %3472 = vmatprep.subr.mxu0 0.0
    %3473 = vmatpush2.msra.mxu0 0.0
    %3474 = vmatprep.mubr.f32.mxu0 0.0
    %3475 = vmatmul.mubr.f32.gmra.mxu0 %v3402
    %v3476 = vpop.f32.mrf.mxu0
    %v3477 = vadd.f32 0.0, %v3476
    %v3478 = vpop.f32.mrf.mxu0
    %3479 = vmatprep.mubr.f32.mxu0 0.0
    %3480 = vmatmul.mubr.f32.gmra.mxu0 %v3405
    %v3481 = vpop.f32.mrf.mxu0
    %v3482 = vadd.f32 0.0, %v3481
    %v3483 = vpop.f32.mrf.mxu0
    %3484 = vmatprep.mubr.f32.mxu0 0.0
    %3485 = vmatmul.mubr.f32.gmra.mxu0 %v3408
    %v3486 = vpop.f32.mrf.mxu0
    %v3487 = vadd.f32 0.0, %v3486
    %v3488 = vpop.f32.mrf.mxu0
    %3489 = vdwg.mxu0
    %v3490 = vadd.f32 %v3154, %v3477
    %v3491 = vadd.f32 %v3155, %v3482
    %v3492 = vadd.f32 %v3156, %v3487
    %v3493 = vadd.f32 %v2053, %v3490
    %v3494 = vadd.f32 %v2054, %v3491
    %v3495 = vadd.f32 %v2055, %v3492
    %s3496 = scalar_lea.vmem %s9, 1
    %v3497 = vld [vmem:[%s3496] sm:$0x1]
    %v3499 = vlaneseq
    %v3500 = vshrl.u32 %v3499, 7
    %v3501 = vsub.s32 0, %v3500
    %v3502 = vrot.slane %v3497, %v3501
    %v3504 = vadd.f32 %v3493, %v3502
    %v3505 = vadd.f32 %v3494, %v3502
    %v3506 = vadd.f32 %v3495, %v3502
    %s3507 = scalar_lea.vmem %s10, 1
    %v3508 = vld [vmem:[%s3507] sm:$0x1]
    %s3509 = scalar_lea.vmem %s11, 1
    %v3510 = vld [vmem:[%s3509] sm:$0x1]
    %v3511 = vsel %vm207, %v3504, 0.0
    %3512 = vadd.xlane.f32.xlu0 %v3511
    %v3513 = vpop.xlane.xlu0 %3512
    %v3514 = vsel %vm207, %v3505, 0.0
    %3515 = vadd.xlane.f32.xlu0 %v3514
    %v3516 = vpop.xlane.xlu0 %3515
    %v3517 = vsel %vm1656, %v3506, 0.0
    %3518 = vadd.xlane.f32.xlu0 %v3517
    %v3519 = vpop.xlane.xlu0 %3518
    %v3520 = vmul.f32 %v3513, %v1660
    %v3521 = vmul.f32 %v3516, %v1660
    %v3522 = vmul.f32 %v3519, %v1660
    %v3523 = vsub.f32 %v3504, %v3520
    %v3524 = vsub.f32 %v3505, %v3521
    %v3525 = vsub.f32 %v3506, %v3522
    %v3526 = vmul.f32 %v3523, %v3523
    %v3527 = vmul.f32 %v3524, %v3524
    %v3528 = vmul.f32 %v3525, %v3525
    %v3529 = vsel %vm207, %v3526, 0.0
    %3530 = vadd.xlane.f32.xlu0 %v3529
    %v3531 = vpop.xlane.xlu0 %3530
    %v3532 = vsel %vm207, %v3527, 0.0
    %3533 = vadd.xlane.f32.xlu0 %v3532
    %v3534 = vpop.xlane.xlu0 %3533
    %v3535 = vsel %vm1656, %v3528, 0.0
    %3536 = vadd.xlane.f32.xlu0 %v3535
    %v3537 = vpop.xlane.xlu0 %3536
    %v3538 = vmul.f32 %v3531, %v1660
    %v3539 = vmul.f32 %v3534, %v1660
    %v3540 = vmul.f32 %v3537, %v1660
    %v3541 = vadd.f32 %v3538, 1e-05
    %v3542 = vadd.f32 %v3539, 1e-05
    %v3543 = vadd.f32 %v3540, 1e-05
    %v3544 = vrsqrt.pop %v3541
    %v3545 = vrsqrt.pop %v3542
    %v3546 = vrsqrt.pop %v3543
    %v3547 = vmul.f32 %v3523, %v3544
    %v3548 = vmul.f32 %v3524, %v3545
    %v3549 = vmul.f32 %v3525, %v3546
    %v3551 = vlaneseq
    %v3552 = vshrl.u32 %v3551, 7
    %v3553 = vsub.s32 0, %v3552
    %v3554 = vrot.slane %v3508, %v3553
    %v3556 = vmul.f32 %v3547, %v3554
    %v3557 = vmul.f32 %v3548, %v3554
    %v3558 = vmul.f32 %v3549, %v3554
    %v3560 = vlaneseq
    %v3561 = vshrl.u32 %v3560, 7
    %v3562 = vsub.s32 0, %v3561
    %v3563 = vrot.slane %v3510, %v3562
    %v3565 = vadd.f32 %v3556, %v3563
    %v3566 = vadd.f32 %v3557, %v3563
    %v3567 = vadd.f32 %v3558, %v3563
    %s3568 = scalar_lea.vmem %s12, 32
    %v3569 = vld [vmem:[%s3568] sm:$0xff]
    %v3570 = vld [vmem:[%s3568 + $0x8] sm:$0xff]
    %v3571 = vld [vmem:[%s3568 + $0x10] sm:$0xff]
    %v3572 = vld [vmem:[%s3568 + $0x18] sm:$0xff]
    %s3573 = scalar_lea.vmem %s13, 1
    %v3574 = vld [vmem:[%s3573] sm:$0x1]
    %v3576 = vlaneseq
    %v3577 = vshrl.u32 %v3576, 7
    %v3578 = vsub.s32 0, %v3577
    %v3579 = vrot.slane %v3574, %v3578
    %v3582 = vsel %vm207, %v3565, 0
    %v3585 = vsel %vm207, %v3566, 0
    %v3588 = vsel %vm207, %v3567, 0
    %3590 = vmatprep.subr.mxu0 0.0
    %3591 = vmatpush1.msra.mxu0 0.0
    %3592 = vmatprep.subr.mxu0 0.0
    %3593 = vmatpush1.msra.mxu0 0.0
    %3594 = vmatprep.subr.mxu0 0.0
    %3595 = vmatpush1.msra.mxu0 0.0
    %3596 = vmatprep.subr.mxu0 0.0
    %3597 = vmatpush1.msra.mxu0 0.0
    %3598 = vmatprep.subr.mxu0 0.0
    %3599 = vmatpush1.msra.mxu0 0.0
    %3600 = vmatprep.subr.mxu0 0.0
    %3601 = vmatpush1.msra.mxu0 0.0
    %3602 = vmatprep.subr.mxu0 0.0
    %3603 = vmatpush1.msra.mxu0 0.0
    %3604 = vmatprep.subr.mxu0 0.0
    %3605 = vmatpush1.msra.mxu0 0.0
    %3606 = vmatprep.subr.mxu0 0.0
    %3607 = vmatpush1.msra.mxu0 0.0
    %3608 = vmatprep.subr.mxu0 0.0
    %3609 = vmatpush1.msra.mxu0 0.0
    %3610 = vmatprep.subr.mxu0 0.0
    %3611 = vmatpush1.msra.mxu0 0.0
    %3612 = vmatprep.subr.mxu0 0.0
    %3613 = vmatpush1.msra.mxu0 0.0
    %3614 = vmatprep.subr.mxu0 0.0
    %3615 = vmatpush1.msra.mxu0 %v3572
    %3616 = vmatprep.subr.mxu0 0.0
    %3617 = vmatpush1.msra.mxu0 %v3571
    %3618 = vmatprep.subr.mxu0 0.0
    %3619 = vmatpush1.msra.mxu0 %v3570
    %3620 = vmatprep.subr.mxu0 0.0
    %3621 = vmatpush1.msra.mxu0 %v3569
    %3622 = vmatprep.subr.mxu0 0.0
    %3623 = vmatpush2.msra.mxu0 0.0
    %3624 = vmatprep.subr.mxu0 0.0
    %3625 = vmatpush2.msra.mxu0 0.0
    %3626 = vmatprep.subr.mxu0 0.0
    %3627 = vmatpush2.msra.mxu0 0.0
    %3628 = vmatprep.subr.mxu0 0.0
    %3629 = vmatpush2.msra.mxu0 0.0
    %3630 = vmatprep.subr.mxu0 0.0
    %3631 = vmatpush2.msra.mxu0 0.0
    %3632 = vmatprep.subr.mxu0 0.0
    %3633 = vmatpush2.msra.mxu0 0.0
    %3634 = vmatprep.subr.mxu0 0.0
    %3635 = vmatpush2.msra.mxu0 0.0
    %3636 = vmatprep.subr.mxu0 0.0
    %3637 = vmatpush2.msra.mxu0 0.0
    %3638 = vmatprep.subr.mxu0 0.0
    %3639 = vmatpush2.msra.mxu0 0.0
    %3640 = vmatprep.subr.mxu0 0.0
    %3641 = vmatpush2.msra.mxu0 0.0
    %3642 = vmatprep.subr.mxu0 0.0
    %3643 = vmatpush2.msra.mxu0 0.0
    %3644 = vmatprep.subr.mxu0 0.0
    %3645 = vmatpush2.msra.mxu0 0.0
    %3646 = vmatprep.subr.mxu0 0.0
    %3647 = vmatpush2.msra.mxu0 0.0
    %3648 = vmatprep.subr.mxu0 0.0
    %3649 = vmatpush2.msra.mxu0 0.0
    %3650 = vmatprep.subr.mxu0 0.0
    %3651 = vmatpush2.msra.mxu0 0.0
    %3652 = vmatprep.subr.mxu0 0.0
    %3653 = vmatpush2.msra.mxu0 0.0
    %3654 = vmatprep.mubr.f32.mxu0 0.0
    %3655 = vmatmul.mubr.f32.gmra.mxu0 %v3582
    %v3656 = vpop.f32.mrf.mxu0
    %v3657 = vadd.f32 %v3579, %v3656
    %v3658 = vpop.f32.mrf.mxu0
    %3659 = vmatprep.mubr.f32.mxu0 0.0
    %3660 = vmatmul.mubr.f32.gmra.mxu0 %v3585
    %v3661 = vpop.f32.mrf.mxu0
    %v3662 = vadd.f32 %v3579, %v3661
    %v3663 = vpop.f32.mrf.mxu0
    %3664 = vmatprep.mubr.f32.mxu0 0.0
    %3665 = vmatmul.mubr.f32.gmra.mxu0 %v3588
    %v3666 = vpop.f32.mrf.mxu0
    %v3667 = vadd.f32 %v3579, %v3666
    %v3668 = vpop.f32.mrf.mxu0
    %3669 = vdwg.mxu0
    %v3670 = vmul.f32 %v3657, 0.5
    %v3671 = vmul.f32 %v3662, 0.5
    %v3672 = vmul.f32 %v3667, 0.5
    %v3673 = vmul.f32 %v3657, 0.70710677
    %v3674 = vmul.f32 %v3662, 0.70710677
    %v3675 = vmul.f32 %v3667, 0.70710677
    %vm3676 = vcmp.ge.f32.partialorder %v3673, 0.0
    %vm3677 = vcmp.ge.f32.partialorder %v3674, 0.0
    %vm3678 = vcmp.ge.f32.partialorder %v3675, 0.0
    %v3679 = vsel %vm3676, 1.0, -1.0
    %v3680 = vsel %vm3677, 1.0, -1.0
    %v3681 = vsel %vm3678, 1.0, -1.0
    %v3682 = vand.u32 2147483647, %v3673
    %v3683 = vand.u32 2147483647, %v3674
    %v3684 = vand.u32 2147483647, %v3675
    %v3685 = vmul.f32 %v3682, 0.3275911
    %v3686 = vmul.f32 %v3683, 0.3275911
    %v3687 = vmul.f32 %v3684, 0.3275911
    %v3688 = vadd.f32 %v3685, 1.0
    %v3689 = vadd.f32 %v3686, 1.0
    %v3690 = vadd.f32 %v3687, 1.0
    %v3691 = vrcp.pop %v3688
    %v3692 = vmul.f32 1.0, %v3691
    %v3693 = vrcp.pop %v3689
    %v3694 = vmul.f32 1.0, %v3693
    %v3695 = vrcp.pop %v3690
    %v3696 = vmul.f32 1.0, %v3695
    %v3697 = vmul.f32 %v3692, 1.0614054
    %v3698 = vmul.f32 %v3694, 1.0614054
    %v3699 = vmul.f32 %v3696, 1.0614054
    %v3700 = vadd.f32 %v3697, -1.4531521
    %v3701 = vadd.f32 %v3698, -1.4531521
    %v3702 = vadd.f32 %v3699, -1.4531521
    %v3703 = vmul.f32 %v3700, %v3692
    %v3704 = vmul.f32 %v3701, %v3694
    %v3705 = vmul.f32 %v3702, %v3696
    %v3706 = vadd.f32 %v3703, 1.4214138
    %v3707 = vadd.f32 %v3704, 1.4214138
    %v3708 = vadd.f32 %v3705, 1.4214138
    %v3709 = vmul.f32 %v3706, %v3692
    %v3710 = vmul.f32 %v3707, %v3694
    %v3711 = vmul.f32 %v3708, %v3696
    %v3712 = vadd.f32 %v3709, -0.28449672
    %v3713 = vadd.f32 %v3710, -0.28449672
    %v3714 = vadd.f32 %v3711, -0.28449672
    %v3715 = vmul.f32 %v3712, %v3692
    %v3716 = vmul.f32 %v3713, %v3694
    %v3717 = vmul.f32 %v3714, %v3696
    %v3718 = vadd.f32 %v3715, 0.2548296
    %v3719 = vadd.f32 %v3716, 0.2548296
    %v3720 = vadd.f32 %v3717, 0.2548296
    %v3721 = vmul.f32 %v3718, %v3692
    %v3722 = vmul.f32 %v3719, %v3694
    %v3723 = vmul.f32 %v3720, %v3696
    %v3724 = vsub.f32 0.0, %v3682
    %v3725 = vsub.f32 0.0, %v3683
    %v3726 = vsub.f32 0.0, %v3684
    %v3727 = vmul.f32 %v3724, %v3682
    %v3728 = vmul.f32 %v3725, %v3683
    %v3729 = vmul.f32 %v3726, %v3684
    %v3730 = vmul.f32 %v3727, 1.442695
    %v3731 = vpow.pop %v3730
    %v3732 = vmul.f32 %v3728, 1.442695
    %v3733 = vpow.pop %v3732
    %v3734 = vmul.f32 %v3729, 1.442695
    %v3735 = vpow.pop %v3734
    %v3736 = vmul.f32 %v3721, %v3731
    %v3737 = vmul.f32 %v3722, %v3733
    %v3738 = vmul.f32 %v3723, %v3735
    %v3739 = vsub.f32 1.0, %v3736
    %v3740 = vsub.f32 1.0, %v3737
    %v3741 = vsub.f32 1.0, %v3738
    %v3742 = vmul.f32 %v3679, %v3739
    %v3743 = vmul.f32 %v3680, %v3740
    %v3744 = vmul.f32 %v3681, %v3741
    %v3745 = vadd.f32 %v3742, 1.0
    %v3746 = vadd.f32 %v3743, 1.0
    %v3747 = vadd.f32 %v3744, 1.0
    %v3748 = vmul.f32 %v3670, %v3745
    %v3749 = vmul.f32 %v3671, %v3746
    %v3750 = vmul.f32 %v3672, %v3747
    %s3751 = scalar_lea.vmem %s14, 64
    %v3752 = vld [vmem:[%s3751] sm:$0xff]
    %v3753 = vld [vmem:[%s3751 + $0x8] sm:$0xff]
    %v3754 = vld [vmem:[%s3751 + $0x10] sm:$0xff]
    %v3755 = vld [vmem:[%s3751 + $0x18] sm:$0xff]
    %v3756 = vld [vmem:[%s3751 + $0x20] sm:$0xff]
    %v3757 = vld [vmem:[%s3751 + $0x28] sm:$0xff]
    %v3758 = vld [vmem:[%s3751 + $0x30] sm:$0xff]
    %v3759 = vld [vmem:[%s3751 + $0x38] sm:$0xff]
    %s3760 = scalar_lea.vmem %s15, 1
    %v3761 = vld [vmem:[%s3760] sm:$0x1]
    %v3763 = vlaneseq
    %v3764 = vshrl.u32 %v3763, 7
    %v3765 = vsub.s32 0, %v3764
    %v3766 = vrot.slane %v3761, %v3765
    %v3769 = vsel %vm103, %v3748, 0
    %v3772 = vsel %vm103, %v3749, 0
    %v3775 = vsel %vm103, %v3750, 0
    %3777 = vmatprep.subr.mxu0 0.0
    %3778 = vmatpush1.msra.mxu0 0.0
    %3779 = vmatprep.subr.mxu0 0.0
    %3780 = vmatpush1.msra.mxu0 0.0
    %3781 = vmatprep.subr.mxu0 0.0
    %3782 = vmatpush1.msra.mxu0 0.0
    %3783 = vmatprep.subr.mxu0 0.0
    %3784 = vmatpush1.msra.mxu0 0.0
    %3785 = vmatprep.subr.mxu0 0.0
    %3786 = vmatpush1.msra.mxu0 0.0
    %3787 = vmatprep.subr.mxu0 0.0
    %3788 = vmatpush1.msra.mxu0 0.0
    %3789 = vmatprep.subr.mxu0 0.0
    %3790 = vmatpush1.msra.mxu0 0.0
    %3791 = vmatprep.subr.mxu0 0.0
    %3792 = vmatpush1.msra.mxu0 0.0
    %3793 = vmatprep.subr.mxu0 0.0
    %3794 = vmatpush1.msra.mxu0 %v3759
    %3795 = vmatprep.subr.mxu0 0.0
    %3796 = vmatpush1.msra.mxu0 %v3758
    %3797 = vmatprep.subr.mxu0 0.0
    %3798 = vmatpush1.msra.mxu0 %v3757
    %3799 = vmatprep.subr.mxu0 0.0
    %3800 = vmatpush1.msra.mxu0 %v3756
    %3801 = vmatprep.subr.mxu0 0.0
    %3802 = vmatpush1.msra.mxu0 %v3755
    %3803 = vmatprep.subr.mxu0 0.0
    %3804 = vmatpush1.msra.mxu0 %v3754
    %3805 = vmatprep.subr.mxu0 0.0
    %3806 = vmatpush1.msra.mxu0 %v3753
    %3807 = vmatprep.subr.mxu0 0.0
    %3808 = vmatpush1.msra.mxu0 %v3752
    %3809 = vmatprep.subr.mxu0 0.0
    %3810 = vmatpush2.msra.mxu0 0.0
    %3811 = vmatprep.subr.mxu0 0.0
    %3812 = vmatpush2.msra.mxu0 0.0
    %3813 = vmatprep.subr.mxu0 0.0
    %3814 = vmatpush2.msra.mxu0 0.0
    %3815 = vmatprep.subr.mxu0 0.0
    %3816 = vmatpush2.msra.mxu0 0.0
    %3817 = vmatprep.subr.mxu0 0.0
    %3818 = vmatpush2.msra.mxu0 0.0
    %3819 = vmatprep.subr.mxu0 0.0
    %3820 = vmatpush2.msra.mxu0 0.0
    %3821 = vmatprep.subr.mxu0 0.0
    %3822 = vmatpush2.msra.mxu0 0.0
    %3823 = vmatprep.subr.mxu0 0.0
    %3824 = vmatpush2.msra.mxu0 0.0
    %3825 = vmatprep.subr.mxu0 0.0
    %3826 = vmatpush2.msra.mxu0 0.0
    %3827 = vmatprep.subr.mxu0 0.0
    %3828 = vmatpush2.msra.mxu0 0.0
    %3829 = vmatprep.subr.mxu0 0.0
    %3830 = vmatpush2.msra.mxu0 0.0
    %3831 = vmatprep.subr.mxu0 0.0
    %3832 = vmatpush2.msra.mxu0 0.0
    %3833 = vmatprep.subr.mxu0 0.0
    %3834 = vmatpush2.msra.mxu0 0.0
    %3835 = vmatprep.subr.mxu0 0.0
    %3836 = vmatpush2.msra.mxu0 0.0
    %3837 = vmatprep.subr.mxu0 0.0
    %3838 = vmatpush2.msra.mxu0 0.0
    %3839 = vmatprep.subr.mxu0 0.0
    %3840 = vmatpush2.msra.mxu0 0.0
    %3841 = vmatprep.mubr.f32.mxu0 0.0
    %3842 = vmatmul.mubr.f32.gmra.mxu0 %v3769
    %v3843 = vpop.f32.mrf.mxu0
    %v3844 = vadd.f32 %v3766, %v3843
    %v3845 = vpop.f32.mrf.mxu0
    %3846 = vmatprep.mubr.f32.mxu0 0.0
    %3847 = vmatmul.mubr.f32.gmra.mxu0 %v3772
    %v3848 = vpop.f32.mrf.mxu0
    %v3849 = vadd.f32 %v3766, %v3848
    %v3850 = vpop.f32.mrf.mxu0
    %3851 = vmatprep.mubr.f32.mxu0 0.0
    %3852 = vmatmul.mubr.f32.gmra.mxu0 %v3775
    %v3853 = vpop.f32.mrf.mxu0
    %v3854 = vadd.f32 %v3766, %v3853
    %v3855 = vpop.f32.mrf.mxu0
    %3856 = vdwg.mxu0
    %v3857 = vadd.f32 %v3565, %v3844
    %v3858 = vadd.f32 %v3566, %v3849
    %v3859 = vadd.f32 %v3567, %v3854
    %s3860 = scalar_lea.vmem %s16, 1
    %v3861 = vld [vmem:[%s3860] sm:$0x1]
    %s3862 = scalar_lea.vmem %s17, 1
    %v3863 = vld [vmem:[%s3862] sm:$0x1]
    %v3864 = vsel %vm207, %v3857, 0.0
    %3865 = vadd.xlane.f32.xlu0 %v3864
    %v3866 = vpop.xlane.xlu0 %3865
    %v3867 = vsel %vm207, %v3858, 0.0
    %3868 = vadd.xlane.f32.xlu0 %v3867
    %v3869 = vpop.xlane.xlu0 %3868
    %v3870 = vsel %vm1656, %v3859, 0.0
    %3871 = vadd.xlane.f32.xlu0 %v3870
    %v3872 = vpop.xlane.xlu0 %3871
    %v3873 = vmul.f32 %v3866, %v1660
    %v3874 = vmul.f32 %v3869, %v1660
    %v3875 = vmul.f32 %v3872, %v1660
    %v3876 = vsub.f32 %v3857, %v3873
    %v3877 = vsub.f32 %v3858, %v3874
    %v3878 = vsub.f32 %v3859, %v3875
    %v3879 = vmul.f32 %v3876, %v3876
    %v3880 = vmul.f32 %v3877, %v3877
    %v3881 = vmul.f32 %v3878, %v3878
    %v3882 = vsel %vm207, %v3879, 0.0
    %3883 = vadd.xlane.f32.xlu0 %v3882
    %v3884 = vpop.xlane.xlu0 %3883
    %v3885 = vsel %vm207, %v3880, 0.0
    %3886 = vadd.xlane.f32.xlu0 %v3885
    %v3887 = vpop.xlane.xlu0 %3886
    %v3888 = vsel %vm1656, %v3881, 0.0
    %3889 = vadd.xlane.f32.xlu0 %v3888
    %v3890 = vpop.xlane.xlu0 %3889
    %v3891 = vmul.f32 %v3884, %v1660
    %v3892 = vmul.f32 %v3887, %v1660
    %v3893 = vmul.f32 %v3890, %v1660
    %v3894 = vadd.f32 %v3891, 1e-05
    %v3895 = vadd.f32 %v3892, 1e-05
    %v3896 = vadd.f32 %v3893, 1e-05
    %v3897 = vrsqrt.pop %v3894
    %v3898 = vrsqrt.pop %v3895
    %v3899 = vrsqrt.pop %v3896
    %v3900 = vmul.f32 %v3876, %v3897
    %v3901 = vmul.f32 %v3877, %v3898
    %v3902 = vmul.f32 %v3878, %v3899
    %v3904 = vlaneseq
    %v3905 = vshrl.u32 %v3904, 7
    %v3906 = vsub.s32 0, %v3905
    %v3907 = vrot.slane %v3861, %v3906
    %v3909 = vmul.f32 %v3900, %v3907
    %v3910 = vmul.f32 %v3901, %v3907
    %v3911 = vmul.f32 %v3902, %v3907
    %v3913 = vlaneseq
    %v3914 = vshrl.u32 %v3913, 7
    %v3915 = vsub.s32 0, %v3914
    %v3916 = vrot.slane %v3863, %v3915
    %v3918 = vadd.f32 %v3909, %v3916
    %v3919 = vadd.f32 %v3910, %v3916
    %v3920 = vadd.f32 %v3911, %v3916
    %v3921 = vld [vmem:[%s18] sm:$0xff]
    %v3922 = vld [vmem:[%s18 + $0x8] sm:$0xff]
    %v3923 = vld [vmem:[%s18 + $0x10] sm:$0xff]
    %v3924 = vld [vmem:[%s18 + $0x18] sm:$0xff]
    %v3925 = vld [vmem:[%s19] sm:$0x1]
    %v3927 = vlaneseq
    %v3928 = vshrl.u32 %v3927, 7
    %v3929 = vsub.s32 0, %v3928
    %v3930 = vrot.slane %v3925, %v3929
    %v3933 = vsel %vm207, %v3918, 0
    %v3936 = vsel %vm207, %v3919, 0
    %v3939 = vsel %vm207, %v3920, 0
    %3941 = vmatprep.subr.mxu0 0.0
    %3942 = vmatpush1.msra.mxu0 0.0
    %3943 = vmatprep.subr.mxu0 0.0
    %3944 = vmatpush1.msra.mxu0 0.0
    %3945 = vmatprep.subr.mxu0 0.0
    %3946 = vmatpush1.msra.mxu0 0.0
    %3947 = vmatprep.subr.mxu0 0.0
    %3948 = vmatpush1.msra.mxu0 0.0
    %3949 = vmatprep.subr.mxu0 0.0
    %3950 = vmatpush1.msra.mxu0 0.0
    %3951 = vmatprep.subr.mxu0 0.0
    %3952 = vmatpush1.msra.mxu0 0.0
    %3953 = vmatprep.subr.mxu0 0.0
    %3954 = vmatpush1.msra.mxu0 0.0
    %3955 = vmatprep.subr.mxu0 0.0
    %3956 = vmatpush1.msra.mxu0 0.0
    %3957 = vmatprep.subr.mxu0 0.0
    %3958 = vmatpush1.msra.mxu0 0.0
    %3959 = vmatprep.subr.mxu0 0.0
    %3960 = vmatpush1.msra.mxu0 0.0
    %3961 = vmatprep.subr.mxu0 0.0
    %3962 = vmatpush1.msra.mxu0 0.0
    %3963 = vmatprep.subr.mxu0 0.0
    %3964 = vmatpush1.msra.mxu0 0.0
    %3965 = vmatprep.subr.mxu0 0.0
    %3966 = vmatpush1.msra.mxu0 %v3924
    %3967 = vmatprep.subr.mxu0 0.0
    %3968 = vmatpush1.msra.mxu0 %v3923
    %3969 = vmatprep.subr.mxu0 0.0
    %3970 = vmatpush1.msra.mxu0 %v3922
    %3971 = vmatprep.subr.mxu0 0.0
    %3972 = vmatpush1.msra.mxu0 %v3921
    %3973 = vmatprep.subr.mxu0 0.0
    %3974 = vmatpush2.msra.mxu0 0.0
    %3975 = vmatprep.subr.mxu0 0.0
    %3976 = vmatpush2.msra.mxu0 0.0
    %3977 = vmatprep.subr.mxu0 0.0
    %3978 = vmatpush2.msra.mxu0 0.0
    %3979 = vmatprep.subr.mxu0 0.0
    %3980 = vmatpush2.msra.mxu0 0.0
    %3981 = vmatprep.subr.mxu0 0.0
    %3982 = vmatpush2.msra.mxu0 0.0
    %3983 = vmatprep.subr.mxu0 0.0
    %3984 = vmatpush2.msra.mxu0 0.0
    %3985 = vmatprep.subr.mxu0 0.0
    %3986 = vmatpush2.msra.mxu0 0.0
    %3987 = vmatprep.subr.mxu0 0.0
    %3988 = vmatpush2.msra.mxu0 0.0
    %3989 = vmatprep.subr.mxu0 0.0
    %3990 = vmatpush2.msra.mxu0 0.0
    %3991 = vmatprep.subr.mxu0 0.0
    %3992 = vmatpush2.msra.mxu0 0.0
    %3993 = vmatprep.subr.mxu0 0.0
    %3994 = vmatpush2.msra.mxu0 0.0
    %3995 = vmatprep.subr.mxu0 0.0
    %3996 = vmatpush2.msra.mxu0 0.0
    %3997 = vmatprep.subr.mxu0 0.0
    %3998 = vmatpush2.msra.mxu0 0.0
    %3999 = vmatprep.subr.mxu0 0.0
    %4000 = vmatpush2.msra.mxu0 0.0
    %4001 = vmatprep.subr.mxu0 0.0
    %4002 = vmatpush2.msra.mxu0 0.0
    %4003 = vmatprep.subr.mxu0 0.0
    %4004 = vmatpush2.msra.mxu0 0.0
    %4005 = vmatprep.mubr.f32.mxu0 0.0
    %4006 = vmatmul.mubr.f32.gmra.mxu0 %v3933
    %v4007 = vpop.f32.mrf.mxu0
    %v4008 = vadd.f32 %v3930, %v4007
    %v4009 = vpop.f32.mrf.mxu0
    %4010 = vmatprep.mubr.f32.mxu0 0.0
    %4011 = vmatmul.mubr.f32.gmra.mxu0 %v3936
    %v4012 = vpop.f32.mrf.mxu0
    %v4013 = vadd.f32 %v3930, %v4012
    %v4014 = vpop.f32.mrf.mxu0
    %4015 = vmatprep.mubr.f32.mxu0 0.0
    %4016 = vmatmul.mubr.f32.gmra.mxu0 %v3939
    %v4017 = vpop.f32.mrf.mxu0
    %v4018 = vadd.f32 %v3930, %v4017
    %v4019 = vpop.f32.mrf.mxu0
    %4020 = vdwg.mxu0
    %v4021 = vld [vmem:[%s4] sm:$0xff]
    %v4022 = vld [vmem:[%s4 + $0x8] sm:$0xff]
    %v4023 = vld [vmem:[%s4 + $0x10] sm:$0xf]
    %4025 = vset.pattern.permute.xlu0 0
    %4026 = vperm.xlu0 %4025, %v4021
    %v4027 = vpop.permute.xlu0 %4026
    %4030 = vset.pattern.permute.xlu0 0
    %4031 = vperm.xlu0 %4030, %v4022
    %v4032 = vpop.permute.xlu0 %4031
    %4035 = vset.pattern.permute.xlu0 0
    %4036 = vperm.xlu0 %4035, %v4023
    %v4037 = vpop.permute.xlu0 %4036
    %v4039 = vmul.f32 %v4008, %v4027
    %v4040 = vmul.f32 %v4013, %v4032
    %v4041 = vmul.f32 %v4018, %v4037
    %v4042 = vld [vmem:[%s5] sm:$0xff]
    %v4043 = vld [vmem:[%s5 + $0x8] sm:$0xff]
    %v4044 = vld [vmem:[%s5 + $0x10] sm:$0xf]
    %4046 = vset.pattern.permute.xlu0 0
    %4047 = vperm.xlu0 %4046, %v4042
    %v4048 = vpop.permute.xlu0 %4047
    %4051 = vset.pattern.permute.xlu0 0
    %4052 = vperm.xlu0 %4051, %v4043
    %v4053 = vpop.permute.xlu0 %4052
    %4056 = vset.pattern.permute.xlu0 0
    %4057 = vperm.xlu0 %4056, %v4044
    %v4058 = vpop.permute.xlu0 %4057
    %v4060 = vadd.f32 %v4039, %v4048
    %v4061 = vadd.f32 %v4040, %v4053
    %v4062 = vadd.f32 %v4041, %v4058
    %v4063 = vld [vmem:[%s20] sm:$0xff]
    %v4064 = vld [vmem:[%s20 + $0x8] sm:$0xff]
    %v4065 = vld [vmem:[%s20 + $0x10] sm:$0xff]
    %v4066 = vld [vmem:[%s20 + $0x18] sm:$0xff]
    %v4067 = vld [vmem:[%s20 + $0x20] sm:$0xff]
    %v4068 = vld [vmem:[%s20 + $0x28] sm:$0xff]
    %v4069 = vld [vmem:[%s20 + $0x30] sm:$0xff]
    %v4070 = vld [vmem:[%s20 + $0x38] sm:$0xff]
    %v4071 = vld [vmem:[%s20 + $0x40] sm:$0xff]
    %v4072 = vld [vmem:[%s20 + $0x48] sm:$0xff]
    %v4073 = vld [vmem:[%s20 + $0x50] sm:$0xff]
    %v4074 = vld [vmem:[%s20 + $0x58] sm:$0xff]
    %v4075 = vld [vmem:[%s20 + $0x60] sm:$0xff]
    %v4076 = vld [vmem:[%s20 + $0x68] sm:$0xff]
    %v4077 = vld [vmem:[%s20 + $0x70] sm:$0xff]
    %v4078 = vld [vmem:[%s20 + $0x78] sm:$0xff]
    %v4079 = vld [vmem:[%s21] sm:$0x1]
    %v4081 = vlaneseq
    %v4082 = vshrl.u32 %v4081, 7
    %v4083 = vsub.s32 0, %v4082
    %v4084 = vrot.slane %v4079, %v4083
    %4086 = vmatprep.subr.mxu0 0.0
    %4087 = vmatpush1.msra.mxu0 %v4078
    %4088 = vmatprep.subr.mxu0 0.0
    %4089 = vmatpush1.msra.mxu0 %v4077
    %4090 = vmatprep.subr.mxu0 0.0
    %4091 = vmatpush1.msra.mxu0 %v4076
    %4092 = vmatprep.subr.mxu0 0.0
    %4093 = vmatpush1.msra.mxu0 %v4075
    %4094 = vmatprep.subr.mxu0 0.0
    %4095 = vmatpush1.msra.mxu0 %v4074
    %4096 = vmatprep.subr.mxu0 0.0
    %4097 = vmatpush1.msra.mxu0 %v4073
    %4098 = vmatprep.subr.mxu0 0.0
    %4099 = vmatpush1.msra.mxu0 %v4072
    %4100 = vmatprep.subr.mxu0 0.0
    %4101 = vmatpush1.msra.mxu0 %v4071
    %4102 = vmatprep.subr.mxu0 0.0
    %4103 = vmatpush1.msra.mxu0 %v4070
    %4104 = vmatprep.subr.mxu0 0.0
    %4105 = vmatpush1.msra.mxu0 %v4069
    %4106 = vmatprep.subr.mxu0 0.0
    %4107 = vmatpush1.msra.mxu0 %v4068
    %4108 = vmatprep.subr.mxu0 0.0
    %4109 = vmatpush1.msra.mxu0 %v4067
    %4110 = vmatprep.subr.mxu0 0.0
    %4111 = vmatpush1.msra.mxu0 %v4066
    %4112 = vmatprep.subr.mxu0 0.0
    %4113 = vmatpush1.msra.mxu0 %v4065
    %4114 = vmatprep.subr.mxu0 0.0
    %4115 = vmatpush1.msra.mxu0 %v4064
    %4116 = vmatprep.subr.mxu0 0.0
    %4117 = vmatpush1.msra.mxu0 %v4063
    %4118 = vmatprep.subr.mxu0 0.0
    %4119 = vmatpush2.msra.mxu0 0.0
    %4120 = vmatprep.subr.mxu0 0.0
    %4121 = vmatpush2.msra.mxu0 0.0
    %4122 = vmatprep.subr.mxu0 0.0
    %4123 = vmatpush2.msra.mxu0 0.0
    %4124 = vmatprep.subr.mxu0 0.0
    %4125 = vmatpush2.msra.mxu0 0.0
    %4126 = vmatprep.subr.mxu0 0.0
    %4127 = vmatpush2.msra.mxu0 0.0
    %4128 = vmatprep.subr.mxu0 0.0
    %4129 = vmatpush2.msra.mxu0 0.0
    %4130 = vmatprep.subr.mxu0 0.0
    %4131 = vmatpush2.msra.mxu0 0.0
    %4132 = vmatprep.subr.mxu0 0.0
    %4133 = vmatpush2.msra.mxu0 0.0
    %4134 = vmatprep.subr.mxu0 0.0
    %4135 = vmatpush2.msra.mxu0 0.0
    %4136 = vmatprep.subr.mxu0 0.0
    %4137 = vmatpush2.msra.mxu0 0.0
    %4138 = vmatprep.subr.mxu0 0.0
    %4139 = vmatpush2.msra.mxu0 0.0
    %4140 = vmatprep.subr.mxu0 0.0
    %4141 = vmatpush2.msra.mxu0 0.0
    %4142 = vmatprep.subr.mxu0 0.0
    %4143 = vmatpush2.msra.mxu0 0.0
    %4144 = vmatprep.subr.mxu0 0.0
    %4145 = vmatpush2.msra.mxu0 0.0
    %4146 = vmatprep.subr.mxu0 0.0
    %4147 = vmatpush2.msra.mxu0 0.0
    %4148 = vmatprep.subr.mxu0 0.0
    %4149 = vmatpush2.msra.mxu0 0.0
    %4150 = vmatprep.mubr.f32.mxu0 0.0
    %4151 = vmatmul.mubr.f32.gmra.mxu0 %v4060
    %v4152 = vpop.f32.mrf.mxu0
    %v4153 = vadd.f32 %v4084, %v4152
    %v4154 = vpop.f32.mrf.mxu0
    %4155 = vmatprep.mubr.f32.mxu0 0.0
    %4156 = vmatmul.mubr.f32.gmra.mxu0 %v4061
    %v4157 = vpop.f32.mrf.mxu0
    %v4158 = vadd.f32 %v4084, %v4157
    %v4159 = vpop.f32.mrf.mxu0
    %4160 = vmatprep.mubr.f32.mxu0 0.0
    %4161 = vmatmul.mubr.f32.gmra.mxu0 %v4062
    %v4162 = vpop.f32.mrf.mxu0
    %v4163 = vadd.f32 %v4084, %v4162
    %v4164 = vpop.f32.mrf.mxu0
    %4165 = vdwg.mxu0
    %4166 = vst [vmem:[#allocation2] sm:$0xff] %v4153
    %4167 = vst [vmem:[#allocation2 + $0x8] sm:$0xff] %v4158
    %4168 = vst [vmem:[#allocation2 + $0x10] sm:$0xf] %v4163
    // Predicated region
    $region90: #{pretraining_forward.1} parent=1 // pred_check
      _
    $region91: #{pretraining_forward.1} parent=1 // pred_check_branch
      %4170 = sbr.rel (0) target = $region93
    $region92: #{pretraining_forward.1} parent=1 // pred_region
      %s4172 = ssub.s32 384, 384
      %4173 = vsyncadd [#allocation3], %s4172
      %s4174 = sshll.u32 [#allocation2], 4
      %s4175 = int_to_ptr.vmem [resolvable:$true] %s4174
      %4180 = dma.vmem_to_hbm [thread:$0]  %s4175, 384, %s22, [#allocation3], 128, 128, 8
    $region93: #{pretraining_forward.1} parent=1 // pred_fallthru
      _
    // Predicated region
    $region94: #{pretraining_forward.1} parent=1 // pred_check
      _
    $region95: #{pretraining_forward.1} parent=1 // pred_check_branch
      %4182 = sbr.rel (0) target = $region97
    $region96: #{pretraining_forward.1} parent=1 // pred_region
      %4183 = dma.done [#allocation3], 384
    $region97: #{pretraining_forward.1} parent=1 // pred_fallthru
      _
    %4184 = vsyncpa [#allocation3], 1

</llo_original>
